<compile_context>
chip_gen: v7x
topology: tpu7x:2x2x1
jax: 0.10.0
libtpu: 0.0.40
codegen_flags: <defaults>
</compile_context>

<pallas_src>
import math

import jax
import jax.numpy as jnp
from jax.experimental import pallas as pl
from jax.experimental.pallas import tpu as pltpu


def _round_up(n, m):
    return ((n + m - 1) // m) * m


def _gru_encoder_kernel(x_ref, lens_ref, wi_ref, wh_ref, bgx_ref, bhn_ref,
                        wo_ref, bo_ref, out_time_ref, emb_ref, h_ref):
    """One (batch-tile, time-tile) grid step of the masked GRU encoder.

    x_ref:        (tB, tT, D)  bf16 batch-major input tile
    lens_ref:     (tB, 1)      int32 valid lengths
    wi_ref:       (D, 3Hp)     bf16 fused [W_ir | W_iz | W_in]^T
    wh_ref:       (Hp, 3Hp)    bf16 fused [W_hr | W_hz | W_hn]^T
    bgx_ref:      (1, 3Hp)     f32 fused bias [b_ir+b_hr | b_iz+b_hz | b_in]
    bhn_ref:      (1, Hp)      f32 b_hn (must stay inside the r*(...) term)
    wo_ref/bo_ref:(Hp,Ep)/(1,Ep) f32 output Linear with eval-mode BN folded in
    out_time_ref: (tB, tT, Hp) per-timestep hidden outputs (0 past length)
    emb_ref:      (tB, Ep)     final BN(Linear(h_last)) embedding
    h_ref:        (tB, Hp) f32 VMEM scratch: running hidden state
    """
    t_idx = pl.program_id(1)
    n_t = pl.num_programs(1)
    tB, tT, D = x_ref.shape
    Hp = h_ref.shape[1]

    @pl.when(t_idx == 0)
    def _init():
        h_ref[...] = jnp.zeros_like(h_ref)

    lens = lens_ref[...]                       # (tB, 1) int32
    t0 = t_idx * tT

    # --- hoisted input projection: ONE (tB*tT, D) @ (D, 3Hp) bf16 matmul ----
    x_flat = x_ref[...].reshape(tB * tT, D)    # tT % 8 == 0 -> layout-preserving
    xg = jnp.dot(x_flat, wi_ref[...], preferred_element_type=jnp.float32)
    xg = (xg + bgx_ref[...]).reshape(tB, tT, 3 * Hp)

    wh = wh_ref[...]                                       # VMEM-resident weights
    bhn = jnp.broadcast_to(bhn_ref[...], (tB, Hp))         # hoisted broadcast

    h = h_ref[...]
    # Statically unrolled recurrence: only the h @ W_h matmul is sequential.
    for i in range(tT):
        gh = jnp.dot(h.astype(wh.dtype), wh, preferred_element_type=jnp.float32)
        gx = xg[:, i, :]                                   # (tB, 3Hp), 128-aligned
        r = jax.nn.sigmoid(gx[:, :Hp] + gh[:, :Hp])
        z = jax.nn.sigmoid(gx[:, Hp:2 * Hp] + gh[:, Hp:2 * Hp])
        n = jnp.tanh(gx[:, 2 * Hp:] + r * (gh[:, 2 * Hp:] + bhn))
        h_new = (1.0 - z) * n + z * h
        valid = (t0 + i) < lens                            # packed-sequence mask
        out_time_ref[:, i, :] = jnp.where(valid, h_new, 0.0).astype(out_time_ref.dtype)
        h = jnp.where(valid, h_new, h)
    h_ref[...] = h

    # Epilogue: only on the last time tile of this batch tile (f32, runs once).
    @pl.when(t_idx == n_t - 1)
    def _epilogue():
        y = jnp.dot(h, wo_ref[...], preferred_element_type=jnp.float32) + bo_ref[...]
        emb_ref[...] = y.astype(emb_ref.dtype)


def rnn_encoder_forward(x, lens, params, *, t_tile=16, bn_eps=1e-5,
                        out_time_dtype=None):
    """x: (B, T, D); lens: (B,); params: PyTorch-layout GRU/Linear/BN weights.

    out_time_dtype: dtype of audio_embeds_time in HBM (default: x.dtype).
    Pass jnp.bfloat16 to halve the dominant out_time writeback on
    memory-bound (long-T) configurations.
    """
    B, T, D = x.shape
    H = params["weight_hh_l0"].shape[1]
    E = params["out_w"].shape[0]

    f32 = jnp.float32
    bf16 = jnp.bfloat16
    ot_dtype = x.dtype if out_time_dtype is None else out_time_dtype

    # ---- padded / tiled sizes (lane = 128, sublane = 8) ---------------------
    Hp = _round_up(H, 128)
    Ep = _round_up(E, 128)
    G = 3 * Hp

    tT = _round_up(max(8, min(t_tile, _round_up(T, 8))), 8)    # multiple of 8
    Tp = _round_up(T, tT)

    Bp0 = _round_up(B, 8)
    if Bp0 <= 16:
        tB = Bp0
    elif Bp0 <= 128:
        tB = _round_up((Bp0 + 1) // 2, 8)   # >=2 batch tiles: both v7x TCs busy
    else:
        tB = 128
    Bp = _round_up(Bp0, tB)

    # ---- fused / padded GRU parameters (PyTorch gate order: r, z, n) --------
    w_ih = params["weight_ih_l0"].astype(f32)      # (3H, D)
    w_hh = params["weight_hh_l0"].astype(f32)      # (3H, H)
    b_ih = params["bias_ih_l0"].astype(f32)        # (3H,)
    b_hh = params["bias_hh_l0"].astype(f32)        # (3H,)
    w_ir, w_iz, w_in = jnp.split(w_ih, 3, axis=0)
    w_hr, w_hz, w_hn = jnp.split(w_hh, 3, axis=0)
    b_ir, b_iz, b_in = jnp.split(b_ih, 3)
    b_hr, b_hz, b_hn = jnp.split(b_hh, 3)

    def pad_cols(a):            # (rows, H) -> (rows, Hp), per-gate segment
        return jnp.pad(a, ((0, 0), (0, Hp - a.shape[1])))

    def pad_vec(v):             # (H,) -> (Hp,)
        return jnp.pad(v, (0, Hp - v.shape[0]))

    wi = jnp.concatenate(
        [pad_cols(w_ir.T), pad_cols(w_iz.T), pad_cols(w_in.T)], axis=1
    ).astype(bf16)                                                   # (D, 3Hp)
    wh = jnp.pad(
        jnp.concatenate([pad_cols(w_hr.T), pad_cols(w_hz.T), pad_cols(w_hn.T)],
                        axis=1),
        ((0, Hp - H), (0, 0))).astype(bf16)                          # (Hp, 3Hp)
    bgx = jnp.concatenate([pad_vec(b_ir + b_hr), pad_vec(b_iz + b_hz),
                           pad_vec(b_in)]).reshape(1, G)             # f32
    bhn = pad_vec(b_hn).reshape(1, Hp)                               # f32

    # ---- fold eval-mode BatchNorm1d into the output projection (f32) -------
    scale = params["bn_gamma"].astype(f32) / jnp.sqrt(params["bn_var"].astype(f32) + bn_eps)
    shift = params["bn_beta"].astype(f32) - params["bn_mean"].astype(f32) * scale
    wo = jnp.pad(params["out_w"].astype(f32).T * scale[None, :],
                 ((0, Hp - H), (0, Ep - E)))                         # (Hp, Ep)
    bo = jnp.pad(params["out_b"].astype(f32) * scale + shift,
                 (0, Ep - E)).reshape(1, Ep)

    # ---- padded batch-major inputs (bf16 x -> half the HBM read traffic) ----
    x_p = jnp.pad(x.astype(bf16), ((0, Bp - B), (0, Tp - T), (0, 0)))
    lens_i = jnp.pad(jnp.asarray(lens, jnp.int32), (0, Bp - B)).reshape(Bp, 1)

    grid = (Bp // tB, Tp // tT)
    const = lambda b, t: (0, 0)
    ot_item = jnp.dtype(ot_dtype).itemsize

    # Rough VMEM budget: double-buffered x / out_time / emb tiles, resident
    # (double-buffered) weights, h scratch and the in-kernel xg temporary.
    vmem_bytes = (
        2 * (D * G + Hp * G) * 2
        + 2 * ((G + Hp) * 4 + (Hp * Ep + Ep) * 4)
        + 2 * tB * tT * D * 2
        + 2 * tB * tT * Hp * ot_item
        + 2 * tB * Ep * 4
        + tB * Hp * 4
        + 2 * tB * tT * G * 4
    )
    # >= 32 MiB so v5e's 16 MiB default scoped limit does not shrink the tiles.
    vmem_limit = int(min(96 * 2**20, max(32 * 2**20, 2 * vmem_bytes)))

    cost = pl.CostEstimate(
        flops=int(2 * Bp * Tp * (D + Hp) * G + 2 * Bp * Hp * Ep),
        transcendentals=int(3 * Bp * Tp * Hp),
        bytes_accessed=int(Bp * Tp * D * 2 + Bp * Tp * Hp * ot_item
                           + (D * G + Hp * G) * 2
                           + (G + Hp + Hp * Ep + Ep) * 4
                           + Bp * Ep * 4 + Bp * 4),
    )

    out_time_p, emb_p = pl.pallas_call(
        _gru_encoder_kernel,
        out_shape=(
            jax.ShapeDtypeStruct((Bp, Tp, Hp), ot_dtype),
            jax.ShapeDtypeStruct((Bp, Ep), f32),
        ),
        grid_spec=pltpu.PrefetchScalarGridSpec(
            num_scalar_prefetch=0,
            grid=grid,
            in_specs=[
                pl.BlockSpec((tB, tT, D), lambda b, t: (b, t, 0)),   # x (batch-major)
                pl.BlockSpec((tB, 1), lambda b, t: (b, 0)),          # lens
                pl.BlockSpec((D, G), const),                         # fused W_i (bf16)
                pl.BlockSpec((Hp, G), const),                        # fused W_h (bf16)
                pl.BlockSpec((1, G), const),                         # fused gate bias
                pl.BlockSpec((1, Hp), const),                        # b_hn
                pl.BlockSpec((Hp, Ep), const),                       # W_out (BN folded)
                pl.BlockSpec((1, Ep), const),                        # b_out (BN folded)
            ],
            out_specs=[
                pl.BlockSpec((tB, tT, Hp), lambda b, t: (b, t, 0)),  # out_time
                pl.BlockSpec((tB, Ep), lambda b, t: (b, 0)),         # audio_embeds
            ],
            scratch_shapes=[pltpu.VMEM((tB, Hp), jnp.float32)],
        ),
        compiler_params=pltpu.CompilerParams(
            dimension_semantics=("parallel", "arbitrary"),
            vmem_limit_bytes=vmem_limit,
        ),
        cost_estimate=cost,
    )(x_p, lens_i, wi, wh, bgx, bhn, wo, bo)

    audio_embeds_time = out_time_p[:B, :T, :H]      # already (B, T, H): no transpose
    audio_embeds = emb_p[:B, :E]                    # (B, E)
    # NOTE: pad_packed_sequence would truncate out_time to max(lens); here the
    #       full T is returned with zeros past each sequence's length.
    return {
        "audio_embeds": audio_embeds,
        "audio_embeds_time": audio_embeds_time,
        "state": None,                              # use_hidden defaults to False
        "audio_embeds_lens": jnp.asarray(lens, jnp.int32),
    }


def init_params(key, inputdim, hidden_size, embed_size):
    """Mirrors RNNEncoder.__init__ + init(): the GRU keeps PyTorch's default
    U(-1/sqrt(H), 1/sqrt(H)) init, the output Linear gets kaiming-uniform
    weight / zero bias, BatchNorm1d keeps gamma=1, beta=0, mean=0, var=1."""
    k = jax.random.split(key, 5)
    u = 1.0 / math.sqrt(hidden_size)
    kb = math.sqrt(6.0 / hidden_size)     # kaiming_uniform_, fan_in = hidden_size
    return {
        "weight_ih_l0": jax.random.uniform(k[0], (3 * hidden_size, inputdim), jnp.float32, -u, u),
        "weight_hh_l0": jax.random.uniform(k[1], (3 * hidden_size, hidden_size), jnp.float32, -u, u),
        "bias_ih_l0": jax.random.uniform(k[2], (3 * hidden_size,), jnp.float32, -u, u),
        "bias_hh_l0": jax.random.uniform(k[3], (3 * hidden_size,), jnp.float32, -u, u),
        "out_w": jax.random.uniform(k[4], (embed_size, hidden_size), jnp.float32, -kb, kb),
        "out_b": jnp.zeros((embed_size,), jnp.float32),
        "bn_gamma": jnp.ones((embed_size,), jnp.float32),
        "bn_beta": jnp.zeros((embed_size,), jnp.float32),
        "bn_mean": jnp.zeros((embed_size,), jnp.float32),
        "bn_var": jnp.ones((embed_size,), jnp.float32),
    }


def _reference_forward(x, lens, p, bn_eps=1e-5, matmul_dtype=jnp.float32):
    """Pure-JAX reference: masked GRU + Linear + eval-mode BatchNorm1d.

    matmul_dtype=jnp.bfloat16 mirrors the kernel's bf16 MXU operands (with f32
    accumulation) so the comparison can be tight.
    """
    B, T, _ = x.shape
    H = p["weight_hh_l0"].shape[1]
    md = matmul_dtype

    def mm(a, b):
        return jnp.dot(a.astype(md), b.astype(md), preferred_element_type=jnp.float32)

    w_ir, w_iz, w_in = jnp.split(p["weight_ih_l0"], 3, axis=0)
    w_hr, w_hz, w_hn = jnp.split(p["weight_hh_l0"], 3, axis=0)
    b_ir, b_iz, b_in = jnp.split(p["bias_ih_l0"], 3)
    b_hr, b_hz, b_hn = jnp.split(p["bias_hh_l0"], 3)
    h = jnp.zeros((B, H), jnp.float32)
    outs = []
    for t in range(T):
        x_t = x[:, t, :]
        r = jax.nn.sigmoid(mm(x_t, w_ir.T) + b_ir + mm(h, w_hr.T) + b_hr)
        z = jax.nn.sigmoid(mm(x_t, w_iz.T) + b_iz + mm(h, w_hz.T) + b_hz)
        n = jnp.tanh(mm(x_t, w_in.T) + b_in + r * (mm(h, w_hn.T) + b_hn))
        h_new = (1.0 - z) * n + z * h
        valid = (t < lens)[:, None]
        outs.append(jnp.where(valid, h_new, 0.0))
        h = jnp.where(valid, h_new, h)
    out_time = jnp.stack(outs, axis=1)
    scale = p["bn_gamma"] / jnp.sqrt(p["bn_var"] + bn_eps)
    emb = (h @ p["out_w"].T + p["out_b"] - p["bn_mean"]) * scale + p["bn_beta"]
    return emb, out_time


if __name__ == "__main__":
    key = jax.random.PRNGKey(0)
    k_x, k_p = jax.random.split(key)

    B, T = 3, 16
    inputdim, hidden_size, embed_size = 32, 32, 16

    x = jax.random.normal(k_x, (B, T, inputdim), jnp.float32)
    lens = jnp.array([16, 9, 4], jnp.int32)
    params = init_params(k_p, inputdim, hidden_size, embed_size)

    out = rnn_encoder_forward(x, lens, params, t_tile=8)   # 2 time tiles: carry tested
    jax.block_until_ready(out["audio_embeds"])
    jax.block_until_ready(out["audio_embeds_time"])

    assert out["audio_embeds"].shape == (B, embed_size)
    assert out["audio_embeds_time"].shape == (B, T, hidden_size)
    assert out["state"] is None
    assert jnp.array_equal(out["audio_embeds_lens"], lens)

    # Tight check against a reference that mirrors the kernel's bf16 MXU
    # operand rounding (f32 accumulation, f32 hidden state / epilogue).
    ref_emb_bf, ref_time_bf = _reference_forward(x, lens, params,
                                                 matmul_dtype=jnp.bfloat16)
    assert jnp.allclose(out["audio_embeds"], ref_emb_bf, atol=5e-3, rtol=5e-3)
    assert jnp.allclose(out["audio_embeds_time"], ref_time_bf, atol=5e-3, rtol=5e-3)

    # Loose sanity check against the exact-f32 (PyTorch-equivalent) math:
    # the only deviation is bf16 rounding of the MXU operands, O(1e-2).
    ref_emb, ref_time = _reference_forward(x, lens, params)
    assert jnp.allclose(out["audio_embeds"], ref_emb, atol=1e-1, rtol=1e-1)
    assert jnp.allclose(out["audio_embeds_time"], ref_time, atol=1e-1, rtol=1e-1)

    print("KERNEL_OK")
</pallas_src>

<mosaic_0001>
module attributes {stable_mosaic.version = 11 : i64} {
  func.func @_gru_encoder_kernel(%arg0: i32, %arg1: i32, %arg2: memref<8x8x32xbf16, #tpu.memory_space<vmem>>, %arg3: memref<8x1xi32, #tpu.memory_space<vmem>>, %arg4: memref<32x384xbf16, #tpu.memory_space<vmem>>, %arg5: memref<128x384xbf16, #tpu.memory_space<vmem>>, %arg6: memref<1x384xf32, #tpu.memory_space<vmem>>, %arg7: memref<1x128xf32, #tpu.memory_space<vmem>>, %arg8: memref<128x128xf32, #tpu.memory_space<vmem>>, %arg9: memref<1x128xf32, #tpu.memory_space<vmem>>, %arg10: memref<8x8x128xf32, #tpu.memory_space<vmem>>, %arg11: memref<8x128xf32, #tpu.memory_space<vmem>>, %arg12: memref<8x128xf32, #tpu.memory_space<vmem>>) attributes {dimension_semantics = [#tpu.dimension_semantics<parallel>, #tpu.dimension_semantics<arbitrary>], iteration_bounds = array<i64: 1, 2>, scalar_prefetch = 0 : i64, scratch_operands = 1 : i64, tpu.core_type = #tpu.core_type<tc>, window_params = [{transform_indices = @transform_0, window_bounds = array<i64: 8, 8, 32>}, {transform_indices = @transform_1, window_bounds = array<i64: 8, 1>}, {pipeline_mode = #tpu.pipeline_mode<synchronous>, transform_indices = @transform_2, window_bounds = array<i64: 32, 384>}, {pipeline_mode = #tpu.pipeline_mode<synchronous>, transform_indices = @transform_3, window_bounds = array<i64: 128, 384>}, {pipeline_mode = #tpu.pipeline_mode<synchronous>, transform_indices = @transform_4, window_bounds = array<i64: 1, 384>}, {pipeline_mode = #tpu.pipeline_mode<synchronous>, transform_indices = @transform_5, window_bounds = array<i64: 1, 128>}, {pipeline_mode = #tpu.pipeline_mode<synchronous>, transform_indices = @transform_6, window_bounds = array<i64: 128, 128>}, {pipeline_mode = #tpu.pipeline_mode<synchronous>, transform_indices = @transform_7, window_bounds = array<i64: 1, 128>}, {transform_indices = @transform_8, window_bounds = array<i64: 8, 8, 128>}, {transform_indices = @transform_9, window_bounds = array<i64: 8, 128>}]} {
    %c0_i32 = arith.constant 0 : i32
    %0 = arith.cmpi eq, %arg1, %c0_i32 : i32
    %1 = arith.extui %0 : i1 to i32
    %c0_i32_0 = arith.constant 0 : i32
    %2 = arith.cmpi ne, %1, %c0_i32_0 : i32
    scf.if %2 {
      %cst_77 = arith.constant 0.000000e+00 : f32
      %374 = vector.broadcast %cst_77 : f32 to vector<8x128xf32>
      %c0_78 = arith.constant 0 : index
      %c0_79 = arith.constant 0 : index
      %375 = vector.load %arg12[%c0_78, %c0_79] : memref<8x128xf32, #tpu.memory_space<vmem>>, vector<8x128xf32>
      tpu.vector_store %arg12[%c0_78, %c0_79], %374 {strides = array<i32>} : memref<8x128xf32, #tpu.memory_space<vmem>>, vector<8x128xf32>,
    } else {
    }
    %c0 = arith.constant 0 : index
    %c0_1 = arith.constant 0 : index
    %3 = vector.load %arg3[%c0, %c0_1] : memref<8x1xi32, #tpu.memory_space<vmem>>, vector<8x1xi32>
    %c8_i32 = arith.constant 8 : i32
    %4 = arith.muli %arg1, %c8_i32 : i32
    %c0_2 = arith.constant 0 : index
    %c0_3 = arith.constant 0 : index
    %c0_4 = arith.constant 0 : index
    %5 = vector.load %arg2[%c0_2, %c0_3, %c0_4] : memref<8x8x32xbf16, #tpu.memory_space<vmem>>, vector<8x8x32xbf16>
    %6 = vector.shape_cast %5 : vector<8x8x32xbf16> to vector<64x32xbf16>
    %c0_5 = arith.constant 0 : index
    %c0_6 = arith.constant 0 : index
    %7 = vector.load %arg4[%c0_5, %c0_6] : memref<32x384xbf16, #tpu.memory_space<vmem>>, vector<32x384xbf16>
    %cst = arith.constant dense<0.000000e+00> : vector<64x384xf32>
    %8 = tpu.matmul %6, %7, %cst {dimension_numbers = #tpu.dot_dimension_numbers<[1], [0], [0], [1], [0, 0, 1, 1], [], []>} : vector<64x32xbf16>, vector<32x384xbf16>, vector<64x384xf32> -> vector<64x384xf32>
    %c0_7 = arith.constant 0 : index
    %c0_8 = arith.constant 0 : index
    %9 = vector.load %arg6[%c0_7, %c0_8] : memref<1x384xf32, #tpu.memory_space<vmem>>, vector<1x384xf32>
    %10 = vector.broadcast %9 : vector<1x384xf32> to vector<64x384xf32>
    %11 = arith.addf %8, %10 : vector<64x384xf32>
    %12 = vector.shape_cast %11 : vector<64x384xf32> to vector<8x8x384xf32>
    %c0_9 = arith.constant 0 : index
    %c0_10 = arith.constant 0 : index
    %13 = vector.load %arg5[%c0_9, %c0_10] : memref<128x384xbf16, #tpu.memory_space<vmem>>, vector<128x384xbf16>
    %c0_11 = arith.constant 0 : index
    %c0_12 = arith.constant 0 : index
    %14 = vector.load %arg7[%c0_11, %c0_12] : memref<1x128xf32, #tpu.memory_space<vmem>>, vector<1x128xf32>
    %15 = vector.shape_cast %14 : vector<1x128xf32> to vector<1x128xf32>
    %16 = vector.broadcast %15 : vector<1x128xf32> to vector<8x128xf32>
    %c0_13 = arith.constant 0 : index
    %c0_14 = arith.constant 0 : index
    %17 = vector.load %arg12[%c0_13, %c0_14] : memref<8x128xf32, #tpu.memory_space<vmem>>, vector<8x128xf32>
    %18 = arith.truncf %17 : vector<8x128xf32> to vector<8x128xbf16>
    %cst_15 = arith.constant dense<0.000000e+00> : vector<8x384xf32>
    %19 = tpu.matmul %18, %13, %cst_15 {dimension_numbers = #tpu.dot_dimension_numbers<[1], [0], [0], [1], [0, 0, 1, 1], [], []>} : vector<8x128xbf16>, vector<128x384xbf16>, vector<8x384xf32> -> vector<8x384xf32>
    %20 = vector.extract_strided_slice %12 {offsets = [0, 0, 0], sizes = [8, 1, 384], strides = [1, 1, 1]} : vector<8x8x384xf32> to vector<8x1x384xf32>
    %21 = vector.shape_cast %20 : vector<8x1x384xf32> to vector<8x384xf32>
    %22 = vector.extract_strided_slice %21 {offsets = [0, 0], sizes = [8, 128], strides = [1, 1]} : vector<8x384xf32> to vector<8x128xf32>
    %23 = vector.extract_strided_slice %19 {offsets = [0, 0], sizes = [8, 128], strides = [1, 1]} : vector<8x384xf32> to vector<8x128xf32>
    %24 = arith.addf %22, %23 : vector<8x128xf32>
    %25 = arith.negf %24 : vector<8x128xf32>
    %26 = math.exp %25 : vector<8x128xf32>
    %cst_16 = arith.constant 1.000000e+00 : f32
    %27 = vector.broadcast %cst_16 : f32 to vector<8x128xf32>
    %28 = arith.addf %27, %26 : vector<8x128xf32>
    %29 = arith.divf %27, %28 : vector<8x128xf32>
    %30 = vector.extract_strided_slice %21 {offsets = [0, 128], sizes = [8, 128], strides = [1, 1]} : vector<8x384xf32> to vector<8x128xf32>
    %31 = vector.extract_strided_slice %19 {offsets = [0, 128], sizes = [8, 128], strides = [1, 1]} : vector<8x384xf32> to vector<8x128xf32>
    %32 = arith.addf %30, %31 : vector<8x128xf32>
    %33 = arith.negf %32 : vector<8x128xf32>
    %34 = math.exp %33 : vector<8x128xf32>
    %cst_17 = arith.constant 1.000000e+00 : f32
    %35 = vector.broadcast %cst_17 : f32 to vector<8x128xf32>
    %36 = arith.addf %35, %34 : vector<8x128xf32>
    %37 = arith.divf %35, %36 : vector<8x128xf32>
    %38 = vector.extract_strided_slice %21 {offsets = [0, 256], sizes = [8, 128], strides = [1, 1]} : vector<8x384xf32> to vector<8x128xf32>
    %39 = vector.extract_strided_slice %19 {offsets = [0, 256], sizes = [8, 128], strides = [1, 1]} : vector<8x384xf32> to vector<8x128xf32>
    %40 = arith.addf %39, %16 : vector<8x128xf32>
    %41 = arith.mulf %29, %40 : vector<8x128xf32>
    %42 = arith.addf %38, %41 : vector<8x128xf32>
    %43 = math.tanh %42 : vector<8x128xf32>
    %cst_18 = arith.constant 1.000000e+00 : f32
    %44 = vector.broadcast %cst_18 : f32 to vector<8x128xf32>
    %45 = arith.subf %44, %37 : vector<8x128xf32>
    %46 = arith.mulf %45, %43 : vector<8x128xf32>
    %47 = arith.mulf %37, %17 : vector<8x128xf32>
    %48 = arith.addf %46, %47 : vector<8x128xf32>
    %c0_i32_19 = arith.constant 0 : i32
    %49 = arith.addi %4, %c0_i32_19 : i32
    %50 = vector.broadcast %49 : i32 to vector<8x1xi32>
    %51 = arith.cmpi slt, %50, %3 : vector<8x1xi32>
    %cst_20 = arith.constant 0.000000e+00 : f32
    %52 = vector.shape_cast %51 : vector<8x1xi1> to vector<8x1xi1>
    %53 = vector.broadcast %52 : vector<8x1xi1> to vector<8x128xi1>
    %54 = vector.broadcast %cst_20 : f32 to vector<8x128xf32>
    %55 = arith.select %53, %48, %54 : vector<8x128xi1>, vector<8x128xf32>
    %c0_21 = arith.constant 0 : index
    %c0_22 = arith.constant 0 : index
    %c0_23 = arith.constant 0 : index
    %56 = vector.load %arg10[%c0_21, %c0_22, %c0_23] : memref<8x8x128xf32, #tpu.memory_space<vmem>>, vector<8x1x128xf32>
    %57 = vector.shape_cast %56 : vector<8x1x128xf32> to vector<8x128xf32>
    %58 = vector.shape_cast %55 : vector<8x128xf32> to vector<8x1x128xf32>
    tpu.vector_store %arg10[%c0_21, %c0_22, %c0_23], %58 {strides = array<i32>} : memref<8x8x128xf32, #tpu.memory_space<vmem>>, vector<8x1x128xf32>,
    %59 = vector.shape_cast %51 : vector<8x1xi1> to vector<8x1xi1>
    %60 = vector.broadcast %59 : vector<8x1xi1> to vector<8x128xi1>
    %61 = arith.select %60, %48, %17 : vector<8x128xi1>, vector<8x128xf32>
    %62 = arith.truncf %61 : vector<8x128xf32> to vector<8x128xbf16>
    %cst_24 = arith.constant dense<0.000000e+00> : vector<8x384xf32>
    %63 = tpu.matmul %62, %13, %cst_24 {dimension_numbers = #tpu.dot_dimension_numbers<[1], [0], [0], [1], [0, 0, 1, 1], [], []>} : vector<8x128xbf16>, vector<128x384xbf16>, vector<8x384xf32> -> vector<8x384xf32>
    %64 = vector.extract_strided_slice %12 {offsets = [0, 1, 0], sizes = [8, 1, 384], strides = [1, 1, 1]} : vector<8x8x384xf32> to vector<8x1x384xf32>
    %65 = vector.shape_cast %64 : vector<8x1x384xf32> to vector<8x384xf32>
    %66 = vector.extract_strided_slice %65 {offsets = [0, 0], sizes = [8, 128], strides = [1, 1]} : vector<8x384xf32> to vector<8x128xf32>
    %67 = vector.extract_strided_slice %63 {offsets = [0, 0], sizes = [8, 128], strides = [1, 1]} : vector<8x384xf32> to vector<8x128xf32>
    %68 = arith.addf %66, %67 : vector<8x128xf32>
    %69 = arith.negf %68 : vector<8x128xf32>
    %70 = math.exp %69 : vector<8x128xf32>
    %cst_25 = arith.constant 1.000000e+00 : f32
    %71 = vector.broadcast %cst_25 : f32 to vector<8x128xf32>
    %72 = arith.addf %71, %70 : vector<8x128xf32>
    %73 = arith.divf %71, %72 : vector<8x128xf32>
    %74 = vector.extract_strided_slice %65 {offsets = [0, 128], sizes = [8, 128], strides = [1, 1]} : vector<8x384xf32> to vector<8x128xf32>
    %75 = vector.extract_strided_slice %63 {offsets = [0, 128], sizes = [8, 128], strides = [1, 1]} : vector<8x384xf32> to vector<8x128xf32>
    %76 = arith.addf %74, %75 : vector<8x128xf32>
    %77 = arith.negf %76 : vector<8x128xf32>
    %78 = math.exp %77 : vector<8x128xf32>
    %cst_26 = arith.constant 1.000000e+00 : f32
    %79 = vector.broadcast %cst_26 : f32 to vector<8x128xf32>
    %80 = arith.addf %79, %78 : vector<8x128xf32>
    %81 = arith.divf %79, %80 : vector<8x128xf32>
    %82 = vector.extract_strided_slice %65 {offsets = [0, 256], sizes = [8, 128], strides = [1, 1]} : vector<8x384xf32> to vector<8x128xf32>
    %83 = vector.extract_strided_slice %63 {offsets = [0, 256], sizes = [8, 128], strides = [1, 1]} : vector<8x384xf32> to vector<8x128xf32>
    %84 = arith.addf %83, %16 : vector<8x128xf32>
    %85 = arith.mulf %73, %84 : vector<8x128xf32>
    %86 = arith.addf %82, %85 : vector<8x128xf32>
    %87 = math.tanh %86 : vector<8x128xf32>
    %cst_27 = arith.constant 1.000000e+00 : f32
    %88 = vector.broadcast %cst_27 : f32 to vector<8x128xf32>
    %89 = arith.subf %88, %81 : vector<8x128xf32>
    %90 = arith.mulf %89, %87 : vector<8x128xf32>
    %91 = arith.mulf %81, %61 : vector<8x128xf32>
    %92 = arith.addf %90, %91 : vector<8x128xf32>
    %c1_i32 = arith.constant 1 : i32
    %93 = arith.addi %4, %c1_i32 : i32
    %94 = vector.broadcast %93 : i32 to vector<8x1xi32>
    %95 = arith.cmpi slt, %94, %3 : vector<8x1xi32>
    %cst_28 = arith.constant 0.000000e+00 : f32
    %96 = vector.shape_cast %95 : vector<8x1xi1> to vector<8x1xi1>
    %97 = vector.broadcast %96 : vector<8x1xi1> to vector<8x128xi1>
    %98 = vector.broadcast %cst_28 : f32 to vector<8x128xf32>
    %99 = arith.select %97, %92, %98 : vector<8x128xi1>, vector<8x128xf32>
    %c0_29 = arith.constant 0 : index
    %c1 = arith.constant 1 : index
    %c0_30 = arith.constant 0 : index
    %100 = vector.load %arg10[%c0_29, %c1, %c0_30] : memref<8x8x128xf32, #tpu.memory_space<vmem>>, vector<8x1x128xf32>
    %101 = vector.shape_cast %100 : vector<8x1x128xf32> to vector<8x128xf32>
    %102 = vector.shape_cast %99 : vector<8x128xf32> to vector<8x1x128xf32>
    tpu.vector_store %arg10[%c0_29, %c1, %c0_30], %102 {strides = array<i32>} : memref<8x8x128xf32, #tpu.memory_space<vmem>>, vector<8x1x128xf32>,
    %103 = vector.shape_cast %95 : vector<8x1xi1> to vector<8x1xi1>
    %104 = vector.broadcast %103 : vector<8x1xi1> to vector<8x128xi1>
    %105 = arith.select %104, %92, %61 : vector<8x128xi1>, vector<8x128xf32>
    %106 = arith.truncf %105 : vector<8x128xf32> to vector<8x128xbf16>
    %cst_31 = arith.constant dense<0.000000e+00> : vector<8x384xf32>
    %107 = tpu.matmul %106, %13, %cst_31 {dimension_numbers = #tpu.dot_dimension_numbers<[1], [0], [0], [1], [0, 0, 1, 1], [], []>} : vector<8x128xbf16>, vector<128x384xbf16>, vector<8x384xf32> -> vector<8x384xf32>
    %108 = vector.extract_strided_slice %12 {offsets = [0, 2, 0], sizes = [8, 1, 384], strides = [1, 1, 1]} : vector<8x8x384xf32> to vector<8x1x384xf32>
    %109 = vector.shape_cast %108 : vector<8x1x384xf32> to vector<8x384xf32>
    %110 = vector.extract_strided_slice %109 {offsets = [0, 0], sizes = [8, 128], strides = [1, 1]} : vector<8x384xf32> to vector<8x128xf32>
    %111 = vector.extract_strided_slice %107 {offsets = [0, 0], sizes = [8, 128], strides = [1, 1]} : vector<8x384xf32> to vector<8x128xf32>
    %112 = arith.addf %110, %111 : vector<8x128xf32>
    %113 = arith.negf %112 : vector<8x128xf32>
    %114 = math.exp %113 : vector<8x128xf32>
    %cst_32 = arith.constant 1.000000e+00 : f32
    %115 = vector.broadcast %cst_32 : f32 to vector<8x128xf32>
    %116 = arith.addf %115, %114 : vector<8x128xf32>
    %117 = arith.divf %115, %116 : vector<8x128xf32>
    %118 = vector.extract_strided_slice %109 {offsets = [0, 128], sizes = [8, 128], strides = [1, 1]} : vector<8x384xf32> to vector<8x128xf32>
    %119 = vector.extract_strided_slice %107 {offsets = [0, 128], sizes = [8, 128], strides = [1, 1]} : vector<8x384xf32> to vector<8x128xf32>
    %120 = arith.addf %118, %119 : vector<8x128xf32>
    %121 = arith.negf %120 : vector<8x128xf32>
    %122 = math.exp %121 : vector<8x128xf32>
    %cst_33 = arith.constant 1.000000e+00 : f32
    %123 = vector.broadcast %cst_33 : f32 to vector<8x128xf32>
    %124 = arith.addf %123, %122 : vector<8x128xf32>
    %125 = arith.divf %123, %124 : vector<8x128xf32>
    %126 = vector.extract_strided_slice %109 {offsets = [0, 256], sizes = [8, 128], strides = [1, 1]} : vector<8x384xf32> to vector<8x128xf32>
    %127 = vector.extract_strided_slice %107 {offsets = [0, 256], sizes = [8, 128], strides = [1, 1]} : vector<8x384xf32> to vector<8x128xf32>
    %128 = arith.addf %127, %16 : vector<8x128xf32>
    %129 = arith.mulf %117, %128 : vector<8x128xf32>
    %130 = arith.addf %126, %129 : vector<8x128xf32>
    %131 = math.tanh %130 : vector<8x128xf32>
    %cst_34 = arith.constant 1.000000e+00 : f32
    %132 = vector.broadcast %cst_34 : f32 to vector<8x128xf32>
    %133 = arith.subf %132, %125 : vector<8x128xf32>
    %134 = arith.mulf %133, %131 : vector<8x128xf32>
    %135 = arith.mulf %125, %105 : vector<8x128xf32>
    %136 = arith.addf %134, %135 : vector<8x128xf32>
    %c2_i32 = arith.constant 2 : i32
    %137 = arith.addi %4, %c2_i32 : i32
    %138 = vector.broadcast %137 : i32 to vector<8x1xi32>
    %139 = arith.cmpi slt, %138, %3 : vector<8x1xi32>
    %cst_35 = arith.constant 0.000000e+00 : f32
    %140 = vector.shape_cast %139 : vector<8x1xi1> to vector<8x1xi1>
    %141 = vector.broadcast %140 : vector<8x1xi1> to vector<8x128xi1>
    %142 = vector.broadcast %cst_35 : f32 to vector<8x128xf32>
    %143 = arith.select %141, %136, %142 : vector<8x128xi1>, vector<8x128xf32>
    %c0_36 = arith.constant 0 : index
    %c2 = arith.constant 2 : index
    %c0_37 = arith.constant 0 : index
    %144 = vector.load %arg10[%c0_36, %c2, %c0_37] : memref<8x8x128xf32, #tpu.memory_space<vmem>>, vector<8x1x128xf32>
    %145 = vector.shape_cast %144 : vector<8x1x128xf32> to vector<8x128xf32>
    %146 = vector.shape_cast %143 : vector<8x128xf32> to vector<8x1x128xf32>
    tpu.vector_store %arg10[%c0_36, %c2, %c0_37], %146 {strides = array<i32>} : memref<8x8x128xf32, #tpu.memory_space<vmem>>, vector<8x1x128xf32>,
    %147 = vector.shape_cast %139 : vector<8x1xi1> to vector<8x1xi1>
    %148 = vector.broadcast %147 : vector<8x1xi1> to vector<8x128xi1>
    %149 = arith.select %148, %136, %105 : vector<8x128xi1>, vector<8x128xf32>
    %150 = arith.truncf %149 : vector<8x128xf32> to vector<8x128xbf16>
    %cst_38 = arith.constant dense<0.000000e+00> : vector<8x384xf32>
    %151 = tpu.matmul %150, %13, %cst_38 {dimension_numbers = #tpu.dot_dimension_numbers<[1], [0], [0], [1], [0, 0, 1, 1], [], []>} : vector<8x128xbf16>, vector<128x384xbf16>, vector<8x384xf32> -> vector<8x384xf32>
    %152 = vector.extract_strided_slice %12 {offsets = [0, 3, 0], sizes = [8, 1, 384], strides = [1, 1, 1]} : vector<8x8x384xf32> to vector<8x1x384xf32>
    %153 = vector.shape_cast %152 : vector<8x1x384xf32> to vector<8x384xf32>
    %154 = vector.extract_strided_slice %153 {offsets = [0, 0], sizes = [8, 128], strides = [1, 1]} : vector<8x384xf32> to vector<8x128xf32>
    %155 = vector.extract_strided_slice %151 {offsets = [0, 0], sizes = [8, 128], strides = [1, 1]} : vector<8x384xf32> to vector<8x128xf32>
    %156 = arith.addf %154, %155 : vector<8x128xf32>
    %157 = arith.negf %156 : vector<8x128xf32>
    %158 = math.exp %157 : vector<8x128xf32>
    %cst_39 = arith.constant 1.000000e+00 : f32
    %159 = vector.broadcast %cst_39 : f32 to vector<8x128xf32>
    %160 = arith.addf %159, %158 : vector<8x128xf32>
    %161 = arith.divf %159, %160 : vector<8x128xf32>
    %162 = vector.extract_strided_slice %153 {offsets = [0, 128], sizes = [8, 128], strides = [1, 1]} : vector<8x384xf32> to vector<8x128xf32>
    %163 = vector.extract_strided_slice %151 {offsets = [0, 128], sizes = [8, 128], strides = [1, 1]} : vector<8x384xf32> to vector<8x128xf32>
    %164 = arith.addf %162, %163 : vector<8x128xf32>
    %165 = arith.negf %164 : vector<8x128xf32>
    %166 = math.exp %165 : vector<8x128xf32>
    %cst_40 = arith.constant 1.000000e+00 : f32
    %167 = vector.broadcast %cst_40 : f32 to vector<8x128xf32>
    %168 = arith.addf %167, %166 : vector<8x128xf32>
    %169 = arith.divf %167, %168 : vector<8x128xf32>
    %170 = vector.extract_strided_slice %153 {offsets = [0, 256], sizes = [8, 128], strides = [1, 1]} : vector<8x384xf32> to vector<8x128xf32>
    %171 = vector.extract_strided_slice %151 {offsets = [0, 256], sizes = [8, 128], strides = [1, 1]} : vector<8x384xf32> to vector<8x128xf32>
    %172 = arith.addf %171, %16 : vector<8x128xf32>
    %173 = arith.mulf %161, %172 : vector<8x128xf32>
    %174 = arith.addf %170, %173 : vector<8x128xf32>
    %175 = math.tanh %174 : vector<8x128xf32>
    %cst_41 = arith.constant 1.000000e+00 : f32
    %176 = vector.broadcast %cst_41 : f32 to vector<8x128xf32>
    %177 = arith.subf %176, %169 : vector<8x128xf32>
    %178 = arith.mulf %177, %175 : vector<8x128xf32>
    %179 = arith.mulf %169, %149 : vector<8x128xf32>
    %180 = arith.addf %178, %179 : vector<8x128xf32>
    %c3_i32 = arith.constant 3 : i32
    %181 = arith.addi %4, %c3_i32 : i32
    %182 = vector.broadcast %181 : i32 to vector<8x1xi32>
    %183 = arith.cmpi slt, %182, %3 : vector<8x1xi32>
    %cst_42 = arith.constant 0.000000e+00 : f32
    %184 = vector.shape_cast %183 : vector<8x1xi1> to vector<8x1xi1>
    %185 = vector.broadcast %184 : vector<8x1xi1> to vector<8x128xi1>
    %186 = vector.broadcast %cst_42 : f32 to vector<8x128xf32>
    %187 = arith.select %185, %180, %186 : vector<8x128xi1>, vector<8x128xf32>
    %c0_43 = arith.constant 0 : index
    %c3 = arith.constant 3 : index
    %c0_44 = arith.constant 0 : index
    %188 = vector.load %arg10[%c0_43, %c3, %c0_44] : memref<8x8x128xf32, #tpu.memory_space<vmem>>, vector<8x1x128xf32>
    %189 = vector.shape_cast %188 : vector<8x1x128xf32> to vector<8x128xf32>
    %190 = vector.shape_cast %187 : vector<8x128xf32> to vector<8x1x128xf32>
    tpu.vector_store %arg10[%c0_43, %c3, %c0_44], %190 {strides = array<i32>} : memref<8x8x128xf32, #tpu.memory_space<vmem>>, vector<8x1x128xf32>,
    %191 = vector.shape_cast %183 : vector<8x1xi1> to vector<8x1xi1>
    %192 = vector.broadcast %191 : vector<8x1xi1> to vector<8x128xi1>
    %193 = arith.select %192, %180, %149 : vector<8x128xi1>, vector<8x128xf32>
    %194 = arith.truncf %193 : vector<8x128xf32> to vector<8x128xbf16>
    %cst_45 = arith.constant dense<0.000000e+00> : vector<8x384xf32>
    %195 = tpu.matmul %194, %13, %cst_45 {dimension_numbers = #tpu.dot_dimension_numbers<[1], [0], [0], [1], [0, 0, 1, 1], [], []>} : vector<8x128xbf16>, vector<128x384xbf16>, vector<8x384xf32> -> vector<8x384xf32>
    %196 = vector.extract_strided_slice %12 {offsets = [0, 4, 0], sizes = [8, 1, 384], strides = [1, 1, 1]} : vector<8x8x384xf32> to vector<8x1x384xf32>
    %197 = vector.shape_cast %196 : vector<8x1x384xf32> to vector<8x384xf32>
    %198 = vector.extract_strided_slice %197 {offsets = [0, 0], sizes = [8, 128], strides = [1, 1]} : vector<8x384xf32> to vector<8x128xf32>
    %199 = vector.extract_strided_slice %195 {offsets = [0, 0], sizes = [8, 128], strides = [1, 1]} : vector<8x384xf32> to vector<8x128xf32>
    %200 = arith.addf %198, %199 : vector<8x128xf32>
    %201 = arith.negf %200 : vector<8x128xf32>
    %202 = math.exp %201 : vector<8x128xf32>
    %cst_46 = arith.constant 1.000000e+00 : f32
    %203 = vector.broadcast %cst_46 : f32 to vector<8x128xf32>
    %204 = arith.addf %203, %202 : vector<8x128xf32>
    %205 = arith.divf %203, %204 : vector<8x128xf32>
    %206 = vector.extract_strided_slice %197 {offsets = [0, 128], sizes = [8, 128], strides = [1, 1]} : vector<8x384xf32> to vector<8x128xf32>
    %207 = vector.extract_strided_slice %195 {offsets = [0, 128], sizes = [8, 128], strides = [1, 1]} : vector<8x384xf32> to vector<8x128xf32>
    %208 = arith.addf %206, %207 : vector<8x128xf32>
    %209 = arith.negf %208 : vector<8x128xf32>
    %210 = math.exp %209 : vector<8x128xf32>
    %cst_47 = arith.constant 1.000000e+00 : f32
    %211 = vector.broadcast %cst_47 : f32 to vector<8x128xf32>
    %212 = arith.addf %211, %210 : vector<8x128xf32>
    %213 = arith.divf %211, %212 : vector<8x128xf32>
    %214 = vector.extract_strided_slice %197 {offsets = [0, 256], sizes = [8, 128], strides = [1, 1]} : vector<8x384xf32> to vector<8x128xf32>
    %215 = vector.extract_strided_slice %195 {offsets = [0, 256], sizes = [8, 128], strides = [1, 1]} : vector<8x384xf32> to vector<8x128xf32>
    %216 = arith.addf %215, %16 : vector<8x128xf32>
    %217 = arith.mulf %205, %216 : vector<8x128xf32>
    %218 = arith.addf %214, %217 : vector<8x128xf32>
    %219 = math.tanh %218 : vector<8x128xf32>
    %cst_48 = arith.constant 1.000000e+00 : f32
    %220 = vector.broadcast %cst_48 : f32 to vector<8x128xf32>
    %221 = arith.subf %220, %213 : vector<8x128xf32>
    %222 = arith.mulf %221, %219 : vector<8x128xf32>
    %223 = arith.mulf %213, %193 : vector<8x128xf32>
    %224 = arith.addf %222, %223 : vector<8x128xf32>
    %c4_i32 = arith.constant 4 : i32
    %225 = arith.addi %4, %c4_i32 : i32
    %226 = vector.broadcast %225 : i32 to vector<8x1xi32>
    %227 = arith.cmpi slt, %226, %3 : vector<8x1xi32>
    %cst_49 = arith.constant 0.000000e+00 : f32
    %228 = vector.shape_cast %227 : vector<8x1xi1> to vector<8x1xi1>
    %229 = vector.broadcast %228 : vector<8x1xi1> to vector<8x128xi1>
    %230 = vector.broadcast %cst_49 : f32 to vector<8x128xf32>
    %231 = arith.select %229, %224, %230 : vector<8x128xi1>, vector<8x128xf32>
    %c0_50 = arith.constant 0 : index
    %c4 = arith.constant 4 : index
    %c0_51 = arith.constant 0 : index
    %232 = vector.load %arg10[%c0_50, %c4, %c0_51] : memref<8x8x128xf32, #tpu.memory_space<vmem>>, vector<8x1x128xf32>
    %233 = vector.shape_cast %232 : vector<8x1x128xf32> to vector<8x128xf32>
    %234 = vector.shape_cast %231 : vector<8x128xf32> to vector<8x1x128xf32>
    tpu.vector_store %arg10[%c0_50, %c4, %c0_51], %234 {strides = array<i32>} : memref<8x8x128xf32, #tpu.memory_space<vmem>>, vector<8x1x128xf32>,
    %235 = vector.shape_cast %227 : vector<8x1xi1> to vector<8x1xi1>
    %236 = vector.broadcast %235 : vector<8x1xi1> to vector<8x128xi1>
    %237 = arith.select %236, %224, %193 : vector<8x128xi1>, vector<8x128xf32>
    %238 = arith.truncf %237 : vector<8x128xf32> to vector<8x128xbf16>
    %cst_52 = arith.constant dense<0.000000e+00> : vector<8x384xf32>
    %239 = tpu.matmul %238, %13, %cst_52 {dimension_numbers = #tpu.dot_dimension_numbers<[1], [0], [0], [1], [0, 0, 1, 1], [], []>} : vector<8x128xbf16>, vector<128x384xbf16>, vector<8x384xf32> -> vector<8x384xf32>
    %240 = vector.extract_strided_slice %12 {offsets = [0, 5, 0], sizes = [8, 1, 384], strides = [1, 1, 1]} : vector<8x8x384xf32> to vector<8x1x384xf32>
    %241 = vector.shape_cast %240 : vector<8x1x384xf32> to vector<8x384xf32>
    %242 = vector.extract_strided_slice %241 {offsets = [0, 0], sizes = [8, 128], strides = [1, 1]} : vector<8x384xf32> to vector<8x128xf32>
    %243 = vector.extract_strided_slice %239 {offsets = [0, 0], sizes = [8, 128], strides = [1, 1]} : vector<8x384xf32> to vector<8x128xf32>
    %244 = arith.addf %242, %243 : vector<8x128xf32>
    %245 = arith.negf %244 : vector<8x128xf32>
    %246 = math.exp %245 : vector<8x128xf32>
    %cst_53 = arith.constant 1.000000e+00 : f32
    %247 = vector.broadcast %cst_53 : f32 to vector<8x128xf32>
    %248 = arith.addf %247, %246 : vector<8x128xf32>
    %249 = arith.divf %247, %248 : vector<8x128xf32>
    %250 = vector.extract_strided_slice %241 {offsets = [0, 128], sizes = [8, 128], strides = [1, 1]} : vector<8x384xf32> to vector<8x128xf32>
    %251 = vector.extract_strided_slice %239 {offsets = [0, 128], sizes = [8, 128], strides = [1, 1]} : vector<8x384xf32> to vector<8x128xf32>
    %252 = arith.addf %250, %251 : vector<8x128xf32>
    %253 = arith.negf %252 : vector<8x128xf32>
    %254 = math.exp %253 : vector<8x128xf32>
    %cst_54 = arith.constant 1.000000e+00 : f32
    %255 = vector.broadcast %cst_54 : f32 to vector<8x128xf32>
    %256 = arith.addf %255, %254 : vector<8x128xf32>
    %257 = arith.divf %255, %256 : vector<8x128xf32>
    %258 = vector.extract_strided_slice %241 {offsets = [0, 256], sizes = [8, 128], strides = [1, 1]} : vector<8x384xf32> to vector<8x128xf32>
    %259 = vector.extract_strided_slice %239 {offsets = [0, 256], sizes = [8, 128], strides = [1, 1]} : vector<8x384xf32> to vector<8x128xf32>
    %260 = arith.addf %259, %16 : vector<8x128xf32>
    %261 = arith.mulf %249, %260 : vector<8x128xf32>
    %262 = arith.addf %258, %261 : vector<8x128xf32>
    %263 = math.tanh %262 : vector<8x128xf32>
    %cst_55 = arith.constant 1.000000e+00 : f32
    %264 = vector.broadcast %cst_55 : f32 to vector<8x128xf32>
    %265 = arith.subf %264, %257 : vector<8x128xf32>
    %266 = arith.mulf %265, %263 : vector<8x128xf32>
    %267 = arith.mulf %257, %237 : vector<8x128xf32>
    %268 = arith.addf %266, %267 : vector<8x128xf32>
    %c5_i32 = arith.constant 5 : i32
    %269 = arith.addi %4, %c5_i32 : i32
    %270 = vector.broadcast %269 : i32 to vector<8x1xi32>
    %271 = arith.cmpi slt, %270, %3 : vector<8x1xi32>
    %cst_56 = arith.constant 0.000000e+00 : f32
    %272 = vector.shape_cast %271 : vector<8x1xi1> to vector<8x1xi1>
    %273 = vector.broadcast %272 : vector<8x1xi1> to vector<8x128xi1>
    %274 = vector.broadcast %cst_56 : f32 to vector<8x128xf32>
    %275 = arith.select %273, %268, %274 : vector<8x128xi1>, vector<8x128xf32>
    %c0_57 = arith.constant 0 : index
    %c5 = arith.constant 5 : index
    %c0_58 = arith.constant 0 : index
    %276 = vector.load %arg10[%c0_57, %c5, %c0_58] : memref<8x8x128xf32, #tpu.memory_space<vmem>>, vector<8x1x128xf32>
    %277 = vector.shape_cast %276 : vector<8x1x128xf32> to vector<8x128xf32>
    %278 = vector.shape_cast %275 : vector<8x128xf32> to vector<8x1x128xf32>
    tpu.vector_store %arg10[%c0_57, %c5, %c0_58], %278 {strides = array<i32>} : memref<8x8x128xf32, #tpu.memory_space<vmem>>, vector<8x1x128xf32>,
    %279 = vector.shape_cast %271 : vector<8x1xi1> to vector<8x1xi1>
    %280 = vector.broadcast %279 : vector<8x1xi1> to vector<8x128xi1>
    %281 = arith.select %280, %268, %237 : vector<8x128xi1>, vector<8x128xf32>
    %282 = arith.truncf %281 : vector<8x128xf32> to vector<8x128xbf16>
    %cst_59 = arith.constant dense<0.000000e+00> : vector<8x384xf32>
    %283 = tpu.matmul %282, %13, %cst_59 {dimension_numbers = #tpu.dot_dimension_numbers<[1], [0], [0], [1], [0, 0, 1, 1], [], []>} : vector<8x128xbf16>, vector<128x384xbf16>, vector<8x384xf32> -> vector<8x384xf32>
    %284 = vector.extract_strided_slice %12 {offsets = [0, 6, 0], sizes = [8, 1, 384], strides = [1, 1, 1]} : vector<8x8x384xf32> to vector<8x1x384xf32>
    %285 = vector.shape_cast %284 : vector<8x1x384xf32> to vector<8x384xf32>
    %286 = vector.extract_strided_slice %285 {offsets = [0, 0], sizes = [8, 128], strides = [1, 1]} : vector<8x384xf32> to vector<8x128xf32>
    %287 = vector.extract_strided_slice %283 {offsets = [0, 0], sizes = [8, 128], strides = [1, 1]} : vector<8x384xf32> to vector<8x128xf32>
    %288 = arith.addf %286, %287 : vector<8x128xf32>
    %289 = arith.negf %288 : vector<8x128xf32>
    %290 = math.exp %289 : vector<8x128xf32>
    %cst_60 = arith.constant 1.000000e+00 : f32
    %291 = vector.broadcast %cst_60 : f32 to vector<8x128xf32>
    %292 = arith.addf %291, %290 : vector<8x128xf32>
    %293 = arith.divf %291, %292 : vector<8x128xf32>
    %294 = vector.extract_strided_slice %285 {offsets = [0, 128], sizes = [8, 128], strides = [1, 1]} : vector<8x384xf32> to vector<8x128xf32>
    %295 = vector.extract_strided_slice %283 {offsets = [0, 128], sizes = [8, 128], strides = [1, 1]} : vector<8x384xf32> to vector<8x128xf32>
    %296 = arith.addf %294, %295 : vector<8x128xf32>
    %297 = arith.negf %296 : vector<8x128xf32>
    %298 = math.exp %297 : vector<8x128xf32>
    %cst_61 = arith.constant 1.000000e+00 : f32
    %299 = vector.broadcast %cst_61 : f32 to vector<8x128xf32>
    %300 = arith.addf %299, %298 : vector<8x128xf32>
    %301 = arith.divf %299, %300 : vector<8x128xf32>
    %302 = vector.extract_strided_slice %285 {offsets = [0, 256], sizes = [8, 128], strides = [1, 1]} : vector<8x384xf32> to vector<8x128xf32>
    %303 = vector.extract_strided_slice %283 {offsets = [0, 256], sizes = [8, 128], strides = [1, 1]} : vector<8x384xf32> to vector<8x128xf32>
    %304 = arith.addf %303, %16 : vector<8x128xf32>
    %305 = arith.mulf %293, %304 : vector<8x128xf32>
    %306 = arith.addf %302, %305 : vector<8x128xf32>
    %307 = math.tanh %306 : vector<8x128xf32>
    %cst_62 = arith.constant 1.000000e+00 : f32
    %308 = vector.broadcast %cst_62 : f32 to vector<8x128xf32>
    %309 = arith.subf %308, %301 : vector<8x128xf32>
    %310 = arith.mulf %309, %307 : vector<8x128xf32>
    %311 = arith.mulf %301, %281 : vector<8x128xf32>
    %312 = arith.addf %310, %311 : vector<8x128xf32>
    %c6_i32 = arith.constant 6 : i32
    %313 = arith.addi %4, %c6_i32 : i32
    %314 = vector.broadcast %313 : i32 to vector<8x1xi32>
    %315 = arith.cmpi slt, %314, %3 : vector<8x1xi32>
    %cst_63 = arith.constant 0.000000e+00 : f32
    %316 = vector.shape_cast %315 : vector<8x1xi1> to vector<8x1xi1>
    %317 = vector.broadcast %316 : vector<8x1xi1> to vector<8x128xi1>
    %318 = vector.broadcast %cst_63 : f32 to vector<8x128xf32>
    %319 = arith.select %317, %312, %318 : vector<8x128xi1>, vector<8x128xf32>
    %c0_64 = arith.constant 0 : index
    %c6 = arith.constant 6 : index
    %c0_65 = arith.constant 0 : index
    %320 = vector.load %arg10[%c0_64, %c6, %c0_65] : memref<8x8x128xf32, #tpu.memory_space<vmem>>, vector<8x1x128xf32>
    %321 = vector.shape_cast %320 : vector<8x1x128xf32> to vector<8x128xf32>
    %322 = vector.shape_cast %319 : vector<8x128xf32> to vector<8x1x128xf32>
    tpu.vector_store %arg10[%c0_64, %c6, %c0_65], %322 {strides = array<i32>} : memref<8x8x128xf32, #tpu.memory_space<vmem>>, vector<8x1x128xf32>,
    %323 = vector.shape_cast %315 : vector<8x1xi1> to vector<8x1xi1>
    %324 = vector.broadcast %323 : vector<8x1xi1> to vector<8x128xi1>
    %325 = arith.select %324, %312, %281 : vector<8x128xi1>, vector<8x128xf32>
    %326 = arith.truncf %325 : vector<8x128xf32> to vector<8x128xbf16>
    %cst_66 = arith.constant dense<0.000000e+00> : vector<8x384xf32>
    %327 = tpu.matmul %326, %13, %cst_66 {dimension_numbers = #tpu.dot_dimension_numbers<[1], [0], [0], [1], [0, 0, 1, 1], [], []>} : vector<8x128xbf16>, vector<128x384xbf16>, vector<8x384xf32> -> vector<8x384xf32>
    %328 = vector.extract_strided_slice %12 {offsets = [0, 7, 0], sizes = [8, 1, 384], strides = [1, 1, 1]} : vector<8x8x384xf32> to vector<8x1x384xf32>
    %329 = vector.shape_cast %328 : vector<8x1x384xf32> to vector<8x384xf32>
    %330 = vector.extract_strided_slice %329 {offsets = [0, 0], sizes = [8, 128], strides = [1, 1]} : vector<8x384xf32> to vector<8x128xf32>
    %331 = vector.extract_strided_slice %327 {offsets = [0, 0], sizes = [8, 128], strides = [1, 1]} : vector<8x384xf32> to vector<8x128xf32>
    %332 = arith.addf %330, %331 : vector<8x128xf32>
    %333 = arith.negf %332 : vector<8x128xf32>
    %334 = math.exp %333 : vector<8x128xf32>
    %cst_67 = arith.constant 1.000000e+00 : f32
    %335 = vector.broadcast %cst_67 : f32 to vector<8x128xf32>
    %336 = arith.addf %335, %334 : vector<8x128xf32>
    %337 = arith.divf %335, %336 : vector<8x128xf32>
    %338 = vector.extract_strided_slice %329 {offsets = [0, 128], sizes = [8, 128], strides = [1, 1]} : vector<8x384xf32> to vector<8x128xf32>
    %339 = vector.extract_strided_slice %327 {offsets = [0, 128], sizes = [8, 128], strides = [1, 1]} : vector<8x384xf32> to vector<8x128xf32>
    %340 = arith.addf %338, %339 : vector<8x128xf32>
    %341 = arith.negf %340 : vector<8x128xf32>
    %342 = math.exp %341 : vector<8x128xf32>
    %cst_68 = arith.constant 1.000000e+00 : f32
    %343 = vector.broadcast %cst_68 : f32 to vector<8x128xf32>
    %344 = arith.addf %343, %342 : vector<8x128xf32>
    %345 = arith.divf %343, %344 : vector<8x128xf32>
    %346 = vector.extract_strided_slice %329 {offsets = [0, 256], sizes = [8, 128], strides = [1, 1]} : vector<8x384xf32> to vector<8x128xf32>
    %347 = vector.extract_strided_slice %327 {offsets = [0, 256], sizes = [8, 128], strides = [1, 1]} : vector<8x384xf32> to vector<8x128xf32>
    %348 = arith.addf %347, %16 : vector<8x128xf32>
    %349 = arith.mulf %337, %348 : vector<8x128xf32>
    %350 = arith.addf %346, %349 : vector<8x128xf32>
    %351 = math.tanh %350 : vector<8x128xf32>
    %cst_69 = arith.constant 1.000000e+00 : f32
    %352 = vector.broadcast %cst_69 : f32 to vector<8x128xf32>
    %353 = arith.subf %352, %345 : vector<8x128xf32>
    %354 = arith.mulf %353, %351 : vector<8x128xf32>
    %355 = arith.mulf %345, %325 : vector<8x128xf32>
    %356 = arith.addf %354, %355 : vector<8x128xf32>
    %c7_i32 = arith.constant 7 : i32
    %357 = arith.addi %4, %c7_i32 : i32
    %358 = vector.broadcast %357 : i32 to vector<8x1xi32>
    %359 = arith.cmpi slt, %358, %3 : vector<8x1xi32>
    %cst_70 = arith.constant 0.000000e+00 : f32
    %360 = vector.shape_cast %359 : vector<8x1xi1> to vector<8x1xi1>
    %361 = vector.broadcast %360 : vector<8x1xi1> to vector<8x128xi1>
    %362 = vector.broadcast %cst_70 : f32 to vector<8x128xf32>
    %363 = arith.select %361, %356, %362 : vector<8x128xi1>, vector<8x128xf32>
    %c0_71 = arith.constant 0 : index
    %c7 = arith.constant 7 : index
    %c0_72 = arith.constant 0 : index
    %364 = vector.load %arg10[%c0_71, %c7, %c0_72] : memref<8x8x128xf32, #tpu.memory_space<vmem>>, vector<8x1x128xf32>
    %365 = vector.shape_cast %364 : vector<8x1x128xf32> to vector<8x128xf32>
    %366 = vector.shape_cast %363 : vector<8x128xf32> to vector<8x1x128xf32>
    tpu.vector_store %arg10[%c0_71, %c7, %c0_72], %366 {strides = array<i32>} : memref<8x8x128xf32, #tpu.memory_space<vmem>>, vector<8x1x128xf32>,
    %367 = vector.shape_cast %359 : vector<8x1xi1> to vector<8x1xi1>
    %368 = vector.broadcast %367 : vector<8x1xi1> to vector<8x128xi1>
    %369 = arith.select %368, %356, %325 : vector<8x128xi1>, vector<8x128xf32>
    %c0_73 = arith.constant 0 : index
    %c0_74 = arith.constant 0 : index
    %370 = vector.load %arg12[%c0_73, %c0_74] : memref<8x128xf32, #tpu.memory_space<vmem>>, vector<8x128xf32>
    tpu.vector_store %arg12[%c0_73, %c0_74], %369 {strides = array<i32>} : memref<8x128xf32, #tpu.memory_space<vmem>>, vector<8x128xf32>,
    %c1_i32_75 = arith.constant 1 : i32
    %371 = arith.cmpi eq, %arg1, %c1_i32_75 : i32
    %372 = arith.extui %371 : i1 to i32
    %c0_i32_76 = arith.constant 0 : i32
    %373 = arith.cmpi ne, %372, %c0_i32_76 : i32
    scf.if %373 {
      %c0_77 = arith.constant 0 : index
      %c0_78 = arith.constant 0 : index
      %374 = vector.load %arg8[%c0_77, %c0_78] : memref<128x128xf32, #tpu.memory_space<vmem>>, vector<128x128xf32>
      %cst_79 = arith.constant dense<0.000000e+00> : vector<8x128xf32>
      %375 = tpu.matmul %369, %374, %cst_79 {dimension_numbers = #tpu.dot_dimension_numbers<[1], [0], [0], [1], [0, 0, 1, 1], [], []>} : vector<8x128xf32>, vector<128x128xf32>, vector<8x128xf32> -> vector<8x128xf32>
      %c0_80 = arith.constant 0 : index
      %c0_81 = arith.constant 0 : index
      %376 = vector.load %arg9[%c0_80, %c0_81] : memref<1x128xf32, #tpu.memory_space<vmem>>, vector<1x128xf32>
      %377 = vector.broadcast %376 : vector<1x128xf32> to vector<8x128xf32>
      %378 = arith.addf %375, %377 : vector<8x128xf32>
      %c0_82 = arith.constant 0 : index
      %c0_83 = arith.constant 0 : index
      %379 = vector.load %arg11[%c0_82, %c0_83] : memref<8x128xf32, #tpu.memory_space<vmem>>, vector<8x128xf32>
      tpu.vector_store %arg11[%c0_82, %c0_83], %378 {strides = array<i32>} : memref<8x128xf32, #tpu.memory_space<vmem>>, vector<8x128xf32>,
    } else {
    }
    return
  }
  func.func @transform_0(%arg0: i32, %arg1: i32) -> (i32, i32, i32) {
    %c0_i32 = arith.constant 0 : i32
    %c0_i32_0 = arith.constant 0 : i32
    return %arg0, %arg1, %c0_i32 : i32, i32, i32
  }
  func.func @transform_1(%arg0: i32, %arg1: i32) -> (i32, i32) {
    %c0_i32 = arith.constant 0 : i32
    %c0_i32_0 = arith.constant 0 : i32
    return %arg0, %c0_i32 : i32, i32
  }
  func.func @transform_2(%arg0: i32, %arg1: i32) -> (i32, i32) {
    %c0_i32 = arith.constant 0 : i32
    %c0_i32_0 = arith.constant 0 : i32
    %c0_i32_1 = arith.constant 0 : i32
    return %c0_i32, %c0_i32_0 : i32, i32
  }
  func.func @transform_3(%arg0: i32, %arg1: i32) -> (i32, i32) {
    %c0_i32 = arith.constant 0 : i32
    %c0_i32_0 = arith.constant 0 : i32
    %c0_i32_1 = arith.constant 0 : i32
    return %c0_i32, %c0_i32_0 : i32, i32
  }
  func.func @transform_4(%arg0: i32, %arg1: i32) -> (i32, i32) {
    %c0_i32 = arith.constant 0 : i32
    %c0_i32_0 = arith.constant 0 : i32
    %c0_i32_1 = arith.constant 0 : i32
    return %c0_i32, %c0_i32_0 : i32, i32
  }
  func.func @transform_5(%arg0: i32, %arg1: i32) -> (i32, i32) {
    %c0_i32 = arith.constant 0 : i32
    %c0_i32_0 = arith.constant 0 : i32
    %c0_i32_1 = arith.constant 0 : i32
    return %c0_i32, %c0_i32_0 : i32, i32
  }
  func.func @transform_6(%arg0: i32, %arg1: i32) -> (i32, i32) {
    %c0_i32 = arith.constant 0 : i32
    %c0_i32_0 = arith.constant 0 : i32
    %c0_i32_1 = arith.constant 0 : i32
    return %c0_i32, %c0_i32_0 : i32, i32
  }
  func.func @transform_7(%arg0: i32, %arg1: i32) -> (i32, i32) {
    %c0_i32 = arith.constant 0 : i32
    %c0_i32_0 = arith.constant 0 : i32
    %c0_i32_1 = arith.constant 0 : i32
    return %c0_i32, %c0_i32_0 : i32, i32
  }
  func.func @transform_8(%arg0: i32, %arg1: i32) -> (i32, i32, i32) {
    %c0_i32 = arith.constant 0 : i32
    %c0_i32_0 = arith.constant 0 : i32
    return %arg0, %arg1, %c0_i32 : i32, i32, i32
  }
  func.func @transform_9(%arg0: i32, %arg1: i32) -> (i32, i32) {
    %c0_i32 = arith.constant 0 : i32
    %c0_i32_0 = arith.constant 0 : i32
    return %arg0, %c0_i32 : i32, i32
  }
}

</mosaic_0001>

<llo_original>
// kernel: tpu_custom_call.1
$region0: #{tpu_custom_call.1}
  #allocation0 [shape = 'u32[]', space=smem, size = 0x4, offset = 0x4, fixed_abs, tag = 'smem constant byte address 0x4 - core index']
  #allocation1 [shape = 'u32[144,128]{1,0:T(1,128)}', space=vmem, size = 0x12000, scoped, tag = 'internal scratch']
  #allocation2 [shape = 'f32[8,128]{1,0:T(8,128)}', space=vmem, size = 0x1000, scoped, tag = 'scratch operand']
  %s0 = inlined_call_operand.hbm [shape: bf16[8,16,32], index: 0, kind: input, shape index: {}]
  %s1 = inlined_call_operand.vmem [shape: s32[8,1], index: 1, kind: input, shape index: {}]
  %s2 = inlined_call_operand.hbm [shape: bf16[32,384], index: 2, kind: input, shape index: {}]
  %s3 = inlined_call_operand.hbm [shape: bf16[128,384], index: 3, kind: input, shape index: {}]
  %s4 = inlined_call_operand.vmem [shape: f32[1,384], index: 4, kind: input, shape index: {}]
  %s5 = inlined_call_operand.vmem [shape: f32[1,128], index: 5, kind: input, shape index: {}]
  %s6 = inlined_call_operand.hbm [shape: f32[128,128], index: 6, kind: input, shape index: {}]
  %s7 = inlined_call_operand.vmem [shape: f32[1,128], index: 7, kind: input, shape index: {}]
  %s8 = inlined_call_operand.hbm [shape: f32[8,16,128], index: 8, kind: output, shape index: {0}]
  %s9 = inlined_call_operand.hbm [shape: f32[8,128], index: 9, kind: output, shape index: {1}]
  %10 = xla_tuple %s8, %s9
  %s11 = sld [smem:[#allocation0]]
  $region97: #{tpu_custom_call.1} parent=0
    _
  %s13 = ssub.s32 1, %s11
  %s14 = scalar_select 0, %s13, %s11
  $region1: #{tpu_custom_call.1} parent=0
    #allocation3 [shape = 'u8[32768]{0}', space=vmem, size = 0x8000, scoped, tag = 'input window, operand 0']
    #allocation4 [shape = 's32[2]{0}', space=sflag, size = 0x8, scoped, tag = 'scoped memory for tpu_custom_call.1']
    #allocation5 [shape = 's32[2]{0}', space=sflag, size = 0x8, scoped, tag = 'scoped memory for tpu_custom_call.1']
    #allocation6 [shape = 'u8[24576]{0}', space=vmem, size = 0x6000, scoped, tag = 'input window, operand 2, single buffered']
    #allocation7 [shape = 's32[1]{0}', space=sflag, size = 0x4, scoped, tag = 'scoped memory for tpu_custom_call.1']
    #allocation8 [shape = 'u8[98304]{0}', space=vmem, size = 0x18000, scoped, tag = 'input window, operand 3, single buffered']
    #allocation9 [shape = 'u8[65536]{0}', space=vmem, size = 0x10000, scoped, tag = 'input window, operand 6, single buffered']
    #allocation10 [shape = 's32[1]{0}', space=sflag, size = 0x4, scoped, tag = 'scoped memory for tpu_custom_call.1']
    #allocation11 [shape = 'u8[65536]{0}', space=vmem, size = 0x10000, scoped, tag = 'output window, operand 0']
    #allocation12 [shape = 'u8[4096]{0}', space=vmem, size = 0x1000, scoped, tag = 'output window, operand 1, single buffered']
    #allocation13 [shape = 's32[1]{0}', space=sflag, size = 0x4, scoped, tag = 'scoped memory for tpu_custom_call.1']
    %15 = vsyncpa [#allocation4], 0
    %s16 = scalar_lea.sflag [#allocation4], 1
    %17 = vsyncpa %s16, 0
    %18 = vsyncpa [#allocation7], 0
    %19 = vsyncpa [#allocation10], 0
    %20 = vsyncpa [#allocation5], 0
    %s21 = scalar_lea.sflag [#allocation5], 1
    %22 = vsyncpa %s21, 0
    %23 = vsyncpa [#allocation13], 0
    loop: start=0, step=1, limit=4
    $region2: #{tpu_custom_call.1} parent=1 // loop_pre_header
      _
    $region3: #{tpu_custom_call.1} parent=1 // loop_header
      %s25 = sphi 0, %s29
      %p26 = scmp.ge.s32.totalorder %s25, 4
      %s32 = sphi 0, %s44
      %s33 = sphi 0, %s40
      %s34 = sphi 0, %s32
      %s35 = sphi 0, %s33
      %s36 = sphi 0, %s34
      %s37 = sphi 0, %s35
      %s49 = sphi 0, %s51
      %s52 = sphi 0, %s49
      %s53 = sphi 0, %s52
      %s69 = sphi 0, %s53
      %s75 = sphi 0, %s77
      %s78 = sphi 0, %s75
      %s79 = sphi 0, %s78
      %s95 = sphi 0, %s79
      %s99 = sphi 0, %s99
      %s101 = sphi 0, %s99
      %s102 = sphi 0, %s101
      %s116 = sphi 0, %s102
      %s120 = sphi 0, %s120
      %s122 = sphi 0, %s120
      %s123 = sphi 0, %s122
      %s137 = sphi 0, %s123
      %s141 = sphi 0, %s141
      %s143 = sphi 0, %s141
      %s144 = sphi 0, %s143
      %s158 = sphi 0, %s144
      %s162 = sphi 0, %s162
      %s164 = sphi 0, %s162
      %s165 = sphi 0, %s164
      %s179 = sphi 0, %s165
      %s183 = sphi 0, %s183
      %s185 = sphi 0, %s183
      %s186 = sphi 0, %s185
      %s200 = sphi 0, %s186
      %s204 = sphi 0, %s204
      %s206 = sphi 0, %s204
      %s207 = sphi 0, %s206
      %s221 = sphi 0, %s207
      %s229 = sphi 0, %s231
      %s232 = sphi 0, %s229
      %s233 = sphi 0, %s232
      %s249 = sphi 0, %s233
      %s255 = sphi 0, %s257
      %s258 = sphi 0, %s255
      %s259 = sphi 0, %s258
      %s275 = sphi 0, %s259
    $region4: #{tpu_custom_call.1} parent=1 // loop_header_branch
      %28 = sbr.rel (%p26) target = $region8
    $region5: #{tpu_custom_call.1} parent=1 // loop_body
      %s30 = ssub.s32 %s25, 1
      %s31 = ssub.s32 %s25, 2
      %s38 = sadd.s32 1, %s33
      %p39 = scmp.ge.s32.totalorder %s38, 2
      %s40 = scalar_select %p39, 0, %s38
      %s41 = sadd.s32 1, %s32
      %s42 = scalar_select %p39, %s41, %s32
      %p43 = scmp.ge.s32.totalorder %s42, 1
      %s44 = scalar_select %p43, 0, %s42
      %s45 = ssub.s32 %s32, %s44
      %s46 = ssub.s32 %s33, %s40
      %s47 = sor.u32 %s45, %s46
      %p48 = scmp.eq.s32.totalorder %s47, 0
      %s50 = sadd.s32 %s49, 1
      %s51 = scalar_select %p48, %s49, %s50
      %p54 = pneg %p48
      %p55 = scmp.eq.s32.totalorder %s25, 1
      %p56 = por %p54, %p55
      %p57 = scmp.ne.s32.totalorder %s49, %s52
      %p58 = scmp.eq.s32.totalorder %s25, 0
      %p59 = por %p57, %p58
      %p60 = scmp.ne.s32.totalorder %s49, %s52
      %p61 = scmp.eq.s32.totalorder %s30, 1
      %p62 = por %p60, %p61
      %p63 = scmp.ne.s32.totalorder %s52, %s53
      %p64 = scmp.eq.s32.totalorder %s30, 0
      %p65 = por %p63, %p64
      %p66 = scmp.ne.s32.totalorder %s52, %s53
      %p67 = scmp.eq.s32.totalorder %s31, 1
      %p68 = por %p66, %p67
      %p70 = scmp.ne.s32.totalorder %s53, %s69
      %p71 = scmp.eq.s32.totalorder %s31, 0
      %p72 = por %p70, %p71
      %s73 = ssub.s32 %s32, %s44
      %p74 = scmp.eq.s32.totalorder %s73, 0
      %s76 = sadd.s32 %s75, 1
      %s77 = scalar_select %p74, %s75, %s76
      %p80 = pneg %p74
      %p81 = scmp.eq.s32.totalorder %s25, 1
      %p82 = por %p80, %p81
      %p83 = scmp.ne.s32.totalorder %s75, %s78
      %p84 = scmp.eq.s32.totalorder %s25, 0
      %p85 = por %p83, %p84
      %p86 = scmp.ne.s32.totalorder %s75, %s78
      %p87 = scmp.eq.s32.totalorder %s30, 1
      %p88 = por %p86, %p87
      %p89 = scmp.ne.s32.totalorder %s78, %s79
      %p90 = scmp.eq.s32.totalorder %s30, 0
      %p91 = por %p89, %p90
      %p92 = scmp.ne.s32.totalorder %s78, %s79
      %p93 = scmp.eq.s32.totalorder %s31, 1
      %p94 = por %p92, %p93
      %p96 = scmp.ne.s32.totalorder %s79, %s95
      %p97 = scmp.eq.s32.totalorder %s31, 0
      %p98 = por %p96, %p97
      %s100 = sadd.s32 %s99, 1
      %p103 = scmp.eq.s32.totalorder %s25, 1
      %p104 = scmp.ne.s32.totalorder %s99, %s101
      %p105 = scmp.eq.s32.totalorder %s25, 0
      %p106 = por %p104, %p105
      %p107 = scmp.ne.s32.totalorder %s99, %s101
      %p108 = scmp.eq.s32.totalorder %s30, 1
      %p109 = por %p107, %p108
      %p110 = scmp.ne.s32.totalorder %s101, %s102
      %p111 = scmp.eq.s32.totalorder %s30, 0
      %p112 = por %p110, %p111
      %p113 = scmp.ne.s32.totalorder %s101, %s102
      %p114 = scmp.eq.s32.totalorder %s31, 1
      %p115 = por %p113, %p114
      %p117 = scmp.ne.s32.totalorder %s102, %s116
      %p118 = scmp.eq.s32.totalorder %s31, 0
      %p119 = por %p117, %p118
      %s121 = sadd.s32 %s120, 1
      %p124 = scmp.eq.s32.totalorder %s25, 1
      %p125 = scmp.ne.s32.totalorder %s120, %s122
      %p126 = scmp.eq.s32.totalorder %s25, 0
      %p127 = por %p125, %p126
      %p128 = scmp.ne.s32.totalorder %s120, %s122
      %p129 = scmp.eq.s32.totalorder %s30, 1
      %p130 = por %p128, %p129
      %p131 = scmp.ne.s32.totalorder %s122, %s123
      %p132 = scmp.eq.s32.totalorder %s30, 0
      %p133 = por %p131, %p132
      %p134 = scmp.ne.s32.totalorder %s122, %s123
      %p135 = scmp.eq.s32.totalorder %s31, 1
      %p136 = por %p134, %p135
      %p138 = scmp.ne.s32.totalorder %s123, %s137
      %p139 = scmp.eq.s32.totalorder %s31, 0
      %p140 = por %p138, %p139
      %s142 = sadd.s32 %s141, 1
      %p145 = scmp.eq.s32.totalorder %s25, 1
      %p146 = scmp.ne.s32.totalorder %s141, %s143
      %p147 = scmp.eq.s32.totalorder %s25, 0
      %p148 = por %p146, %p147
      %p149 = scmp.ne.s32.totalorder %s141, %s143
      %p150 = scmp.eq.s32.totalorder %s30, 1
      %p151 = por %p149, %p150
      %p152 = scmp.ne.s32.totalorder %s143, %s144
      %p153 = scmp.eq.s32.totalorder %s30, 0
      %p154 = por %p152, %p153
      %p155 = scmp.ne.s32.totalorder %s143, %s144
      %p156 = scmp.eq.s32.totalorder %s31, 1
      %p157 = por %p155, %p156
      %p159 = scmp.ne.s32.totalorder %s144, %s158
      %p160 = scmp.eq.s32.totalorder %s31, 0
      %p161 = por %p159, %p160
      %s163 = sadd.s32 %s162, 1
      %p166 = scmp.eq.s32.totalorder %s25, 1
      %p167 = scmp.ne.s32.totalorder %s162, %s164
      %p168 = scmp.eq.s32.totalorder %s25, 0
      %p169 = por %p167, %p168
      %p170 = scmp.ne.s32.totalorder %s162, %s164
      %p171 = scmp.eq.s32.totalorder %s30, 1
      %p172 = por %p170, %p171
      %p173 = scmp.ne.s32.totalorder %s164, %s165
      %p174 = scmp.eq.s32.totalorder %s30, 0
      %p175 = por %p173, %p174
      %p176 = scmp.ne.s32.totalorder %s164, %s165
      %p177 = scmp.eq.s32.totalorder %s31, 1
      %p178 = por %p176, %p177
      %p180 = scmp.ne.s32.totalorder %s165, %s179
      %p181 = scmp.eq.s32.totalorder %s31, 0
      %p182 = por %p180, %p181
      %s184 = sadd.s32 %s183, 1
      %p187 = scmp.eq.s32.totalorder %s25, 1
      %p188 = scmp.ne.s32.totalorder %s183, %s185
      %p189 = scmp.eq.s32.totalorder %s25, 0
      %p190 = por %p188, %p189
      %p191 = scmp.ne.s32.totalorder %s183, %s185
      %p192 = scmp.eq.s32.totalorder %s30, 1
      %p193 = por %p191, %p192
      %p194 = scmp.ne.s32.totalorder %s185, %s186
      %p195 = scmp.eq.s32.totalorder %s30, 0
      %p196 = por %p194, %p195
      %p197 = scmp.ne.s32.totalorder %s185, %s186
      %p198 = scmp.eq.s32.totalorder %s31, 1
      %p199 = por %p197, %p198
      %p201 = scmp.ne.s32.totalorder %s186, %s200
      %p202 = scmp.eq.s32.totalorder %s31, 0
      %p203 = por %p201, %p202
      %s205 = sadd.s32 %s204, 1
      %p208 = scmp.eq.s32.totalorder %s25, 1
      %p209 = scmp.ne.s32.totalorder %s204, %s206
      %p210 = scmp.eq.s32.totalorder %s25, 0
      %p211 = por %p209, %p210
      %p212 = scmp.ne.s32.totalorder %s204, %s206
      %p213 = scmp.eq.s32.totalorder %s30, 1
      %p214 = por %p212, %p213
      %p215 = scmp.ne.s32.totalorder %s206, %s207
      %p216 = scmp.eq.s32.totalorder %s30, 0
      %p217 = por %p215, %p216
      %p218 = scmp.ne.s32.totalorder %s206, %s207
      %p219 = scmp.eq.s32.totalorder %s31, 1
      %p220 = por %p218, %p219
      %p222 = scmp.ne.s32.totalorder %s207, %s221
      %p223 = scmp.eq.s32.totalorder %s31, 0
      %p224 = por %p222, %p223
      %s225 = ssub.s32 %s32, %s44
      %s226 = ssub.s32 %s33, %s40
      %s227 = sor.u32 %s225, %s226
      %p228 = scmp.eq.s32.totalorder %s227, 0
      %s230 = sadd.s32 %s229, 1
      %s231 = scalar_select %p228, %s229, %s230
      %p234 = pneg %p228
      %p235 = scmp.eq.s32.totalorder %s25, 1
      %p236 = por %p234, %p235
      %p237 = scmp.ne.s32.totalorder %s229, %s232
      %p238 = scmp.eq.s32.totalorder %s25, 0
      %p239 = por %p237, %p238
      %p240 = scmp.ne.s32.totalorder %s229, %s232
      %p241 = scmp.eq.s32.totalorder %s30, 1
      %p242 = por %p240, %p241
      %p243 = scmp.ne.s32.totalorder %s232, %s233
      %p244 = scmp.eq.s32.totalorder %s30, 0
      %p245 = por %p243, %p244
      %p246 = scmp.ne.s32.totalorder %s232, %s233
      %p247 = scmp.eq.s32.totalorder %s31, 1
      %p248 = por %p246, %p247
      %p250 = scmp.ne.s32.totalorder %s233, %s249
      %p251 = scmp.eq.s32.totalorder %s31, 0
      %p252 = por %p250, %p251
      %s253 = ssub.s32 %s32, %s44
      %p254 = scmp.eq.s32.totalorder %s253, 0
      %s256 = sadd.s32 %s255, 1
      %s257 = scalar_select %p254, %s255, %s256
      %p260 = pneg %p254
      %p261 = scmp.eq.s32.totalorder %s25, 1
      %p262 = por %p260, %p261
      %p263 = scmp.ne.s32.totalorder %s255, %s258
      %p264 = scmp.eq.s32.totalorder %s25, 0
      %p265 = por %p263, %p264
      %p266 = scmp.ne.s32.totalorder %s255, %s258
      %p267 = scmp.eq.s32.totalorder %s30, 1
      %p268 = por %p266, %p267
      %p269 = scmp.ne.s32.totalorder %s258, %s259
      %p270 = scmp.eq.s32.totalorder %s30, 0
      %p271 = por %p269, %p270
      %p272 = scmp.ne.s32.totalorder %s258, %s259
      %p273 = scmp.eq.s32.totalorder %s31, 1
      %p274 = por %p272, %p273
      %p276 = scmp.ne.s32.totalorder %s259, %s275
      %p277 = scmp.eq.s32.totalorder %s31, 0
      %p278 = por %p276, %p277
      %p279 = scmp.le.s32.totalorder 1, %s25
      %p280 = scmp.lt.s32.totalorder %s25, 3
      %p281 = pnand %p279, %p280
      %p282 = pneg %p281
      // Predicated region
      $region9: #{tpu_custom_call.1} parent=5 // pred_check
        _
      $region10: #{tpu_custom_call.1} parent=5 // pred_check_branch
        %284 = sbr.rel (%p281) target = $region12
      $region11: #{tpu_custom_call.1} parent=5 // pred_region
        %s285 = ssub.s32 %s25, 1
        // Predicated region
        $region13: #{tpu_custom_call.1} parent=11 // pred_check
          %p286 = pneg %p91
        $region14: #{tpu_custom_call.1} parent=11 // pred_check_branch
          %288 = sbr.rel (%p286) target = $region16
        $region15: #{tpu_custom_call.1} parent=11 // pred_region
          %p289 = scmp.lt.s32.totalorder %s34, 0
          %s290 = scalar_select %p289, %s34, 0
          %s291 = smul.addr %s290, 8
          %s292 = scalar_lea.vmem %s1, %s291
        $region16: #{tpu_custom_call.1} parent=11 // pred_fallthru
          _
        // Predicated region
        $region17: #{tpu_custom_call.1} parent=11 // pred_check
          %p293 = pneg %p112
        $region18: #{tpu_custom_call.1} parent=11 // pred_check_branch
          %295 = sbr.rel (%p293) target = $region20
        $region19: #{tpu_custom_call.1} parent=11 // pred_region
          %s297 = ssub.s32 768, 768
          %298 = vsyncadd [#allocation7], %s297
          %s299 = sshll.u32 [#allocation6], 4
          %s300 = int_to_ptr.vmem [resolvable:$true] %s299
          %305 = dma.hbm_to_vmem [thread:$0]  %s2, 768, %s300, [#allocation7], 192, 192, 12
        $region20: #{tpu_custom_call.1} parent=11 // pred_fallthru
          _
        // Predicated region
        $region21: #{tpu_custom_call.1} parent=11 // pred_check
          %p306 = pneg %p133
        $region22: #{tpu_custom_call.1} parent=11 // pred_check_branch
          %308 = sbr.rel (%p306) target = $region24
        $region23: #{tpu_custom_call.1} parent=11 // pred_region
          %s310 = ssub.s32 3072, 3072
          %311 = vsyncadd [#allocation7], %s310
          %s312 = sshll.u32 [#allocation8], 4
          %s313 = int_to_ptr.vmem [resolvable:$true] %s312
          %318 = dma.hbm_to_vmem [thread:$0]  %s3, 3072, %s313, [#allocation7], 192, 192, 12
        $region24: #{tpu_custom_call.1} parent=11 // pred_fallthru
          _
        // Predicated region
        $region25: #{tpu_custom_call.1} parent=11 // pred_check
          %p319 = pneg %p154
        $region26: #{tpu_custom_call.1} parent=11 // pred_check_branch
          %321 = sbr.rel (%p319) target = $region28
        $region27: #{tpu_custom_call.1} parent=11 // pred_region
          _
        $region28: #{tpu_custom_call.1} parent=11 // pred_fallthru
          _
        // Predicated region
        $region29: #{tpu_custom_call.1} parent=11 // pred_check
          %p322 = pneg %p175
        $region30: #{tpu_custom_call.1} parent=11 // pred_check_branch
          %324 = sbr.rel (%p322) target = $region32
        $region31: #{tpu_custom_call.1} parent=11 // pred_region
          _
        $region32: #{tpu_custom_call.1} parent=11 // pred_fallthru
          _
        // Predicated region
        $region33: #{tpu_custom_call.1} parent=11 // pred_check
          %p325 = pneg %p196
        $region34: #{tpu_custom_call.1} parent=11 // pred_check_branch
          %327 = sbr.rel (%p325) target = $region36
        $region35: #{tpu_custom_call.1} parent=11 // pred_region
          %s329 = ssub.s32 2048, 2048
          %330 = vsyncadd [#allocation10], %s329
          %s331 = sshll.u32 [#allocation9], 4
          %s332 = int_to_ptr.vmem [resolvable:$true] %s331
          %337 = dma.hbm_to_vmem [thread:$0]  %s6, 2048, %s332, [#allocation10], 128, 128, 8
        $region36: #{tpu_custom_call.1} parent=11 // pred_fallthru
          _
        // Predicated region
        $region37: #{tpu_custom_call.1} parent=11 // pred_check
          %p338 = pneg %p217
        $region38: #{tpu_custom_call.1} parent=11 // pred_check_branch
          %340 = sbr.rel (%p338) target = $region40
        $region39: #{tpu_custom_call.1} parent=11 // pred_region
          _
        $region40: #{tpu_custom_call.1} parent=11 // pred_fallthru
          _
      $region12: #{tpu_custom_call.1} parent=5 // pred_fallthru
        _
      %p341 = scmp.lt.s32.totalorder %s25, 2
      // Predicated region
      $region41: #{tpu_custom_call.1} parent=5 // pred_check
        %p342 = pneg %p341
      $region42: #{tpu_custom_call.1} parent=5 // pred_check_branch
        %344 = sbr.rel (%p342) target = $region44
      $region43: #{tpu_custom_call.1} parent=5 // pred_region
        // Predicated region
        $region45: #{tpu_custom_call.1} parent=43 // pred_check
          %p345 = pneg %p59
        $region46: #{tpu_custom_call.1} parent=43 // pred_check_branch
          %347 = sbr.rel (%p345) target = $region48
        $region47: #{tpu_custom_call.1} parent=43 // pred_region
          %s348 = sand.u32 %s49, 1
          %s349 = scalar_lea.sflag [#allocation4], %s348
          %s350 = sand.u32 %s49, 1
          %s351 = smul.addr %s350, 32
          %s352 = scalar_lea.vmem [#allocation3], %s351
          %s353 = smul.u32 8, %s32
          %s355 = ssub.s32 512, 512
          %356 = vsyncadd %s349, %s355
          %s357 = smul.addr %s353, 2
          %s358 = sadd.s32 %s33, %s357
          %s359 = smul.addr %s358, 64
          %s360 = scalar_lea.hbm %s0, %s359
          %s361 = sshll.u32 %s352, 4
          %s362 = int_to_ptr.vmem [resolvable:$true] %s361
          %367 = dma.hbm_to_vmem [thread:$0]  %s360, 512, %s362, %s349, 128, 64, 4
        $region48: #{tpu_custom_call.1} parent=43 // pred_fallthru
          _
      $region44: #{tpu_custom_call.1} parent=5 // pred_fallthru
        _
      %p368 = scmp.le.s32.totalorder 1, %s25
      %p369 = scmp.lt.s32.totalorder %s25, 3
      %p370 = pnand %p368, %p369
      %p371 = pneg %p370
      // Predicated region
      $region49: #{tpu_custom_call.1} parent=5 // pred_check
        _
      $region50: #{tpu_custom_call.1} parent=5 // pred_check_branch
        %373 = sbr.rel (%p370) target = $region52
      $region51: #{tpu_custom_call.1} parent=5 // pred_region
        %s374 = ssub.s32 %s25, 1
        %s375 = sand.u32 %s52, 1
        %s376 = scalar_lea.sflag [#allocation4], %s375
        %s377 = sand.u32 %s52, 1
        %s378 = smul.addr %s377, 32
        %s379 = scalar_lea.vmem [#allocation3], %s378
        // Predicated region
        $region53: #{tpu_custom_call.1} parent=51 // pred_check
          %p380 = pneg %p65
        $region54: #{tpu_custom_call.1} parent=51 // pred_check_branch
          %382 = sbr.rel (%p380) target = $region56
        $region55: #{tpu_custom_call.1} parent=51 // pred_region
          %383 = dma.done %s376, 512
        $region56: #{tpu_custom_call.1} parent=51 // pred_fallthru
          _
        // Predicated region
        $region57: #{tpu_custom_call.1} parent=51 // pred_check
          %p384 = pneg %p112
        $region58: #{tpu_custom_call.1} parent=51 // pred_check_branch
          %386 = sbr.rel (%p384) target = $region60
        $region59: #{tpu_custom_call.1} parent=51 // pred_region
          %387 = dma.done [#allocation7], 768
        $region60: #{tpu_custom_call.1} parent=51 // pred_fallthru
          _
        // Predicated region
        $region61: #{tpu_custom_call.1} parent=51 // pred_check
          %p388 = pneg %p133
        $region62: #{tpu_custom_call.1} parent=51 // pred_check_branch
          %390 = sbr.rel (%p388) target = $region64
        $region63: #{tpu_custom_call.1} parent=51 // pred_region
          %391 = dma.done [#allocation7], 3072
        $region64: #{tpu_custom_call.1} parent=51 // pred_fallthru
          _
        // Predicated region
        $region65: #{tpu_custom_call.1} parent=51 // pred_check
          %p392 = pneg %p196
        $region66: #{tpu_custom_call.1} parent=51 // pred_check_branch
          %394 = sbr.rel (%p392) target = $region68
        $region67: #{tpu_custom_call.1} parent=51 // pred_region
          %395 = dma.done [#allocation10], 2048
        $region68: #{tpu_custom_call.1} parent=51 // pred_fallthru
          _
        %s396 = sand.u32 %s52, 1
        %s397 = scalar_lea.sflag [#allocation4], %s396
        %s398 = sand.u32 %s52, 1
        %s399 = smul.addr %s398, 32
        %s400 = scalar_lea.vmem [#allocation3], %s399
        %p401 = pneg %p65
        %p402 = pneg %p62
        %p403 = scmp.lt.s32.totalorder %s34, 0
        %s404 = scalar_select %p403, %s34, 0
        %s405 = smul.addr %s404, 8
        %s406 = scalar_lea.vmem %s1, %s405
        %p407 = pneg %p91
        %p408 = pneg %p88
        %p409 = pneg %p112
        %p410 = pneg %p109
        %p411 = pneg %p133
        %p412 = pneg %p130
        %p413 = pneg %p154
        %p414 = pneg %p151
        %p415 = pneg %p175
        %p416 = pneg %p172
        %p417 = pneg %p196
        %p418 = pneg %p193
        %p419 = pneg %p217
        %p420 = pneg %p214
        %p421 = pneg %p245
        %p422 = pneg %p242
        %s423 = sand.u32 %s232, 1
        %s424 = scalar_lea.sflag [#allocation5], %s423
        %s425 = sand.u32 %s232, 1
        %s426 = smul.addr %s425, 64
        %s427 = scalar_lea.vmem [#allocation11], %s426
        %p428 = pneg %p271
        %p429 = pneg %p268
        %s430 = smul.u32 8, %s34
        %p431 = scmp.lt.s32.totalorder %s34, 0
        %s432 = scalar_select %p431, %s34, 0
        %s433 = smul.addr %s432, 8
        %s434 = scalar_lea.vmem %s1, %s433
        %s435 = smul.u32 8, %s34
        %p437 = scmp.eq.s32.totalorder %s35, 0
        // Predicated region
        $region69: #{tpu_custom_call.1} parent=51 // pred_check
          %p438 = pneg %p437
        $region70: #{tpu_custom_call.1} parent=51 // pred_check_branch
          %440 = sbr.rel (%p438) target = $region72
        $region71: #{tpu_custom_call.1} parent=51 // pred_region
          %441 = vst [vmem:[#allocation2] sm:$0xff] 0.0
        $region72: #{tpu_custom_call.1} parent=51 // pred_fallthru
          _
        %v442 = vld [vmem:[%s434] sm:$0xff]
        %s443 = smul.u32 %s35, 8
        %v444 = vld [vmem:[%s379] sm:$0xf]
        %v445 = vld [vmem:[%s379 + $0x4] sm:$0xf]
        %v446 = vld [vmem:[%s379 + $0x8] sm:$0xf]
        %v447 = vld [vmem:[%s379 + $0xc] sm:$0xf]
        %v448 = vld [vmem:[%s379 + $0x10] sm:$0xf]
        %v449 = vld [vmem:[%s379 + $0x14] sm:$0xf]
        %v450 = vld [vmem:[%s379 + $0x18] sm:$0xf]
        %v451 = vld [vmem:[%s379 + $0x1c] sm:$0xf]
        %v452 = vld [vmem:[#allocation6] sm:$0xff]
        %v453 = vld [vmem:[#allocation6 + $0x8] sm:$0xf]
        %v454 = vld [vmem:[#allocation6 + $0xc] sm:$0xff]
        %v455 = vld [vmem:[#allocation6 + $0x14] sm:$0xf]
        %v456 = vld [vmem:[#allocation6 + $0x18] sm:$0xff]
        %v457 = vld [vmem:[#allocation6 + $0x20] sm:$0xf]
        %v458 = vld [vmem:[#allocation6 + $0x24] sm:$0xff]
        %v459 = vld [vmem:[#allocation6 + $0x2c] sm:$0xf]
        %v460 = vld [vmem:[%s4] sm:$0x7]
        %v462 = vlaneseq
        %v463 = vshrl.u32 %v462, 7
        %v464 = vsub.s32 0, %v463
        %v465 = vrot.slane %v460, %v464
        %v466 = vlaneseq
        %v467 = vshrl.u32 %v466, 7
        %v468 = vsub.s32 1, %v467
        %v469 = vrot.slane %v460, %v468
        %v470 = vlaneseq
        %v471 = vshrl.u32 %v470, 7
        %v472 = vsub.s32 2, %v471
        %v473 = vrot.slane %v460, %v472
        %v485 = vunpack.c.l.b16 %v444
        %v486 = vunpack.c.l.b16 %v445
        %v487 = vunpack.c.l.b16 %v446
        %v488 = vunpack.c.l.b16 %v447
        %v489 = vunpack.c.l.b16 %v448
        %v490 = vunpack.c.l.b16 %v449
        %v491 = vunpack.c.l.b16 %v450
        %v492 = vunpack.c.l.b16 %v451
        %v493 = vpack.c.b16 %v486, %v485
        %v494 = vpack.c.b16 %v488, %v487
        %v495 = vpack.c.b16 %v490, %v489
        %v496 = vpack.c.b16 %v492, %v491
        %v505 = vunpack.c.l.b16 %v452
        %v506 = vunpack.c.h.b16 %v452
        %v507 = vunpack.c.l.b16 %v453
        %v508 = vunpack.c.l.b16 %v454
        %v509 = vunpack.c.h.b16 %v454
        %v510 = vunpack.c.l.b16 %v455
        %v511 = vunpack.c.l.b16 %v456
        %v512 = vunpack.c.h.b16 %v456
        %v513 = vunpack.c.l.b16 %v457
        %v514 = vunpack.c.l.b16 %v458
        %v515 = vunpack.c.h.b16 %v458
        %v516 = vunpack.c.l.b16 %v459
        %v517 = vpack.c.b16 %v508, %v505
        %v518 = vpack.c.b16 %v509, %v506
        %v519 = vpack.c.b16 %v510, %v507
        %v520 = vpack.c.b16 %v514, %v511
        %v521 = vpack.c.b16 %v515, %v512
        %v522 = vpack.c.b16 %v516, %v513
        %vm529 = vcmask 261120
        %v531 = vsel %vm529, %v493, 0
        %v534 = vsel %vm529, %v494, 0
        %v537 = vsel %vm529, %v495, 0
        %v540 = vsel %vm529, %v496, 0
        %542 = vmatprep.subr.bf16.mxu0 %v518
        %543 = vmatpush1.bf16.msra.mxu0 %v517
        %544 = vmatprep.subr.bf16.mxu0 %v521
        %545 = vmatpush1.bf16.msra.mxu0 %v520
        %546 = vmatprep.subr.bf16.mxu0 0
        %547 = vmatpush1.bf16.msra.mxu0 0
        %548 = vmatprep.subr.bf16.mxu0 0
        %549 = vmatpush1.bf16.msra.mxu0 0
        %550 = vmatprep.subr.bf16.mxu0 0
        %551 = vmatpush1.bf16.msra.mxu0 0
        %552 = vmatprep.subr.bf16.mxu0 0
        %553 = vmatpush1.bf16.msra.mxu0 0
        %554 = vmatprep.subr.bf16.mxu0 0
        %555 = vmatpush1.bf16.msra.mxu0 0
        %556 = vmatprep.subr.bf16.mxu0 0
        %557 = vmatpush1.bf16.msra.mxu0 0
        %558 = vmatprep.subr.bf16.mxu0 0
        %559 = vmatpush1.bf16.msra.mxu0 0
        %560 = vmatprep.subr.bf16.mxu0 0
        %561 = vmatpush1.bf16.msra.mxu0 0
        %562 = vmatprep.subr.bf16.mxu0 0
        %563 = vmatpush1.bf16.msra.mxu0 0
        %564 = vmatprep.subr.bf16.mxu0 0
        %565 = vmatpush1.bf16.msra.mxu0 0
        %566 = vmatprep.subr.bf16.mxu0 0
        %567 = vmatpush1.bf16.msra.mxu0 0
        %568 = vmatprep.subr.bf16.mxu0 0
        %569 = vmatpush1.bf16.msra.mxu0 0
        %570 = vmatprep.subr.bf16.mxu0 0
        %571 = vmatpush1.bf16.msra.mxu0 0
        %572 = vmatprep.subr.bf16.mxu0 0
        %573 = vmatpush1.bf16.msra.mxu0 0
        %574 = vmatprep.mubr.bf16.mxu0 0
        %575 = vmatmul.mubr.bf16.gmra.mrb[0].mxu0 %v531
        %v576 = vpop.f32.mrb[0].mxu0
        %v577 = vadd.f32 %v465, %v576
        %v578 = vpop.f32.mrb[0].mxu0
        %v579 = vadd.f32 %v469, %v578
        %v580 = vpop.f32.mrb[0].mxu0
        %v581 = vadd.f32 %v465, %v580
        %v582 = vpop.f32.mrb[0].mxu0
        %v583 = vadd.f32 %v469, %v582
        %584 = vmatprep.mubr.bf16.mxu0 0
        %585 = vmatmul.mubr.bf16.gmra.mrb[0].mxu0 %v534
        %v586 = vpop.f32.mrb[0].mxu0
        %v587 = vadd.f32 %v465, %v586
        %v588 = vpop.f32.mrb[0].mxu0
        %v589 = vadd.f32 %v469, %v588
        %v590 = vpop.f32.mrb[0].mxu0
        %v591 = vadd.f32 %v465, %v590
        %v592 = vpop.f32.mrb[0].mxu0
        %v593 = vadd.f32 %v469, %v592
        %594 = vmatprep.mubr.bf16.mxu0 0
        %595 = vmatmul.mubr.bf16.gmra.mrb[0].mxu0 %v537
        %v596 = vpop.f32.mrb[0].mxu0
        %v597 = vadd.f32 %v465, %v596
        %v598 = vpop.f32.mrb[0].mxu0
        %v599 = vadd.f32 %v469, %v598
        %v600 = vpop.f32.mrb[0].mxu0
        %v601 = vadd.f32 %v465, %v600
        %v602 = vpop.f32.mrb[0].mxu0
        %v603 = vadd.f32 %v469, %v602
        %604 = vmatprep.mubr.bf16.mxu0 0
        %605 = vmatmul.mubr.bf16.gmra.mrb[0].mxu0 %v540
        %v606 = vpop.f32.mrb[0].mxu0
        %v607 = vadd.f32 %v465, %v606
        %v608 = vpop.f32.mrb[0].mxu0
        %v609 = vadd.f32 %v469, %v608
        %v610 = vpop.f32.mrb[0].mxu0
        %v611 = vadd.f32 %v465, %v610
        %v612 = vpop.f32.mrb[0].mxu0
        %v613 = vadd.f32 %v469, %v612
        %614 = vdwg.mxu0
        %615 = vmatprep.subr.bf16.mxu0 0
        %616 = vmatpush1.bf16.msra.mxu0 %v519
        %617 = vmatprep.subr.bf16.mxu0 0
        %618 = vmatpush1.bf16.msra.mxu0 %v522
        %619 = vmatprep.subr.bf16.mxu0 0
        %620 = vmatpush1.bf16.msra.mxu0 0
        %621 = vmatprep.subr.bf16.mxu0 0
        %622 = vmatpush1.bf16.msra.mxu0 0
        %623 = vmatprep.subr.bf16.mxu0 0
        %624 = vmatpush1.bf16.msra.mxu0 0
        %625 = vmatprep.subr.bf16.mxu0 0
        %626 = vmatpush1.bf16.msra.mxu0 0
        %627 = vmatprep.subr.bf16.mxu0 0
        %628 = vmatpush1.bf16.msra.mxu0 0
        %629 = vmatprep.subr.bf16.mxu0 0
        %630 = vmatpush1.bf16.msra.mxu0 0
        %631 = vmatprep.subr.bf16.mxu0 0
        %632 = vmatpush1.bf16.msra.mxu0 0
        %633 = vmatprep.subr.bf16.mxu0 0
        %634 = vmatpush1.bf16.msra.mxu0 0
        %635 = vmatprep.subr.bf16.mxu0 0
        %636 = vmatpush1.bf16.msra.mxu0 0
        %637 = vmatprep.subr.bf16.mxu0 0
        %638 = vmatpush1.bf16.msra.mxu0 0
        %639 = vmatprep.subr.bf16.mxu0 0
        %640 = vmatpush1.bf16.msra.mxu0 0
        %641 = vmatprep.subr.bf16.mxu0 0
        %642 = vmatpush1.bf16.msra.mxu0 0
        %643 = vmatprep.subr.bf16.mxu0 0
        %644 = vmatpush1.bf16.msra.mxu0 0
        %645 = vmatprep.subr.bf16.mxu0 0
        %646 = vmatpush1.bf16.msra.mxu0 0
        %647 = vmatprep.mubr.bf16.mxu0 0
        %648 = vmatmul.mubr.bf16.gmra.mrb[0].mxu0 %v531
        %v649 = vpop.f32.mrb[0].mxu0
        %v650 = vadd.f32 %v473, %v649
        %v651 = vpop.f32.mrb[0].mxu0
        %v652 = vpop.f32.mrb[0].mxu0
        %v653 = vadd.f32 %v473, %v652
        %v654 = vpop.f32.mrb[0].mxu0
        %655 = vmatprep.mubr.bf16.mxu0 0
        %656 = vmatmul.mubr.bf16.gmra.mrb[0].mxu0 %v534
        %v657 = vpop.f32.mrb[0].mxu0
        %v658 = vadd.f32 %v473, %v657
        %v659 = vpop.f32.mrb[0].mxu0
        %v660 = vpop.f32.mrb[0].mxu0
        %v661 = vadd.f32 %v473, %v660
        %v662 = vpop.f32.mrb[0].mxu0
        %663 = vmatprep.mubr.bf16.mxu0 0
        %664 = vmatmul.mubr.bf16.gmra.mrb[0].mxu0 %v537
        %v665 = vpop.f32.mrb[0].mxu0
        %v666 = vadd.f32 %v473, %v665
        %v667 = vpop.f32.mrb[0].mxu0
        %v668 = vpop.f32.mrb[0].mxu0
        %v669 = vadd.f32 %v473, %v668
        %v670 = vpop.f32.mrb[0].mxu0
        %671 = vmatprep.mubr.bf16.mxu0 0
        %672 = vmatmul.mubr.bf16.gmra.mrb[0].mxu0 %v540
        %v673 = vpop.f32.mrb[0].mxu0
        %v674 = vadd.f32 %v473, %v673
        %v675 = vpop.f32.mrb[0].mxu0
        %v676 = vpop.f32.mrb[0].mxu0
        %v677 = vadd.f32 %v473, %v676
        %v678 = vpop.f32.mrb[0].mxu0
        %679 = vdwg.mxu0
        %v680 = vld [vmem:[#allocation8] sm:$0xff]
        %v681 = vld [vmem:[#allocation8 + $0x8] sm:$0xf]
        %v682 = vld [vmem:[#allocation8 + $0xc] sm:$0xff]
        %v683 = vld [vmem:[#allocation8 + $0x14] sm:$0xf]
        %v684 = vld [vmem:[#allocation8 + $0x18] sm:$0xff]
        %v685 = vld [vmem:[#allocation8 + $0x20] sm:$0xf]
        %v686 = vld [vmem:[#allocation8 + $0x24] sm:$0xff]
        %v687 = vld [vmem:[#allocation8 + $0x2c] sm:$0xf]
        %v688 = vld [vmem:[#allocation8 + $0x30] sm:$0xff]
        %v689 = vld [vmem:[#allocation8 + $0x38] sm:$0xf]
        %v690 = vld [vmem:[#allocation8 + $0x3c] sm:$0xff]
        %v691 = vld [vmem:[#allocation8 + $0x44] sm:$0xf]
        %v692 = vld [vmem:[#allocation8 + $0x48] sm:$0xff]
        %v693 = vld [vmem:[#allocation8 + $0x50] sm:$0xf]
        %v694 = vld [vmem:[#allocation8 + $0x54] sm:$0xff]
        %v695 = vld [vmem:[#allocation8 + $0x5c] sm:$0xf]
        %v696 = vld [vmem:[#allocation8 + $0x60] sm:$0xff]
        %v697 = vld [vmem:[#allocation8 + $0x68] sm:$0xf]
        %v698 = vld [vmem:[#allocation8 + $0x6c] sm:$0xff]
        %v699 = vld [vmem:[#allocation8 + $0x74] sm:$0xf]
        %v700 = vld [vmem:[#allocation8 + $0x78] sm:$0xff]
        %v701 = vld [vmem:[#allocation8 + $0x80] sm:$0xf]
        %v702 = vld [vmem:[#allocation8 + $0x84] sm:$0xff]
        %v703 = vld [vmem:[#allocation8 + $0x8c] sm:$0xf]
        %v704 = vld [vmem:[#allocation8 + $0x90] sm:$0xff]
        %v705 = vld [vmem:[#allocation8 + $0x98] sm:$0xf]
        %v706 = vld [vmem:[#allocation8 + $0x9c] sm:$0xff]
        %v707 = vld [vmem:[#allocation8 + $0xa4] sm:$0xf]
        %v708 = vld [vmem:[#allocation8 + $0xa8] sm:$0xff]
        %v709 = vld [vmem:[#allocation8 + $0xb0] sm:$0xf]
        %v710 = vld [vmem:[#allocation8 + $0xb4] sm:$0xff]
        %v711 = vld [vmem:[#allocation8 + $0xbc] sm:$0xf]
        %v712 = vld [vmem:[%s5] sm:$0x1]
        %v714 = vlaneseq
        %v715 = vshrl.u32 %v714, 7
        %v716 = vsub.s32 0, %v715
        %v717 = vrot.slane %v712, %v716
        %v719 = vld [vmem:[#allocation2] sm:$0xff]
        %v720 = vpack.c.bf16 %v719, %v719
        %v753 = vunpack.c.l.b16 %v680
        %v754 = vunpack.c.h.b16 %v680
        %v755 = vunpack.c.l.b16 %v681
        %v756 = vunpack.c.l.b16 %v682
        %v757 = vunpack.c.h.b16 %v682
        %v758 = vunpack.c.l.b16 %v683
        %v759 = vunpack.c.l.b16 %v684
        %v760 = vunpack.c.h.b16 %v684
        %v761 = vunpack.c.l.b16 %v685
        %v762 = vunpack.c.l.b16 %v686
        %v763 = vunpack.c.h.b16 %v686
        %v764 = vunpack.c.l.b16 %v687
        %v765 = vunpack.c.l.b16 %v688
        %v766 = vunpack.c.h.b16 %v688
        %v767 = vunpack.c.l.b16 %v689
        %v768 = vunpack.c.l.b16 %v690
        %v769 = vunpack.c.h.b16 %v690
        %v770 = vunpack.c.l.b16 %v691
        %v771 = vunpack.c.l.b16 %v692
        %v772 = vunpack.c.h.b16 %v692
        %v773 = vunpack.c.l.b16 %v693
        %v774 = vunpack.c.l.b16 %v694
        %v775 = vunpack.c.h.b16 %v694
        %v776 = vunpack.c.l.b16 %v695
        %v777 = vunpack.c.l.b16 %v696
        %v778 = vunpack.c.h.b16 %v696
        %v779 = vunpack.c.l.b16 %v697
        %v780 = vunpack.c.l.b16 %v698
        %v781 = vunpack.c.h.b16 %v698
        %v782 = vunpack.c.l.b16 %v699
        %v783 = vunpack.c.l.b16 %v700
        %v784 = vunpack.c.h.b16 %v700
        %v785 = vunpack.c.l.b16 %v701
        %v786 = vunpack.c.l.b16 %v702
        %v787 = vunpack.c.h.b16 %v702
        %v788 = vunpack.c.l.b16 %v703
        %v789 = vunpack.c.l.b16 %v704
        %v790 = vunpack.c.h.b16 %v704
        %v791 = vunpack.c.l.b16 %v705
        %v792 = vunpack.c.l.b16 %v706
        %v793 = vunpack.c.h.b16 %v706
        %v794 = vunpack.c.l.b16 %v707
        %v795 = vunpack.c.l.b16 %v708
        %v796 = vunpack.c.h.b16 %v708
        %v797 = vunpack.c.l.b16 %v709
        %v798 = vunpack.c.l.b16 %v710
        %v799 = vunpack.c.h.b16 %v710
        %v800 = vunpack.c.l.b16 %v711
        %v801 = vpack.c.b16 %v756, %v753
        %v802 = vpack.c.b16 %v757, %v754
        %v803 = vpack.c.b16 %v758, %v755
        %v804 = vpack.c.b16 %v762, %v759
        %v805 = vpack.c.b16 %v763, %v760
        %v806 = vpack.c.b16 %v764, %v761
        %v807 = vpack.c.b16 %v768, %v765
        %v808 = vpack.c.b16 %v769, %v766
        %v809 = vpack.c.b16 %v770, %v767
        %v810 = vpack.c.b16 %v774, %v771
        %v811 = vpack.c.b16 %v775, %v772
        %v812 = vpack.c.b16 %v776, %v773
        %v813 = vpack.c.b16 %v780, %v777
        %v814 = vpack.c.b16 %v781, %v778
        %v815 = vpack.c.b16 %v782, %v779
        %v816 = vpack.c.b16 %v786, %v783
        %v817 = vpack.c.b16 %v787, %v784
        %v818 = vpack.c.b16 %v788, %v785
        %v819 = vpack.c.b16 %v792, %v789
        %v820 = vpack.c.b16 %v793, %v790
        %v821 = vpack.c.b16 %v794, %v791
        %v822 = vpack.c.b16 %v798, %v795
        %v823 = vpack.c.b16 %v799, %v796
        %v824 = vpack.c.b16 %v800, %v797
        %849 = vmatprep.subr.bf16.mxu0 %v802
        %850 = vmatpush1.bf16.msra.mxu0 %v801
        %851 = vmatprep.subr.bf16.mxu0 %v805
        %852 = vmatpush1.bf16.msra.mxu0 %v804
        %853 = vmatprep.subr.bf16.mxu0 %v808
        %854 = vmatpush1.bf16.msra.mxu0 %v807
        %855 = vmatprep.subr.bf16.mxu0 %v811
        %856 = vmatpush1.bf16.msra.mxu0 %v810
        %857 = vmatprep.subr.bf16.mxu0 %v814
        %858 = vmatpush1.bf16.msra.mxu0 %v813
        %859 = vmatprep.subr.bf16.mxu0 %v817
        %860 = vmatpush1.bf16.msra.mxu0 %v816
        %861 = vmatprep.subr.bf16.mxu0 %v820
        %862 = vmatpush1.bf16.msra.mxu0 %v819
        %863 = vmatprep.subr.bf16.mxu0 %v823
        %864 = vmatpush1.bf16.msra.mxu0 %v822
        %865 = vmatprep.subr.bf16.mxu0 0
        %866 = vmatpush1.bf16.msra.mxu0 0
        %867 = vmatprep.subr.bf16.mxu0 0
        %868 = vmatpush1.bf16.msra.mxu0 0
        %869 = vmatprep.subr.bf16.mxu0 0
        %870 = vmatpush1.bf16.msra.mxu0 0
        %871 = vmatprep.subr.bf16.mxu0 0
        %872 = vmatpush1.bf16.msra.mxu0 0
        %873 = vmatprep.subr.bf16.mxu0 0
        %874 = vmatpush1.bf16.msra.mxu0 0
        %875 = vmatprep.subr.bf16.mxu0 0
        %876 = vmatpush1.bf16.msra.mxu0 0
        %877 = vmatprep.subr.bf16.mxu0 0
        %878 = vmatpush1.bf16.msra.mxu0 0
        %879 = vmatprep.subr.bf16.mxu0 0
        %880 = vmatpush1.bf16.msra.mxu0 0
        %881 = vmatprep.mubr.bf16.mxu0 0
        %882 = vmatmul.mubr.bf16.gmra.mrb[0].mxu0 %v720
        %v883 = vpop.f32.mrb[0].mxu0
        %v884 = vadd.f32 0.0, %v883
        %v885 = vpop.f32.mrb[0].mxu0
        %v886 = vadd.f32 0.0, %v885
        %v887 = vpop.f32.mrb[0].mxu0
        %v888 = vpop.f32.mrb[0].mxu0
        %889 = vdwg.mxu0
        %890 = vmatprep.subr.bf16.mxu0 0
        %891 = vmatpush1.bf16.msra.mxu0 %v803
        %892 = vmatprep.subr.bf16.mxu0 0
        %893 = vmatpush1.bf16.msra.mxu0 %v806
        %894 = vmatprep.subr.bf16.mxu0 0
        %895 = vmatpush1.bf16.msra.mxu0 %v809
        %896 = vmatprep.subr.bf16.mxu0 0
        %897 = vmatpush1.bf16.msra.mxu0 %v812
        %898 = vmatprep.subr.bf16.mxu0 0
        %899 = vmatpush1.bf16.msra.mxu0 %v815
        %900 = vmatprep.subr.bf16.mxu0 0
        %901 = vmatpush1.bf16.msra.mxu0 %v818
        %902 = vmatprep.subr.bf16.mxu0 0
        %903 = vmatpush1.bf16.msra.mxu0 %v821
        %904 = vmatprep.subr.bf16.mxu0 0
        %905 = vmatpush1.bf16.msra.mxu0 %v824
        %906 = vmatprep.subr.bf16.mxu0 0
        %907 = vmatpush1.bf16.msra.mxu0 0
        %908 = vmatprep.subr.bf16.mxu0 0
        %909 = vmatpush1.bf16.msra.mxu0 0
        %910 = vmatprep.subr.bf16.mxu0 0
        %911 = vmatpush1.bf16.msra.mxu0 0
        %912 = vmatprep.subr.bf16.mxu0 0
        %913 = vmatpush1.bf16.msra.mxu0 0
        %914 = vmatprep.subr.bf16.mxu0 0
        %915 = vmatpush1.bf16.msra.mxu0 0
        %916 = vmatprep.subr.bf16.mxu0 0
        %917 = vmatpush1.bf16.msra.mxu0 0
        %918 = vmatprep.subr.bf16.mxu0 0
        %919 = vmatpush1.bf16.msra.mxu0 0
        %920 = vmatprep.subr.bf16.mxu0 0
        %921 = vmatpush1.bf16.msra.mxu0 0
        %922 = vmatprep.mubr.bf16.mxu0 0
        %923 = vmatmul.mubr.bf16.gmra.mrb[0].mxu0 %v720
        %v924 = vpop.f32.mrb[0].mxu0
        %v925 = vadd.f32 0.0, %v924
        %v926 = vpop.f32.mrb[0].mxu0
        %v927 = vpop.f32.mrb[0].mxu0
        %v928 = vpop.f32.mrb[0].mxu0
        %929 = vdwg.mxu0
        %v931 = vrot.slane %v884, 1
        %v932 = vrot.slane %v884, 2
        %v933 = vrot.slane %v884, 3
        %v934 = vrot.slane %v884, 4
        %v935 = vrot.slane %v884, 5
        %v936 = vrot.slane %v884, 6
        %v937 = vrot.slane %v884, 7
        %v946 = vadd.f32 %v577, %v884
        %v947 = vadd.f32 %v581, %v931
        %v948 = vadd.f32 %v587, %v932
        %v949 = vadd.f32 %v591, %v933
        %v950 = vadd.f32 %v597, %v934
        %v951 = vadd.f32 %v601, %v935
        %v952 = vadd.f32 %v607, %v936
        %v953 = vadd.f32 %v611, %v937
        %v954 = vxor.u32 %v946, 2147483648
        %v955 = vxor.u32 %v947, 2147483648
        %v956 = vxor.u32 %v948, 2147483648
        %v957 = vxor.u32 %v949, 2147483648
        %v958 = vxor.u32 %v950, 2147483648
        %v959 = vxor.u32 %v951, 2147483648
        %v960 = vxor.u32 %v952, 2147483648
        %v961 = vxor.u32 %v953, 2147483648
        %v962 = vmul.f32 %v954, 1.442695
        %v963 = vpow.pop %v962
        %v964 = vmul.f32 %v955, 1.442695
        %v965 = vpow.pop %v964
        %v966 = vmul.f32 %v956, 1.442695
        %v967 = vpow.pop %v966
        %v968 = vmul.f32 %v957, 1.442695
        %v969 = vpow.pop %v968
        %v970 = vmul.f32 %v958, 1.442695
        %v971 = vpow.pop %v970
        %v972 = vmul.f32 %v959, 1.442695
        %v973 = vpow.pop %v972
        %v974 = vmul.f32 %v960, 1.442695
        %v975 = vpow.pop %v974
        %v976 = vmul.f32 %v961, 1.442695
        %v977 = vpow.pop %v976
        %v978 = vadd.f32 %v963, 1.0
        %v979 = vadd.f32 %v965, 1.0
        %v980 = vadd.f32 %v967, 1.0
        %v981 = vadd.f32 %v969, 1.0
        %v982 = vadd.f32 %v971, 1.0
        %v983 = vadd.f32 %v973, 1.0
        %v984 = vadd.f32 %v975, 1.0
        %v985 = vadd.f32 %v977, 1.0
        %v986 = vrcp.pop %v978
        %v987 = vmul.f32 1.0, %v986
        %v988 = vrcp.pop %v979
        %v989 = vmul.f32 1.0, %v988
        %v990 = vrcp.pop %v980
        %v991 = vmul.f32 1.0, %v990
        %v992 = vrcp.pop %v981
        %v993 = vmul.f32 1.0, %v992
        %v994 = vrcp.pop %v982
        %v995 = vmul.f32 1.0, %v994
        %v996 = vrcp.pop %v983
        %v997 = vmul.f32 1.0, %v996
        %v998 = vrcp.pop %v984
        %v999 = vmul.f32 1.0, %v998
        %v1000 = vrcp.pop %v985
        %v1001 = vmul.f32 1.0, %v1000
        %v1003 = vrot.slane %v886, 1
        %v1004 = vrot.slane %v886, 2
        %v1005 = vrot.slane %v886, 3
        %v1006 = vrot.slane %v886, 4
        %v1007 = vrot.slane %v886, 5
        %v1008 = vrot.slane %v886, 6
        %v1009 = vrot.slane %v886, 7
        %v1018 = vadd.f32 %v579, %v886
        %v1019 = vadd.f32 %v583, %v1003
        %v1020 = vadd.f32 %v589, %v1004
        %v1021 = vadd.f32 %v593, %v1005
        %v1022 = vadd.f32 %v599, %v1006
        %v1023 = vadd.f32 %v603, %v1007
        %v1024 = vadd.f32 %v609, %v1008
        %v1025 = vadd.f32 %v613, %v1009
        %v1026 = vxor.u32 %v1018, 2147483648
        %v1027 = vxor.u32 %v1019, 2147483648
        %v1028 = vxor.u32 %v1020, 2147483648
        %v1029 = vxor.u32 %v1021, 2147483648
        %v1030 = vxor.u32 %v1022, 2147483648
        %v1031 = vxor.u32 %v1023, 2147483648
        %v1032 = vxor.u32 %v1024, 2147483648
        %v1033 = vxor.u32 %v1025, 2147483648
        %v1034 = vmul.f32 %v1026, 1.442695
        %v1035 = vpow.pop %v1034
        %v1036 = vmul.f32 %v1027, 1.442695
        %v1037 = vpow.pop %v1036
        %v1038 = vmul.f32 %v1028, 1.442695
        %v1039 = vpow.pop %v1038
        %v1040 = vmul.f32 %v1029, 1.442695
        %v1041 = vpow.pop %v1040
        %v1042 = vmul.f32 %v1030, 1.442695
        %v1043 = vpow.pop %v1042
        %v1044 = vmul.f32 %v1031, 1.442695
        %v1045 = vpow.pop %v1044
        %v1046 = vmul.f32 %v1032, 1.442695
        %v1047 = vpow.pop %v1046
        %v1048 = vmul.f32 %v1033, 1.442695
        %v1049 = vpow.pop %v1048
        %v1050 = vadd.f32 %v1035, 1.0
        %v1051 = vadd.f32 %v1037, 1.0
        %v1052 = vadd.f32 %v1039, 1.0
        %v1053 = vadd.f32 %v1041, 1.0
        %v1054 = vadd.f32 %v1043, 1.0
        %v1055 = vadd.f32 %v1045, 1.0
        %v1056 = vadd.f32 %v1047, 1.0
        %v1057 = vadd.f32 %v1049, 1.0
        %v1058 = vrcp.pop %v1050
        %v1059 = vmul.f32 1.0, %v1058
        %v1060 = vrcp.pop %v1051
        %v1061 = vmul.f32 1.0, %v1060
        %v1062 = vrcp.pop %v1052
        %v1063 = vmul.f32 1.0, %v1062
        %v1064 = vrcp.pop %v1053
        %v1065 = vmul.f32 1.0, %v1064
        %v1066 = vrcp.pop %v1054
        %v1067 = vmul.f32 1.0, %v1066
        %v1068 = vrcp.pop %v1055
        %v1069 = vmul.f32 1.0, %v1068
        %v1070 = vrcp.pop %v1056
        %v1071 = vmul.f32 1.0, %v1070
        %v1072 = vrcp.pop %v1057
        %v1073 = vmul.f32 1.0, %v1072
        %v1074 = vadd.f32 %v925, %v717
        %v1076 = vrot.slane %v1074, 1
        %v1077 = vrot.slane %v1074, 2
        %v1078 = vrot.slane %v1074, 3
        %v1079 = vrot.slane %v1074, 4
        %v1080 = vrot.slane %v1074, 5
        %v1081 = vrot.slane %v1074, 6
        %v1082 = vrot.slane %v1074, 7
        %v1091 = vmul.f32 %v987, %v1074
        %v1092 = vmul.f32 %v989, %v1076
        %v1093 = vmul.f32 %v991, %v1077
        %v1094 = vmul.f32 %v993, %v1078
        %v1095 = vmul.f32 %v995, %v1079
        %v1096 = vmul.f32 %v997, %v1080
        %v1097 = vmul.f32 %v999, %v1081
        %v1098 = vmul.f32 %v1001, %v1082
        %v1099 = vadd.f32 %v650, %v1091
        %v1100 = vadd.f32 %v653, %v1092
        %v1101 = vadd.f32 %v658, %v1093
        %v1102 = vadd.f32 %v661, %v1094
        %v1103 = vadd.f32 %v666, %v1095
        %v1104 = vadd.f32 %v669, %v1096
        %v1105 = vadd.f32 %v674, %v1097
        %v1106 = vadd.f32 %v677, %v1098
        %v1107 = vtanh.pop %v1099
        %v1108 = vtanh.pop %v1100
        %v1109 = vtanh.pop %v1101
        %v1110 = vtanh.pop %v1102
        %v1111 = vtanh.pop %v1103
        %v1112 = vtanh.pop %v1104
        %v1113 = vtanh.pop %v1105
        %v1114 = vtanh.pop %v1106
        %v1115 = vsub.f32 1.0, %v1059
        %v1116 = vsub.f32 1.0, %v1061
        %v1117 = vsub.f32 1.0, %v1063
        %v1118 = vsub.f32 1.0, %v1065
        %v1119 = vsub.f32 1.0, %v1067
        %v1120 = vsub.f32 1.0, %v1069
        %v1121 = vsub.f32 1.0, %v1071
        %v1122 = vsub.f32 1.0, %v1073
        %v1123 = vmul.f32 %v1115, %v1107
        %v1124 = vmul.f32 %v1116, %v1108
        %v1125 = vmul.f32 %v1117, %v1109
        %v1126 = vmul.f32 %v1118, %v1110
        %v1127 = vmul.f32 %v1119, %v1111
        %v1128 = vmul.f32 %v1120, %v1112
        %v1129 = vmul.f32 %v1121, %v1113
        %v1130 = vmul.f32 %v1122, %v1114
        %v1132 = vrot.slane %v719, 1
        %v1133 = vrot.slane %v719, 2
        %v1134 = vrot.slane %v719, 3
        %v1135 = vrot.slane %v719, 4
        %v1136 = vrot.slane %v719, 5
        %v1137 = vrot.slane %v719, 6
        %v1138 = vrot.slane %v719, 7
        %v1147 = vmul.f32 %v1059, %v719
        %v1148 = vmul.f32 %v1061, %v1132
        %v1149 = vmul.f32 %v1063, %v1133
        %v1150 = vmul.f32 %v1065, %v1134
        %v1151 = vmul.f32 %v1067, %v1135
        %v1152 = vmul.f32 %v1069, %v1136
        %v1153 = vmul.f32 %v1071, %v1137
        %v1154 = vmul.f32 %v1073, %v1138
        %v1155 = vadd.f32 %v1123, %v1147
        %v1156 = vadd.f32 %v1124, %v1148
        %v1157 = vadd.f32 %v1125, %v1149
        %v1158 = vadd.f32 %v1126, %v1150
        %v1159 = vadd.f32 %v1127, %v1151
        %v1160 = vadd.f32 %v1128, %v1152
        %v1161 = vadd.f32 %v1129, %v1153
        %v1162 = vadd.f32 %v1130, %v1154
        %v1163 = vstv %s443
        %vm1164 = vcmp.lt.s32.totalorder %v1163, %v442
        %v1165 = vsel %vm1164, 1, 0
        %1166 = vset.pattern.permute.xlu0 0
        %1167 = vperm.xlu0 %1166, %v1165
        %v1168 = vpop.permute.xlu0 %1167
        %vm1169 = vcmp.eq.s32.totalorder %v1168, 1
        %v1178 = vrot.slane %v1156, 7
        %vm1179 = vcmask 1041409
        %v1180 = vsel %vm1179, %v1178, %v1155
        %v1181 = vrot.slane %v1157, 6
        %vm1182 = vcmask 1042434
        %v1183 = vsel %vm1182, %v1181, %v1180
        %v1184 = vrot.slane %v1158, 5
        %vm1185 = vcmask 1043459
        %v1186 = vsel %vm1185, %v1184, %v1183
        %v1187 = vrot.slane %v1159, 4
        %vm1188 = vcmask 1044484
        %v1189 = vsel %vm1188, %v1187, %v1186
        %v1190 = vrot.slane %v1160, 3
        %vm1191 = vcmask 1045509
        %v1192 = vsel %vm1191, %v1190, %v1189
        %v1193 = vrot.slane %v1161, 2
        %vm1194 = vcmask 1046534
        %v1195 = vsel %vm1194, %v1193, %v1192
        %v1196 = vrot.slane %v1162, 1
        %vm1197 = vcmask 1047559
        %v1198 = vsel %vm1197, %v1196, %v1195
        %v1200 = vsel %vm1169, %v1198, 0.0
        %v1202 = vcombine.high %v1200, %v1200
        %v1204 = vunpack.c.l.s4 1966171168
        %v1205 = vunpack.c.0.s8 %v1204
        %v1206 = vlaneseq
        %v1207 = vshrl.u32 %v1206, 7
        %v1208 = vsub.s32 %v1205, %v1207
        %v1209 = vrot.slane %v1200, %v1208
        %v1211 = vunpack.c.l.s4 1966171168
        %v1212 = vunpack.c.0.s8 %v1211
        %v1213 = vlaneseq
        %v1214 = vshrl.u32 %v1213, 7
        %v1215 = vsub.s32 %v1212, %v1214
        %v1216 = vrot.slane %v1202, %v1215
        %v1217 = vcombine.high %v1209, %v1209
        %v1218 = vcombine.high %v1216, %v1216
        %v1220 = vunpack.c.l.s4 1966171168
        %v1221 = vunpack.c.0.s8 %v1220
        %v1222 = vlaneseq
        %v1223 = vshrl.u32 %v1222, 7
        %v1224 = vsub.s32 %v1221, %v1223
        %v1225 = vrot.slane %v1209, %v1224
        %v1227 = vunpack.c.l.s4 1966171168
        %v1228 = vunpack.c.0.s8 %v1227
        %v1229 = vlaneseq
        %v1230 = vshrl.u32 %v1229, 7
        %v1231 = vsub.s32 %v1228, %v1230
        %v1232 = vrot.slane %v1216, %v1231
        %v1234 = vunpack.c.l.s4 1966171168
        %v1235 = vunpack.c.0.s8 %v1234
        %v1236 = vlaneseq
        %v1237 = vshrl.u32 %v1236, 7
        %v1238 = vsub.s32 %v1235, %v1237
        %v1239 = vrot.slane %v1217, %v1238
        %v1241 = vunpack.c.l.s4 1966171168
        %v1242 = vunpack.c.0.s8 %v1241
        %v1243 = vlaneseq
        %v1244 = vshrl.u32 %v1243, 7
        %v1245 = vsub.s32 %v1242, %v1244
        %v1246 = vrot.slane %v1218, %v1245
        %v1247 = vcombine.high %v1225, %v1225
        %v1248 = vcombine.high %v1232, %v1232
        %v1249 = vcombine.high %v1239, %v1239
        %v1250 = vcombine.high %v1246, %v1246
        %1259 = vst [vmem:[%s427] sm:$0x1] %v1225
        %1260 = vst [vmem:[%s427 + $0x8] sm:$0x1] %v1239
        %1261 = vst [vmem:[%s427 + $0x10] sm:$0x1] %v1247
        %1262 = vst [vmem:[%s427 + $0x18] sm:$0x1] %v1249
        %1263 = vst [vmem:[%s427 + $0x20] sm:$0x1] %v1232
        %1264 = vst [vmem:[%s427 + $0x28] sm:$0x1] %v1246
        %1265 = vst [vmem:[%s427 + $0x30] sm:$0x1] %v1248
        %1266 = vst [vmem:[%s427 + $0x38] sm:$0x1] %v1250
        %v1267 = vsel %vm1169, %v1198, %v719
        %v1268 = vpack.c.bf16 %v1267, %v1267
        %1269 = vmatprep.subr.bf16.mxu0 %v802
        %1270 = vmatpush1.bf16.msra.mxu0 %v801
        %1271 = vmatprep.subr.bf16.mxu0 %v805
        %1272 = vmatpush1.bf16.msra.mxu0 %v804
        %1273 = vmatprep.subr.bf16.mxu0 %v808
        %1274 = vmatpush1.bf16.msra.mxu0 %v807
        %1275 = vmatprep.subr.bf16.mxu0 %v811
        %1276 = vmatpush1.bf16.msra.mxu0 %v810
        %1277 = vmatprep.subr.bf16.mxu0 %v814
        %1278 = vmatpush1.bf16.msra.mxu0 %v813
        %1279 = vmatprep.subr.bf16.mxu0 %v817
        %1280 = vmatpush1.bf16.msra.mxu0 %v816
        %1281 = vmatprep.subr.bf16.mxu0 %v820
        %1282 = vmatpush1.bf16.msra.mxu0 %v819
        %1283 = vmatprep.subr.bf16.mxu0 %v823
        %1284 = vmatpush1.bf16.msra.mxu0 %v822
        %1285 = vmatprep.subr.bf16.mxu0 0
        %1286 = vmatpush1.bf16.msra.mxu0 0
        %1287 = vmatprep.subr.bf16.mxu0 0
        %1288 = vmatpush1.bf16.msra.mxu0 0
        %1289 = vmatprep.subr.bf16.mxu0 0
        %1290 = vmatpush1.bf16.msra.mxu0 0
        %1291 = vmatprep.subr.bf16.mxu0 0
        %1292 = vmatpush1.bf16.msra.mxu0 0
        %1293 = vmatprep.subr.bf16.mxu0 0
        %1294 = vmatpush1.bf16.msra.mxu0 0
        %1295 = vmatprep.subr.bf16.mxu0 0
        %1296 = vmatpush1.bf16.msra.mxu0 0
        %1297 = vmatprep.subr.bf16.mxu0 0
        %1298 = vmatpush1.bf16.msra.mxu0 0
        %1299 = vmatprep.subr.bf16.mxu0 0
        %1300 = vmatpush1.bf16.msra.mxu0 0
        %1301 = vmatprep.mubr.bf16.mxu0 0
        %1302 = vmatmul.mubr.bf16.gmra.mrb[0].mxu0 %v1268
        %v1303 = vpop.f32.mrb[0].mxu0
        %v1304 = vadd.f32 0.0, %v1303
        %v1305 = vpop.f32.mrb[0].mxu0
        %v1306 = vadd.f32 0.0, %v1305
        %v1307 = vpop.f32.mrb[0].mxu0
        %v1308 = vpop.f32.mrb[0].mxu0
        %1309 = vdwg.mxu0
        %1310 = vmatprep.subr.bf16.mxu0 0
        %1311 = vmatpush1.bf16.msra.mxu0 %v803
        %1312 = vmatprep.subr.bf16.mxu0 0
        %1313 = vmatpush1.bf16.msra.mxu0 %v806
        %1314 = vmatprep.subr.bf16.mxu0 0
        %1315 = vmatpush1.bf16.msra.mxu0 %v809
        %1316 = vmatprep.subr.bf16.mxu0 0
        %1317 = vmatpush1.bf16.msra.mxu0 %v812
        %1318 = vmatprep.subr.bf16.mxu0 0
        %1319 = vmatpush1.bf16.msra.mxu0 %v815
        %1320 = vmatprep.subr.bf16.mxu0 0
        %1321 = vmatpush1.bf16.msra.mxu0 %v818
        %1322 = vmatprep.subr.bf16.mxu0 0
        %1323 = vmatpush1.bf16.msra.mxu0 %v821
        %1324 = vmatprep.subr.bf16.mxu0 0
        %1325 = vmatpush1.bf16.msra.mxu0 %v824
        %1326 = vmatprep.subr.bf16.mxu0 0
        %1327 = vmatpush1.bf16.msra.mxu0 0
        %1328 = vmatprep.subr.bf16.mxu0 0
        %1329 = vmatpush1.bf16.msra.mxu0 0
        %1330 = vmatprep.subr.bf16.mxu0 0
        %1331 = vmatpush1.bf16.msra.mxu0 0
        %1332 = vmatprep.subr.bf16.mxu0 0
        %1333 = vmatpush1.bf16.msra.mxu0 0
        %1334 = vmatprep.subr.bf16.mxu0 0
        %1335 = vmatpush1.bf16.msra.mxu0 0
        %1336 = vmatprep.subr.bf16.mxu0 0
        %1337 = vmatpush1.bf16.msra.mxu0 0
        %1338 = vmatprep.subr.bf16.mxu0 0
        %1339 = vmatpush1.bf16.msra.mxu0 0
        %1340 = vmatprep.subr.bf16.mxu0 0
        %1341 = vmatpush1.bf16.msra.mxu0 0
        %1342 = vmatprep.mubr.bf16.mxu0 0
        %1343 = vmatmul.mubr.bf16.gmra.mrb[0].mxu0 %v1268
        %v1344 = vpop.f32.mrb[0].mxu0
        %v1345 = vadd.f32 0.0, %v1344
        %v1346 = vpop.f32.mrb[0].mxu0
        %v1347 = vpop.f32.mrb[0].mxu0
        %v1348 = vpop.f32.mrb[0].mxu0
        %1349 = vdwg.mxu0
        %v1351 = vrot.slane %v1304, 7
        %v1352 = vrot.slane %v1304, 1
        %v1353 = vrot.slane %v1304, 2
        %v1354 = vrot.slane %v1304, 3
        %v1355 = vrot.slane %v1304, 4
        %v1356 = vrot.slane %v1304, 5
        %v1357 = vrot.slane %v1304, 6
        %v1366 = vadd.f32 %v577, %v1351
        %v1367 = vadd.f32 %v581, %v1304
        %v1368 = vadd.f32 %v587, %v1352
        %v1369 = vadd.f32 %v591, %v1353
        %v1370 = vadd.f32 %v597, %v1354
        %v1371 = vadd.f32 %v601, %v1355
        %v1372 = vadd.f32 %v607, %v1356
        %v1373 = vadd.f32 %v611, %v1357
        %v1374 = vxor.u32 %v1366, 2147483648
        %v1375 = vxor.u32 %v1367, 2147483648
        %v1376 = vxor.u32 %v1368, 2147483648
        %v1377 = vxor.u32 %v1369, 2147483648
        %v1378 = vxor.u32 %v1370, 2147483648
        %v1379 = vxor.u32 %v1371, 2147483648
        %v1380 = vxor.u32 %v1372, 2147483648
        %v1381 = vxor.u32 %v1373, 2147483648
        %v1382 = vmul.f32 %v1374, 1.442695
        %v1383 = vpow.pop %v1382
        %v1384 = vmul.f32 %v1375, 1.442695
        %v1385 = vpow.pop %v1384
        %v1386 = vmul.f32 %v1376, 1.442695
        %v1387 = vpow.pop %v1386
        %v1388 = vmul.f32 %v1377, 1.442695
        %v1389 = vpow.pop %v1388
        %v1390 = vmul.f32 %v1378, 1.442695
        %v1391 = vpow.pop %v1390
        %v1392 = vmul.f32 %v1379, 1.442695
        %v1393 = vpow.pop %v1392
        %v1394 = vmul.f32 %v1380, 1.442695
        %v1395 = vpow.pop %v1394
        %v1396 = vmul.f32 %v1381, 1.442695
        %v1397 = vpow.pop %v1396
        %v1398 = vadd.f32 %v1383, 1.0
        %v1399 = vadd.f32 %v1385, 1.0
        %v1400 = vadd.f32 %v1387, 1.0
        %v1401 = vadd.f32 %v1389, 1.0
        %v1402 = vadd.f32 %v1391, 1.0
        %v1403 = vadd.f32 %v1393, 1.0
        %v1404 = vadd.f32 %v1395, 1.0
        %v1405 = vadd.f32 %v1397, 1.0
        %v1406 = vrcp.pop %v1398
        %v1407 = vmul.f32 1.0, %v1406
        %v1408 = vrcp.pop %v1399
        %v1409 = vmul.f32 1.0, %v1408
        %v1410 = vrcp.pop %v1400
        %v1411 = vmul.f32 1.0, %v1410
        %v1412 = vrcp.pop %v1401
        %v1413 = vmul.f32 1.0, %v1412
        %v1414 = vrcp.pop %v1402
        %v1415 = vmul.f32 1.0, %v1414
        %v1416 = vrcp.pop %v1403
        %v1417 = vmul.f32 1.0, %v1416
        %v1418 = vrcp.pop %v1404
        %v1419 = vmul.f32 1.0, %v1418
        %v1420 = vrcp.pop %v1405
        %v1421 = vmul.f32 1.0, %v1420
        %v1423 = vrot.slane %v1306, 7
        %v1424 = vrot.slane %v1306, 1
        %v1425 = vrot.slane %v1306, 2
        %v1426 = vrot.slane %v1306, 3
        %v1427 = vrot.slane %v1306, 4
        %v1428 = vrot.slane %v1306, 5
        %v1429 = vrot.slane %v1306, 6
        %v1438 = vadd.f32 %v579, %v1423
        %v1439 = vadd.f32 %v583, %v1306
        %v1440 = vadd.f32 %v589, %v1424
        %v1441 = vadd.f32 %v593, %v1425
        %v1442 = vadd.f32 %v599, %v1426
        %v1443 = vadd.f32 %v603, %v1427
        %v1444 = vadd.f32 %v609, %v1428
        %v1445 = vadd.f32 %v613, %v1429
        %v1446 = vxor.u32 %v1438, 2147483648
        %v1447 = vxor.u32 %v1439, 2147483648
        %v1448 = vxor.u32 %v1440, 2147483648
        %v1449 = vxor.u32 %v1441, 2147483648
        %v1450 = vxor.u32 %v1442, 2147483648
        %v1451 = vxor.u32 %v1443, 2147483648
        %v1452 = vxor.u32 %v1444, 2147483648
        %v1453 = vxor.u32 %v1445, 2147483648
        %v1454 = vmul.f32 %v1446, 1.442695
        %v1455 = vpow.pop %v1454
        %v1456 = vmul.f32 %v1447, 1.442695
        %v1457 = vpow.pop %v1456
        %v1458 = vmul.f32 %v1448, 1.442695
        %v1459 = vpow.pop %v1458
        %v1460 = vmul.f32 %v1449, 1.442695
        %v1461 = vpow.pop %v1460
        %v1462 = vmul.f32 %v1450, 1.442695
        %v1463 = vpow.pop %v1462
        %v1464 = vmul.f32 %v1451, 1.442695
        %v1465 = vpow.pop %v1464
        %v1466 = vmul.f32 %v1452, 1.442695
        %v1467 = vpow.pop %v1466
        %v1468 = vmul.f32 %v1453, 1.442695
        %v1469 = vpow.pop %v1468
        %v1470 = vadd.f32 %v1455, 1.0
        %v1471 = vadd.f32 %v1457, 1.0
        %v1472 = vadd.f32 %v1459, 1.0
        %v1473 = vadd.f32 %v1461, 1.0
        %v1474 = vadd.f32 %v1463, 1.0
        %v1475 = vadd.f32 %v1465, 1.0
        %v1476 = vadd.f32 %v1467, 1.0
        %v1477 = vadd.f32 %v1469, 1.0
        %v1478 = vrcp.pop %v1470
        %v1479 = vmul.f32 1.0, %v1478
        %v1480 = vrcp.pop %v1471
        %v1481 = vmul.f32 1.0, %v1480
        %v1482 = vrcp.pop %v1472
        %v1483 = vmul.f32 1.0, %v1482
        %v1484 = vrcp.pop %v1473
        %v1485 = vmul.f32 1.0, %v1484
        %v1486 = vrcp.pop %v1474
        %v1487 = vmul.f32 1.0, %v1486
        %v1488 = vrcp.pop %v1475
        %v1489 = vmul.f32 1.0, %v1488
        %v1490 = vrcp.pop %v1476
        %v1491 = vmul.f32 1.0, %v1490
        %v1492 = vrcp.pop %v1477
        %v1493 = vmul.f32 1.0, %v1492
        %v1494 = vadd.f32 %v1345, %v717
        %v1496 = vrot.slane %v1494, 7
        %v1497 = vrot.slane %v1494, 1
        %v1498 = vrot.slane %v1494, 2
        %v1499 = vrot.slane %v1494, 3
        %v1500 = vrot.slane %v1494, 4
        %v1501 = vrot.slane %v1494, 5
        %v1502 = vrot.slane %v1494, 6
        %v1511 = vmul.f32 %v1407, %v1496
        %v1512 = vmul.f32 %v1409, %v1494
        %v1513 = vmul.f32 %v1411, %v1497
        %v1514 = vmul.f32 %v1413, %v1498
        %v1515 = vmul.f32 %v1415, %v1499
        %v1516 = vmul.f32 %v1417, %v1500
        %v1517 = vmul.f32 %v1419, %v1501
        %v1518 = vmul.f32 %v1421, %v1502
        %v1519 = vadd.f32 %v650, %v1511
        %v1520 = vadd.f32 %v653, %v1512
        %v1521 = vadd.f32 %v658, %v1513
        %v1522 = vadd.f32 %v661, %v1514
        %v1523 = vadd.f32 %v666, %v1515
        %v1524 = vadd.f32 %v669, %v1516
        %v1525 = vadd.f32 %v674, %v1517
        %v1526 = vadd.f32 %v677, %v1518
        %v1527 = vtanh.pop %v1519
        %v1528 = vtanh.pop %v1520
        %v1529 = vtanh.pop %v1521
        %v1530 = vtanh.pop %v1522
        %v1531 = vtanh.pop %v1523
        %v1532 = vtanh.pop %v1524
        %v1533 = vtanh.pop %v1525
        %v1534 = vtanh.pop %v1526
        %v1535 = vsub.f32 1.0, %v1479
        %v1536 = vsub.f32 1.0, %v1481
        %v1537 = vsub.f32 1.0, %v1483
        %v1538 = vsub.f32 1.0, %v1485
        %v1539 = vsub.f32 1.0, %v1487
        %v1540 = vsub.f32 1.0, %v1489
        %v1541 = vsub.f32 1.0, %v1491
        %v1542 = vsub.f32 1.0, %v1493
        %v1543 = vmul.f32 %v1535, %v1527
        %v1544 = vmul.f32 %v1536, %v1528
        %v1545 = vmul.f32 %v1537, %v1529
        %v1546 = vmul.f32 %v1538, %v1530
        %v1547 = vmul.f32 %v1539, %v1531
        %v1548 = vmul.f32 %v1540, %v1532
        %v1549 = vmul.f32 %v1541, %v1533
        %v1550 = vmul.f32 %v1542, %v1534
        %v1552 = vrot.slane %v1267, 7
        %v1553 = vrot.slane %v1267, 1
        %v1554 = vrot.slane %v1267, 2
        %v1555 = vrot.slane %v1267, 3
        %v1556 = vrot.slane %v1267, 4
        %v1557 = vrot.slane %v1267, 5
        %v1558 = vrot.slane %v1267, 6
        %v1567 = vmul.f32 %v1479, %v1552
        %v1568 = vmul.f32 %v1481, %v1267
        %v1569 = vmul.f32 %v1483, %v1553
        %v1570 = vmul.f32 %v1485, %v1554
        %v1571 = vmul.f32 %v1487, %v1555
        %v1572 = vmul.f32 %v1489, %v1556
        %v1573 = vmul.f32 %v1491, %v1557
        %v1574 = vmul.f32 %v1493, %v1558
        %v1575 = vadd.f32 %v1543, %v1567
        %v1576 = vadd.f32 %v1544, %v1568
        %v1577 = vadd.f32 %v1545, %v1569
        %v1578 = vadd.f32 %v1546, %v1570
        %v1579 = vadd.f32 %v1547, %v1571
        %v1580 = vadd.f32 %v1548, %v1572
        %v1581 = vadd.f32 %v1549, %v1573
        %v1582 = vadd.f32 %v1550, %v1574
        %s1583 = sadd.s32 %s443, 1
        %v1584 = vstv %s1583
        %vm1585 = vcmp.lt.s32.totalorder %v1584, %v442
        %v1586 = vsel %vm1585, 1, 0
        %1587 = vset.pattern.permute.xlu0 0
        %1588 = vperm.xlu0 %1587, %v1586
        %v1589 = vpop.permute.xlu0 %1588
        %vm1590 = vcmp.eq.s32.totalorder %v1589, 1
        %v1599 = vrot.slane %v1575, 1
        %v1600 = vsel %vm1179, %v1576, %v1599
        %v1601 = vrot.slane %v1577, 7
        %v1602 = vsel %vm1182, %v1601, %v1600
        %v1603 = vrot.slane %v1578, 6
        %v1604 = vsel %vm1185, %v1603, %v1602
        %v1605 = vrot.slane %v1579, 5
        %v1606 = vsel %vm1188, %v1605, %v1604
        %v1607 = vrot.slane %v1580, 4
        %v1608 = vsel %vm1191, %v1607, %v1606
        %v1609 = vrot.slane %v1581, 3
        %v1610 = vsel %vm1194, %v1609, %v1608
        %v1611 = vrot.slane %v1582, 2
        %v1612 = vsel %vm1197, %v1611, %v1610
        %v1614 = vsel %vm1590, %v1612, 0.0
        %v1616 = vcombine.high %v1614, %v1614
        %v1618 = vunpack.c.l.s4 1966171168
        %v1619 = vunpack.c.0.s8 %v1618
        %v1620 = vlaneseq
        %v1621 = vshrl.u32 %v1620, 7
        %v1622 = vsub.s32 %v1619, %v1621
        %v1623 = vrot.slane %v1614, %v1622
        %v1625 = vunpack.c.l.s4 1966171168
        %v1626 = vunpack.c.0.s8 %v1625
        %v1627 = vlaneseq
        %v1628 = vshrl.u32 %v1627, 7
        %v1629 = vsub.s32 %v1626, %v1628
        %v1630 = vrot.slane %v1616, %v1629
        %v1631 = vcombine.high %v1623, %v1623
        %v1632 = vcombine.high %v1630, %v1630
        %v1634 = vunpack.c.l.s4 1966171168
        %v1635 = vunpack.c.0.s8 %v1634
        %v1636 = vlaneseq
        %v1637 = vshrl.u32 %v1636, 7
        %v1638 = vsub.s32 %v1635, %v1637
        %v1639 = vrot.slane %v1623, %v1638
        %v1641 = vunpack.c.l.s4 1966171168
        %v1642 = vunpack.c.0.s8 %v1641
        %v1643 = vlaneseq
        %v1644 = vshrl.u32 %v1643, 7
        %v1645 = vsub.s32 %v1642, %v1644
        %v1646 = vrot.slane %v1630, %v1645
        %v1648 = vunpack.c.l.s4 1966171168
        %v1649 = vunpack.c.0.s8 %v1648
        %v1650 = vlaneseq
        %v1651 = vshrl.u32 %v1650, 7
        %v1652 = vsub.s32 %v1649, %v1651
        %v1653 = vrot.slane %v1631, %v1652
        %v1655 = vunpack.c.l.s4 1966171168
        %v1656 = vunpack.c.0.s8 %v1655
        %v1657 = vlaneseq
        %v1658 = vshrl.u32 %v1657, 7
        %v1659 = vsub.s32 %v1656, %v1658
        %v1660 = vrot.slane %v1632, %v1659
        %v1661 = vcombine.high %v1639, %v1639
        %v1662 = vcombine.high %v1646, %v1646
        %v1663 = vcombine.high %v1653, %v1653
        %v1664 = vcombine.high %v1660, %v1660
        %1673 = vst [vmem:[%s427 + $0x1] sm:$0x1] %v1639
        %1674 = vst [vmem:[%s427 + $0x9] sm:$0x1] %v1653
        %1675 = vst [vmem:[%s427 + $0x11] sm:$0x1] %v1661
        %1676 = vst [vmem:[%s427 + $0x19] sm:$0x1] %v1663
        %1677 = vst [vmem:[%s427 + $0x21] sm:$0x1] %v1646
        %1678 = vst [vmem:[%s427 + $0x29] sm:$0x1] %v1660
        %1679 = vst [vmem:[%s427 + $0x31] sm:$0x1] %v1662
        %1680 = vst [vmem:[%s427 + $0x39] sm:$0x1] %v1664
        %v1681 = vsel %vm1590, %v1612, %v1267
        %v1682 = vpack.c.bf16 %v1681, %v1681
        %1683 = vmatprep.subr.bf16.mxu0 %v802
        %1684 = vmatpush1.bf16.msra.mxu0 %v801
        %1685 = vmatprep.subr.bf16.mxu0 %v805
        %1686 = vmatpush1.bf16.msra.mxu0 %v804
        %1687 = vmatprep.subr.bf16.mxu0 %v808
        %1688 = vmatpush1.bf16.msra.mxu0 %v807
        %1689 = vmatprep.subr.bf16.mxu0 %v811
        %1690 = vmatpush1.bf16.msra.mxu0 %v810
        %1691 = vmatprep.subr.bf16.mxu0 %v814
        %1692 = vmatpush1.bf16.msra.mxu0 %v813
        %1693 = vmatprep.subr.bf16.mxu0 %v817
        %1694 = vmatpush1.bf16.msra.mxu0 %v816
        %1695 = vmatprep.subr.bf16.mxu0 %v820
        %1696 = vmatpush1.bf16.msra.mxu0 %v819
        %1697 = vmatprep.subr.bf16.mxu0 %v823
        %1698 = vmatpush1.bf16.msra.mxu0 %v822
        %1699 = vmatprep.subr.bf16.mxu0 0
        %1700 = vmatpush1.bf16.msra.mxu0 0
        %1701 = vmatprep.subr.bf16.mxu0 0
        %1702 = vmatpush1.bf16.msra.mxu0 0
        %1703 = vmatprep.subr.bf16.mxu0 0
        %1704 = vmatpush1.bf16.msra.mxu0 0
        %1705 = vmatprep.subr.bf16.mxu0 0
        %1706 = vmatpush1.bf16.msra.mxu0 0
        %1707 = vmatprep.subr.bf16.mxu0 0
        %1708 = vmatpush1.bf16.msra.mxu0 0
        %1709 = vmatprep.subr.bf16.mxu0 0
        %1710 = vmatpush1.bf16.msra.mxu0 0
        %1711 = vmatprep.subr.bf16.mxu0 0
        %1712 = vmatpush1.bf16.msra.mxu0 0
        %1713 = vmatprep.subr.bf16.mxu0 0
        %1714 = vmatpush1.bf16.msra.mxu0 0
        %1715 = vmatprep.mubr.bf16.mxu0 0
        %1716 = vmatmul.mubr.bf16.gmra.mrb[0].mxu0 %v1682
        %v1717 = vpop.f32.mrb[0].mxu0
        %v1718 = vadd.f32 0.0, %v1717
        %v1719 = vpop.f32.mrb[0].mxu0
        %v1720 = vadd.f32 0.0, %v1719
        %v1721 = vpop.f32.mrb[0].mxu0
        %v1722 = vpop.f32.mrb[0].mxu0
        %1723 = vdwg.mxu0
        %1724 = vmatprep.subr.bf16.mxu0 0
        %1725 = vmatpush1.bf16.msra.mxu0 %v803
        %1726 = vmatprep.subr.bf16.mxu0 0
        %1727 = vmatpush1.bf16.msra.mxu0 %v806
        %1728 = vmatprep.subr.bf16.mxu0 0
        %1729 = vmatpush1.bf16.msra.mxu0 %v809
        %1730 = vmatprep.subr.bf16.mxu0 0
        %1731 = vmatpush1.bf16.msra.mxu0 %v812
        %1732 = vmatprep.subr.bf16.mxu0 0
        %1733 = vmatpush1.bf16.msra.mxu0 %v815
        %1734 = vmatprep.subr.bf16.mxu0 0
        %1735 = vmatpush1.bf16.msra.mxu0 %v818
        %1736 = vmatprep.subr.bf16.mxu0 0
        %1737 = vmatpush1.bf16.msra.mxu0 %v821
        %1738 = vmatprep.subr.bf16.mxu0 0
        %1739 = vmatpush1.bf16.msra.mxu0 %v824
        %1740 = vmatprep.subr.bf16.mxu0 0
        %1741 = vmatpush1.bf16.msra.mxu0 0
        %1742 = vmatprep.subr.bf16.mxu0 0
        %1743 = vmatpush1.bf16.msra.mxu0 0
        %1744 = vmatprep.subr.bf16.mxu0 0
        %1745 = vmatpush1.bf16.msra.mxu0 0
        %1746 = vmatprep.subr.bf16.mxu0 0
        %1747 = vmatpush1.bf16.msra.mxu0 0
        %1748 = vmatprep.subr.bf16.mxu0 0
        %1749 = vmatpush1.bf16.msra.mxu0 0
        %1750 = vmatprep.subr.bf16.mxu0 0
        %1751 = vmatpush1.bf16.msra.mxu0 0
        %1752 = vmatprep.subr.bf16.mxu0 0
        %1753 = vmatpush1.bf16.msra.mxu0 0
        %1754 = vmatprep.subr.bf16.mxu0 0
        %1755 = vmatpush1.bf16.msra.mxu0 0
        %1756 = vmatprep.mubr.bf16.mxu0 0
        %1757 = vmatmul.mubr.bf16.gmra.mrb[0].mxu0 %v1682
        %v1758 = vpop.f32.mrb[0].mxu0
        %v1759 = vadd.f32 0.0, %v1758
        %v1760 = vpop.f32.mrb[0].mxu0
        %v1761 = vpop.f32.mrb[0].mxu0
        %v1762 = vpop.f32.mrb[0].mxu0
        %1763 = vdwg.mxu0
        %v1765 = vrot.slane %v1718, 6
        %v1766 = vrot.slane %v1718, 7
        %v1767 = vrot.slane %v1718, 1
        %v1768 = vrot.slane %v1718, 2
        %v1769 = vrot.slane %v1718, 3
        %v1770 = vrot.slane %v1718, 4
        %v1771 = vrot.slane %v1718, 5
        %v1780 = vadd.f32 %v577, %v1765
        %v1781 = vadd.f32 %v581, %v1766
        %v1782 = vadd.f32 %v587, %v1718
        %v1783 = vadd.f32 %v591, %v1767
        %v1784 = vadd.f32 %v597, %v1768
        %v1785 = vadd.f32 %v601, %v1769
        %v1786 = vadd.f32 %v607, %v1770
        %v1787 = vadd.f32 %v611, %v1771
        %v1788 = vxor.u32 %v1780, 2147483648
        %v1789 = vxor.u32 %v1781, 2147483648
        %v1790 = vxor.u32 %v1782, 2147483648
        %v1791 = vxor.u32 %v1783, 2147483648
        %v1792 = vxor.u32 %v1784, 2147483648
        %v1793 = vxor.u32 %v1785, 2147483648
        %v1794 = vxor.u32 %v1786, 2147483648
        %v1795 = vxor.u32 %v1787, 2147483648
        %v1796 = vmul.f32 %v1788, 1.442695
        %v1797 = vpow.pop %v1796
        %v1798 = vmul.f32 %v1789, 1.442695
        %v1799 = vpow.pop %v1798
        %v1800 = vmul.f32 %v1790, 1.442695
        %v1801 = vpow.pop %v1800
        %v1802 = vmul.f32 %v1791, 1.442695
        %v1803 = vpow.pop %v1802
        %v1804 = vmul.f32 %v1792, 1.442695
        %v1805 = vpow.pop %v1804
        %v1806 = vmul.f32 %v1793, 1.442695
        %v1807 = vpow.pop %v1806
        %v1808 = vmul.f32 %v1794, 1.442695
        %v1809 = vpow.pop %v1808
        %v1810 = vmul.f32 %v1795, 1.442695
        %v1811 = vpow.pop %v1810
        %v1812 = vadd.f32 %v1797, 1.0
        %v1813 = vadd.f32 %v1799, 1.0
        %v1814 = vadd.f32 %v1801, 1.0
        %v1815 = vadd.f32 %v1803, 1.0
        %v1816 = vadd.f32 %v1805, 1.0
        %v1817 = vadd.f32 %v1807, 1.0
        %v1818 = vadd.f32 %v1809, 1.0
        %v1819 = vadd.f32 %v1811, 1.0
        %v1820 = vrcp.pop %v1812
        %v1821 = vmul.f32 1.0, %v1820
        %v1822 = vrcp.pop %v1813
        %v1823 = vmul.f32 1.0, %v1822
        %v1824 = vrcp.pop %v1814
        %v1825 = vmul.f32 1.0, %v1824
        %v1826 = vrcp.pop %v1815
        %v1827 = vmul.f32 1.0, %v1826
        %v1828 = vrcp.pop %v1816
        %v1829 = vmul.f32 1.0, %v1828
        %v1830 = vrcp.pop %v1817
        %v1831 = vmul.f32 1.0, %v1830
        %v1832 = vrcp.pop %v1818
        %v1833 = vmul.f32 1.0, %v1832
        %v1834 = vrcp.pop %v1819
        %v1835 = vmul.f32 1.0, %v1834
        %v1837 = vrot.slane %v1720, 6
        %v1838 = vrot.slane %v1720, 7
        %v1839 = vrot.slane %v1720, 1
        %v1840 = vrot.slane %v1720, 2
        %v1841 = vrot.slane %v1720, 3
        %v1842 = vrot.slane %v1720, 4
        %v1843 = vrot.slane %v1720, 5
        %v1852 = vadd.f32 %v579, %v1837
        %v1853 = vadd.f32 %v583, %v1838
        %v1854 = vadd.f32 %v589, %v1720
        %v1855 = vadd.f32 %v593, %v1839
        %v1856 = vadd.f32 %v599, %v1840
        %v1857 = vadd.f32 %v603, %v1841
        %v1858 = vadd.f32 %v609, %v1842
        %v1859 = vadd.f32 %v613, %v1843
        %v1860 = vxor.u32 %v1852, 2147483648
        %v1861 = vxor.u32 %v1853, 2147483648
        %v1862 = vxor.u32 %v1854, 2147483648
        %v1863 = vxor.u32 %v1855, 2147483648
        %v1864 = vxor.u32 %v1856, 2147483648
        %v1865 = vxor.u32 %v1857, 2147483648
        %v1866 = vxor.u32 %v1858, 2147483648
        %v1867 = vxor.u32 %v1859, 2147483648
        %v1868 = vmul.f32 %v1860, 1.442695
        %v1869 = vpow.pop %v1868
        %v1870 = vmul.f32 %v1861, 1.442695
        %v1871 = vpow.pop %v1870
        %v1872 = vmul.f32 %v1862, 1.442695
        %v1873 = vpow.pop %v1872
        %v1874 = vmul.f32 %v1863, 1.442695
        %v1875 = vpow.pop %v1874
        %v1876 = vmul.f32 %v1864, 1.442695
        %v1877 = vpow.pop %v1876
        %v1878 = vmul.f32 %v1865, 1.442695
        %v1879 = vpow.pop %v1878
        %v1880 = vmul.f32 %v1866, 1.442695
        %v1881 = vpow.pop %v1880
        %v1882 = vmul.f32 %v1867, 1.442695
        %v1883 = vpow.pop %v1882
        %v1884 = vadd.f32 %v1869, 1.0
        %v1885 = vadd.f32 %v1871, 1.0
        %v1886 = vadd.f32 %v1873, 1.0
        %v1887 = vadd.f32 %v1875, 1.0
        %v1888 = vadd.f32 %v1877, 1.0
        %v1889 = vadd.f32 %v1879, 1.0
        %v1890 = vadd.f32 %v1881, 1.0
        %v1891 = vadd.f32 %v1883, 1.0
        %v1892 = vrcp.pop %v1884
        %v1893 = vmul.f32 1.0, %v1892
        %v1894 = vrcp.pop %v1885
        %v1895 = vmul.f32 1.0, %v1894
        %v1896 = vrcp.pop %v1886
        %v1897 = vmul.f32 1.0, %v1896
        %v1898 = vrcp.pop %v1887
        %v1899 = vmul.f32 1.0, %v1898
        %v1900 = vrcp.pop %v1888
        %v1901 = vmul.f32 1.0, %v1900
        %v1902 = vrcp.pop %v1889
        %v1903 = vmul.f32 1.0, %v1902
        %v1904 = vrcp.pop %v1890
        %v1905 = vmul.f32 1.0, %v1904
        %v1906 = vrcp.pop %v1891
        %v1907 = vmul.f32 1.0, %v1906
        %v1908 = vadd.f32 %v1759, %v717
        %v1910 = vrot.slane %v1908, 6
        %v1911 = vrot.slane %v1908, 7
        %v1912 = vrot.slane %v1908, 1
        %v1913 = vrot.slane %v1908, 2
        %v1914 = vrot.slane %v1908, 3
        %v1915 = vrot.slane %v1908, 4
        %v1916 = vrot.slane %v1908, 5
        %v1925 = vmul.f32 %v1821, %v1910
        %v1926 = vmul.f32 %v1823, %v1911
        %v1927 = vmul.f32 %v1825, %v1908
        %v1928 = vmul.f32 %v1827, %v1912
        %v1929 = vmul.f32 %v1829, %v1913
        %v1930 = vmul.f32 %v1831, %v1914
        %v1931 = vmul.f32 %v1833, %v1915
        %v1932 = vmul.f32 %v1835, %v1916
        %v1933 = vadd.f32 %v650, %v1925
        %v1934 = vadd.f32 %v653, %v1926
        %v1935 = vadd.f32 %v658, %v1927
        %v1936 = vadd.f32 %v661, %v1928
        %v1937 = vadd.f32 %v666, %v1929
        %v1938 = vadd.f32 %v669, %v1930
        %v1939 = vadd.f32 %v674, %v1931
        %v1940 = vadd.f32 %v677, %v1932
        %v1941 = vtanh.pop %v1933
        %v1942 = vtanh.pop %v1934
        %v1943 = vtanh.pop %v1935
        %v1944 = vtanh.pop %v1936
        %v1945 = vtanh.pop %v1937
        %v1946 = vtanh.pop %v1938
        %v1947 = vtanh.pop %v1939
        %v1948 = vtanh.pop %v1940
        %v1949 = vsub.f32 1.0, %v1893
        %v1950 = vsub.f32 1.0, %v1895
        %v1951 = vsub.f32 1.0, %v1897
        %v1952 = vsub.f32 1.0, %v1899
        %v1953 = vsub.f32 1.0, %v1901
        %v1954 = vsub.f32 1.0, %v1903
        %v1955 = vsub.f32 1.0, %v1905
        %v1956 = vsub.f32 1.0, %v1907
        %v1957 = vmul.f32 %v1949, %v1941
        %v1958 = vmul.f32 %v1950, %v1942
        %v1959 = vmul.f32 %v1951, %v1943
        %v1960 = vmul.f32 %v1952, %v1944
        %v1961 = vmul.f32 %v1953, %v1945
        %v1962 = vmul.f32 %v1954, %v1946
        %v1963 = vmul.f32 %v1955, %v1947
        %v1964 = vmul.f32 %v1956, %v1948
        %v1966 = vrot.slane %v1681, 6
        %v1967 = vrot.slane %v1681, 7
        %v1968 = vrot.slane %v1681, 1
        %v1969 = vrot.slane %v1681, 2
        %v1970 = vrot.slane %v1681, 3
        %v1971 = vrot.slane %v1681, 4
        %v1972 = vrot.slane %v1681, 5
        %v1981 = vmul.f32 %v1893, %v1966
        %v1982 = vmul.f32 %v1895, %v1967
        %v1983 = vmul.f32 %v1897, %v1681
        %v1984 = vmul.f32 %v1899, %v1968
        %v1985 = vmul.f32 %v1901, %v1969
        %v1986 = vmul.f32 %v1903, %v1970
        %v1987 = vmul.f32 %v1905, %v1971
        %v1988 = vmul.f32 %v1907, %v1972
        %v1989 = vadd.f32 %v1957, %v1981
        %v1990 = vadd.f32 %v1958, %v1982
        %v1991 = vadd.f32 %v1959, %v1983
        %v1992 = vadd.f32 %v1960, %v1984
        %v1993 = vadd.f32 %v1961, %v1985
        %v1994 = vadd.f32 %v1962, %v1986
        %v1995 = vadd.f32 %v1963, %v1987
        %v1996 = vadd.f32 %v1964, %v1988
        %s1997 = sadd.s32 %s443, 2
        %v1998 = vstv %s1997
        %vm1999 = vcmp.lt.s32.totalorder %v1998, %v442
        %v2000 = vsel %vm1999, 1, 0
        %2001 = vset.pattern.permute.xlu0 0
        %2002 = vperm.xlu0 %2001, %v2000
        %v2003 = vpop.permute.xlu0 %2002
        %vm2004 = vcmp.eq.s32.totalorder %v2003, 1
        %v2013 = vrot.slane %v1989, 2
        %v2014 = vrot.slane %v1990, 1
        %v2015 = vsel %vm1179, %v2014, %v2013
        %v2016 = vsel %vm1182, %v1991, %v2015
        %v2017 = vrot.slane %v1992, 7
        %v2018 = vsel %vm1185, %v2017, %v2016
        %v2019 = vrot.slane %v1993, 6
        %v2020 = vsel %vm1188, %v2019, %v2018
        %v2021 = vrot.slane %v1994, 5
        %v2022 = vsel %vm1191, %v2021, %v2020
        %v2023 = vrot.slane %v1995, 4
        %v2024 = vsel %vm1194, %v2023, %v2022
        %v2025 = vrot.slane %v1996, 3
        %v2026 = vsel %vm1197, %v2025, %v2024
        %v2028 = vsel %vm2004, %v2026, 0.0
        %v2030 = vcombine.high %v2028, %v2028
        %v2032 = vunpack.c.l.s4 1966171168
        %v2033 = vunpack.c.0.s8 %v2032
        %v2034 = vlaneseq
        %v2035 = vshrl.u32 %v2034, 7
        %v2036 = vsub.s32 %v2033, %v2035
        %v2037 = vrot.slane %v2028, %v2036
        %v2039 = vunpack.c.l.s4 1966171168
        %v2040 = vunpack.c.0.s8 %v2039
        %v2041 = vlaneseq
        %v2042 = vshrl.u32 %v2041, 7
        %v2043 = vsub.s32 %v2040, %v2042
        %v2044 = vrot.slane %v2030, %v2043
        %v2045 = vcombine.high %v2037, %v2037
        %v2046 = vcombine.high %v2044, %v2044
        %v2048 = vunpack.c.l.s4 1966171168
        %v2049 = vunpack.c.0.s8 %v2048
        %v2050 = vlaneseq
        %v2051 = vshrl.u32 %v2050, 7
        %v2052 = vsub.s32 %v2049, %v2051
        %v2053 = vrot.slane %v2037, %v2052
        %v2055 = vunpack.c.l.s4 1966171168
        %v2056 = vunpack.c.0.s8 %v2055
        %v2057 = vlaneseq
        %v2058 = vshrl.u32 %v2057, 7
        %v2059 = vsub.s32 %v2056, %v2058
        %v2060 = vrot.slane %v2044, %v2059
        %v2062 = vunpack.c.l.s4 1966171168
        %v2063 = vunpack.c.0.s8 %v2062
        %v2064 = vlaneseq
        %v2065 = vshrl.u32 %v2064, 7
        %v2066 = vsub.s32 %v2063, %v2065
        %v2067 = vrot.slane %v2045, %v2066
        %v2069 = vunpack.c.l.s4 1966171168
        %v2070 = vunpack.c.0.s8 %v2069
        %v2071 = vlaneseq
        %v2072 = vshrl.u32 %v2071, 7
        %v2073 = vsub.s32 %v2070, %v2072
        %v2074 = vrot.slane %v2046, %v2073
        %v2075 = vcombine.high %v2053, %v2053
        %v2076 = vcombine.high %v2060, %v2060
        %v2077 = vcombine.high %v2067, %v2067
        %v2078 = vcombine.high %v2074, %v2074
        %2087 = vst [vmem:[%s427 + $0x2] sm:$0x1] %v2053
        %2088 = vst [vmem:[%s427 + $0xa] sm:$0x1] %v2067
        %2089 = vst [vmem:[%s427 + $0x12] sm:$0x1] %v2075
        %2090 = vst [vmem:[%s427 + $0x1a] sm:$0x1] %v2077
        %2091 = vst [vmem:[%s427 + $0x22] sm:$0x1] %v2060
        %2092 = vst [vmem:[%s427 + $0x2a] sm:$0x1] %v2074
        %2093 = vst [vmem:[%s427 + $0x32] sm:$0x1] %v2076
        %2094 = vst [vmem:[%s427 + $0x3a] sm:$0x1] %v2078
        %v2095 = vsel %vm2004, %v2026, %v1681
        %v2096 = vpack.c.bf16 %v2095, %v2095
        %2097 = vmatprep.subr.bf16.mxu0 %v802
        %2098 = vmatpush1.bf16.msra.mxu0 %v801
        %2099 = vmatprep.subr.bf16.mxu0 %v805
        %2100 = vmatpush1.bf16.msra.mxu0 %v804
        %2101 = vmatprep.subr.bf16.mxu0 %v808
        %2102 = vmatpush1.bf16.msra.mxu0 %v807
        %2103 = vmatprep.subr.bf16.mxu0 %v811
        %2104 = vmatpush1.bf16.msra.mxu0 %v810
        %2105 = vmatprep.subr.bf16.mxu0 %v814
        %2106 = vmatpush1.bf16.msra.mxu0 %v813
        %2107 = vmatprep.subr.bf16.mxu0 %v817
        %2108 = vmatpush1.bf16.msra.mxu0 %v816
        %2109 = vmatprep.subr.bf16.mxu0 %v820
        %2110 = vmatpush1.bf16.msra.mxu0 %v819
        %2111 = vmatprep.subr.bf16.mxu0 %v823
        %2112 = vmatpush1.bf16.msra.mxu0 %v822
        %2113 = vmatprep.subr.bf16.mxu0 0
        %2114 = vmatpush1.bf16.msra.mxu0 0
        %2115 = vmatprep.subr.bf16.mxu0 0
        %2116 = vmatpush1.bf16.msra.mxu0 0
        %2117 = vmatprep.subr.bf16.mxu0 0
        %2118 = vmatpush1.bf16.msra.mxu0 0
        %2119 = vmatprep.subr.bf16.mxu0 0
        %2120 = vmatpush1.bf16.msra.mxu0 0
        %2121 = vmatprep.subr.bf16.mxu0 0
        %2122 = vmatpush1.bf16.msra.mxu0 0
        %2123 = vmatprep.subr.bf16.mxu0 0
        %2124 = vmatpush1.bf16.msra.mxu0 0
        %2125 = vmatprep.subr.bf16.mxu0 0
        %2126 = vmatpush1.bf16.msra.mxu0 0
        %2127 = vmatprep.subr.bf16.mxu0 0
        %2128 = vmatpush1.bf16.msra.mxu0 0
        %2129 = vmatprep.mubr.bf16.mxu0 0
        %2130 = vmatmul.mubr.bf16.gmra.mrb[0].mxu0 %v2096
        %v2131 = vpop.f32.mrb[0].mxu0
        %v2132 = vadd.f32 0.0, %v2131
        %v2133 = vpop.f32.mrb[0].mxu0
        %v2134 = vadd.f32 0.0, %v2133
        %v2135 = vpop.f32.mrb[0].mxu0
        %v2136 = vpop.f32.mrb[0].mxu0
        %2137 = vdwg.mxu0
        %2138 = vmatprep.subr.bf16.mxu0 0
        %2139 = vmatpush1.bf16.msra.mxu0 %v803
        %2140 = vmatprep.subr.bf16.mxu0 0
        %2141 = vmatpush1.bf16.msra.mxu0 %v806
        %2142 = vmatprep.subr.bf16.mxu0 0
        %2143 = vmatpush1.bf16.msra.mxu0 %v809
        %2144 = vmatprep.subr.bf16.mxu0 0
        %2145 = vmatpush1.bf16.msra.mxu0 %v812
        %2146 = vmatprep.subr.bf16.mxu0 0
        %2147 = vmatpush1.bf16.msra.mxu0 %v815
        %2148 = vmatprep.subr.bf16.mxu0 0
        %2149 = vmatpush1.bf16.msra.mxu0 %v818
        %2150 = vmatprep.subr.bf16.mxu0 0
        %2151 = vmatpush1.bf16.msra.mxu0 %v821
        %2152 = vmatprep.subr.bf16.mxu0 0
        %2153 = vmatpush1.bf16.msra.mxu0 %v824
        %2154 = vmatprep.subr.bf16.mxu0 0
        %2155 = vmatpush1.bf16.msra.mxu0 0
        %2156 = vmatprep.subr.bf16.mxu0 0
        %2157 = vmatpush1.bf16.msra.mxu0 0
        %2158 = vmatprep.subr.bf16.mxu0 0
        %2159 = vmatpush1.bf16.msra.mxu0 0
        %2160 = vmatprep.subr.bf16.mxu0 0
        %2161 = vmatpush1.bf16.msra.mxu0 0
        %2162 = vmatprep.subr.bf16.mxu0 0
        %2163 = vmatpush1.bf16.msra.mxu0 0
        %2164 = vmatprep.subr.bf16.mxu0 0
        %2165 = vmatpush1.bf16.msra.mxu0 0
        %2166 = vmatprep.subr.bf16.mxu0 0
        %2167 = vmatpush1.bf16.msra.mxu0 0
        %2168 = vmatprep.subr.bf16.mxu0 0
        %2169 = vmatpush1.bf16.msra.mxu0 0
        %2170 = vmatprep.mubr.bf16.mxu0 0
        %2171 = vmatmul.mubr.bf16.gmra.mrb[0].mxu0 %v2096
        %v2172 = vpop.f32.mrb[0].mxu0
        %v2173 = vadd.f32 0.0, %v2172
        %v2174 = vpop.f32.mrb[0].mxu0
        %v2175 = vpop.f32.mrb[0].mxu0
        %v2176 = vpop.f32.mrb[0].mxu0
        %2177 = vdwg.mxu0
        %v2179 = vrot.slane %v2132, 5
        %v2180 = vrot.slane %v2132, 6
        %v2181 = vrot.slane %v2132, 7
        %v2182 = vrot.slane %v2132, 1
        %v2183 = vrot.slane %v2132, 2
        %v2184 = vrot.slane %v2132, 3
        %v2185 = vrot.slane %v2132, 4
        %v2194 = vadd.f32 %v577, %v2179
        %v2195 = vadd.f32 %v581, %v2180
        %v2196 = vadd.f32 %v587, %v2181
        %v2197 = vadd.f32 %v591, %v2132
        %v2198 = vadd.f32 %v597, %v2182
        %v2199 = vadd.f32 %v601, %v2183
        %v2200 = vadd.f32 %v607, %v2184
        %v2201 = vadd.f32 %v611, %v2185
        %v2202 = vxor.u32 %v2194, 2147483648
        %v2203 = vxor.u32 %v2195, 2147483648
        %v2204 = vxor.u32 %v2196, 2147483648
        %v2205 = vxor.u32 %v2197, 2147483648
        %v2206 = vxor.u32 %v2198, 2147483648
        %v2207 = vxor.u32 %v2199, 2147483648
        %v2208 = vxor.u32 %v2200, 2147483648
        %v2209 = vxor.u32 %v2201, 2147483648
        %v2210 = vmul.f32 %v2202, 1.442695
        %v2211 = vpow.pop %v2210
        %v2212 = vmul.f32 %v2203, 1.442695
        %v2213 = vpow.pop %v2212
        %v2214 = vmul.f32 %v2204, 1.442695
        %v2215 = vpow.pop %v2214
        %v2216 = vmul.f32 %v2205, 1.442695
        %v2217 = vpow.pop %v2216
        %v2218 = vmul.f32 %v2206, 1.442695
        %v2219 = vpow.pop %v2218
        %v2220 = vmul.f32 %v2207, 1.442695
        %v2221 = vpow.pop %v2220
        %v2222 = vmul.f32 %v2208, 1.442695
        %v2223 = vpow.pop %v2222
        %v2224 = vmul.f32 %v2209, 1.442695
        %v2225 = vpow.pop %v2224
        %v2226 = vadd.f32 %v2211, 1.0
        %v2227 = vadd.f32 %v2213, 1.0
        %v2228 = vadd.f32 %v2215, 1.0
        %v2229 = vadd.f32 %v2217, 1.0
        %v2230 = vadd.f32 %v2219, 1.0
        %v2231 = vadd.f32 %v2221, 1.0
        %v2232 = vadd.f32 %v2223, 1.0
        %v2233 = vadd.f32 %v2225, 1.0
        %v2234 = vrcp.pop %v2226
        %v2235 = vmul.f32 1.0, %v2234
        %v2236 = vrcp.pop %v2227
        %v2237 = vmul.f32 1.0, %v2236
        %v2238 = vrcp.pop %v2228
        %v2239 = vmul.f32 1.0, %v2238
        %v2240 = vrcp.pop %v2229
        %v2241 = vmul.f32 1.0, %v2240
        %v2242 = vrcp.pop %v2230
        %v2243 = vmul.f32 1.0, %v2242
        %v2244 = vrcp.pop %v2231
        %v2245 = vmul.f32 1.0, %v2244
        %v2246 = vrcp.pop %v2232
        %v2247 = vmul.f32 1.0, %v2246
        %v2248 = vrcp.pop %v2233
        %v2249 = vmul.f32 1.0, %v2248
        %v2251 = vrot.slane %v2134, 5
        %v2252 = vrot.slane %v2134, 6
        %v2253 = vrot.slane %v2134, 7
        %v2254 = vrot.slane %v2134, 1
        %v2255 = vrot.slane %v2134, 2
        %v2256 = vrot.slane %v2134, 3
        %v2257 = vrot.slane %v2134, 4
        %v2266 = vadd.f32 %v579, %v2251
        %v2267 = vadd.f32 %v583, %v2252
        %v2268 = vadd.f32 %v589, %v2253
        %v2269 = vadd.f32 %v593, %v2134
        %v2270 = vadd.f32 %v599, %v2254
        %v2271 = vadd.f32 %v603, %v2255
        %v2272 = vadd.f32 %v609, %v2256
        %v2273 = vadd.f32 %v613, %v2257
        %v2274 = vxor.u32 %v2266, 2147483648
        %v2275 = vxor.u32 %v2267, 2147483648
        %v2276 = vxor.u32 %v2268, 2147483648
        %v2277 = vxor.u32 %v2269, 2147483648
        %v2278 = vxor.u32 %v2270, 2147483648
        %v2279 = vxor.u32 %v2271, 2147483648
        %v2280 = vxor.u32 %v2272, 2147483648
        %v2281 = vxor.u32 %v2273, 2147483648
        %v2282 = vmul.f32 %v2274, 1.442695
        %v2283 = vpow.pop %v2282
        %v2284 = vmul.f32 %v2275, 1.442695
        %v2285 = vpow.pop %v2284
        %v2286 = vmul.f32 %v2276, 1.442695
        %v2287 = vpow.pop %v2286
        %v2288 = vmul.f32 %v2277, 1.442695
        %v2289 = vpow.pop %v2288
        %v2290 = vmul.f32 %v2278, 1.442695
        %v2291 = vpow.pop %v2290
        %v2292 = vmul.f32 %v2279, 1.442695
        %v2293 = vpow.pop %v2292
        %v2294 = vmul.f32 %v2280, 1.442695
        %v2295 = vpow.pop %v2294
        %v2296 = vmul.f32 %v2281, 1.442695
        %v2297 = vpow.pop %v2296
        %v2298 = vadd.f32 %v2283, 1.0
        %v2299 = vadd.f32 %v2285, 1.0
        %v2300 = vadd.f32 %v2287, 1.0
        %v2301 = vadd.f32 %v2289, 1.0
        %v2302 = vadd.f32 %v2291, 1.0
        %v2303 = vadd.f32 %v2293, 1.0
        %v2304 = vadd.f32 %v2295, 1.0
        %v2305 = vadd.f32 %v2297, 1.0
        %v2306 = vrcp.pop %v2298
        %v2307 = vmul.f32 1.0, %v2306
        %v2308 = vrcp.pop %v2299
        %v2309 = vmul.f32 1.0, %v2308
        %v2310 = vrcp.pop %v2300
        %v2311 = vmul.f32 1.0, %v2310
        %v2312 = vrcp.pop %v2301
        %v2313 = vmul.f32 1.0, %v2312
        %v2314 = vrcp.pop %v2302
        %v2315 = vmul.f32 1.0, %v2314
        %v2316 = vrcp.pop %v2303
        %v2317 = vmul.f32 1.0, %v2316
        %v2318 = vrcp.pop %v2304
        %v2319 = vmul.f32 1.0, %v2318
        %v2320 = vrcp.pop %v2305
        %v2321 = vmul.f32 1.0, %v2320
        %v2322 = vadd.f32 %v2173, %v717
        %v2324 = vrot.slane %v2322, 5
        %v2325 = vrot.slane %v2322, 6
        %v2326 = vrot.slane %v2322, 7
        %v2327 = vrot.slane %v2322, 1
        %v2328 = vrot.slane %v2322, 2
        %v2329 = vrot.slane %v2322, 3
        %v2330 = vrot.slane %v2322, 4
        %v2339 = vmul.f32 %v2235, %v2324
        %v2340 = vmul.f32 %v2237, %v2325
        %v2341 = vmul.f32 %v2239, %v2326
        %v2342 = vmul.f32 %v2241, %v2322
        %v2343 = vmul.f32 %v2243, %v2327
        %v2344 = vmul.f32 %v2245, %v2328
        %v2345 = vmul.f32 %v2247, %v2329
        %v2346 = vmul.f32 %v2249, %v2330
        %v2347 = vadd.f32 %v650, %v2339
        %v2348 = vadd.f32 %v653, %v2340
        %v2349 = vadd.f32 %v658, %v2341
        %v2350 = vadd.f32 %v661, %v2342
        %v2351 = vadd.f32 %v666, %v2343
        %v2352 = vadd.f32 %v669, %v2344
        %v2353 = vadd.f32 %v674, %v2345
        %v2354 = vadd.f32 %v677, %v2346
        %v2355 = vtanh.pop %v2347
        %v2356 = vtanh.pop %v2348
        %v2357 = vtanh.pop %v2349
        %v2358 = vtanh.pop %v2350
        %v2359 = vtanh.pop %v2351
        %v2360 = vtanh.pop %v2352
        %v2361 = vtanh.pop %v2353
        %v2362 = vtanh.pop %v2354
        %v2363 = vsub.f32 1.0, %v2307
        %v2364 = vsub.f32 1.0, %v2309
        %v2365 = vsub.f32 1.0, %v2311
        %v2366 = vsub.f32 1.0, %v2313
        %v2367 = vsub.f32 1.0, %v2315
        %v2368 = vsub.f32 1.0, %v2317
        %v2369 = vsub.f32 1.0, %v2319
        %v2370 = vsub.f32 1.0, %v2321
        %v2371 = vmul.f32 %v2363, %v2355
        %v2372 = vmul.f32 %v2364, %v2356
        %v2373 = vmul.f32 %v2365, %v2357
        %v2374 = vmul.f32 %v2366, %v2358
        %v2375 = vmul.f32 %v2367, %v2359
        %v2376 = vmul.f32 %v2368, %v2360
        %v2377 = vmul.f32 %v2369, %v2361
        %v2378 = vmul.f32 %v2370, %v2362
        %v2380 = vrot.slane %v2095, 5
        %v2381 = vrot.slane %v2095, 6
        %v2382 = vrot.slane %v2095, 7
        %v2383 = vrot.slane %v2095, 1
        %v2384 = vrot.slane %v2095, 2
        %v2385 = vrot.slane %v2095, 3
        %v2386 = vrot.slane %v2095, 4
        %v2395 = vmul.f32 %v2307, %v2380
        %v2396 = vmul.f32 %v2309, %v2381
        %v2397 = vmul.f32 %v2311, %v2382
        %v2398 = vmul.f32 %v2313, %v2095
        %v2399 = vmul.f32 %v2315, %v2383
        %v2400 = vmul.f32 %v2317, %v2384
        %v2401 = vmul.f32 %v2319, %v2385
        %v2402 = vmul.f32 %v2321, %v2386
        %v2403 = vadd.f32 %v2371, %v2395
        %v2404 = vadd.f32 %v2372, %v2396
        %v2405 = vadd.f32 %v2373, %v2397
        %v2406 = vadd.f32 %v2374, %v2398
        %v2407 = vadd.f32 %v2375, %v2399
        %v2408 = vadd.f32 %v2376, %v2400
        %v2409 = vadd.f32 %v2377, %v2401
        %v2410 = vadd.f32 %v2378, %v2402
        %s2411 = sadd.s32 %s443, 3
        %v2412 = vstv %s2411
        %vm2413 = vcmp.lt.s32.totalorder %v2412, %v442
        %v2414 = vsel %vm2413, 1, 0
        %2415 = vset.pattern.permute.xlu0 0
        %2416 = vperm.xlu0 %2415, %v2414
        %v2417 = vpop.permute.xlu0 %2416
        %vm2418 = vcmp.eq.s32.totalorder %v2417, 1
        %v2427 = vrot.slane %v2403, 3
        %v2428 = vrot.slane %v2404, 2
        %v2429 = vsel %vm1179, %v2428, %v2427
        %v2430 = vrot.slane %v2405, 1
        %v2431 = vsel %vm1182, %v2430, %v2429
        %v2432 = vsel %vm1185, %v2406, %v2431
        %v2433 = vrot.slane %v2407, 7
        %v2434 = vsel %vm1188, %v2433, %v2432
        %v2435 = vrot.slane %v2408, 6
        %v2436 = vsel %vm1191, %v2435, %v2434
        %v2437 = vrot.slane %v2409, 5
        %v2438 = vsel %vm1194, %v2437, %v2436
        %v2439 = vrot.slane %v2410, 4
        %v2440 = vsel %vm1197, %v2439, %v2438
        %v2442 = vsel %vm2418, %v2440, 0.0
        %v2444 = vcombine.high %v2442, %v2442
        %v2446 = vunpack.c.l.s4 1966171168
        %v2447 = vunpack.c.0.s8 %v2446
        %v2448 = vlaneseq
        %v2449 = vshrl.u32 %v2448, 7
        %v2450 = vsub.s32 %v2447, %v2449
        %v2451 = vrot.slane %v2442, %v2450
        %v2453 = vunpack.c.l.s4 1966171168
        %v2454 = vunpack.c.0.s8 %v2453
        %v2455 = vlaneseq
        %v2456 = vshrl.u32 %v2455, 7
        %v2457 = vsub.s32 %v2454, %v2456
        %v2458 = vrot.slane %v2444, %v2457
        %v2459 = vcombine.high %v2451, %v2451
        %v2460 = vcombine.high %v2458, %v2458
        %v2462 = vunpack.c.l.s4 1966171168
        %v2463 = vunpack.c.0.s8 %v2462
        %v2464 = vlaneseq
        %v2465 = vshrl.u32 %v2464, 7
        %v2466 = vsub.s32 %v2463, %v2465
        %v2467 = vrot.slane %v2451, %v2466
        %v2469 = vunpack.c.l.s4 1966171168
        %v2470 = vunpack.c.0.s8 %v2469
        %v2471 = vlaneseq
        %v2472 = vshrl.u32 %v2471, 7
        %v2473 = vsub.s32 %v2470, %v2472
        %v2474 = vrot.slane %v2458, %v2473
        %v2476 = vunpack.c.l.s4 1966171168
        %v2477 = vunpack.c.0.s8 %v2476
        %v2478 = vlaneseq
        %v2479 = vshrl.u32 %v2478, 7
        %v2480 = vsub.s32 %v2477, %v2479
        %v2481 = vrot.slane %v2459, %v2480
        %v2483 = vunpack.c.l.s4 1966171168
        %v2484 = vunpack.c.0.s8 %v2483
        %v2485 = vlaneseq
        %v2486 = vshrl.u32 %v2485, 7
        %v2487 = vsub.s32 %v2484, %v2486
        %v2488 = vrot.slane %v2460, %v2487
        %v2489 = vcombine.high %v2467, %v2467
        %v2490 = vcombine.high %v2474, %v2474
        %v2491 = vcombine.high %v2481, %v2481
        %v2492 = vcombine.high %v2488, %v2488
        %2501 = vst [vmem:[%s427 + $0x3] sm:$0x1] %v2467
        %2502 = vst [vmem:[%s427 + $0xb] sm:$0x1] %v2481
        %2503 = vst [vmem:[%s427 + $0x13] sm:$0x1] %v2489
        %2504 = vst [vmem:[%s427 + $0x1b] sm:$0x1] %v2491
        %2505 = vst [vmem:[%s427 + $0x23] sm:$0x1] %v2474
        %2506 = vst [vmem:[%s427 + $0x2b] sm:$0x1] %v2488
        %2507 = vst [vmem:[%s427 + $0x33] sm:$0x1] %v2490
        %2508 = vst [vmem:[%s427 + $0x3b] sm:$0x1] %v2492
        %v2509 = vsel %vm2418, %v2440, %v2095
        %v2510 = vpack.c.bf16 %v2509, %v2509
        %2511 = vmatprep.subr.bf16.mxu0 %v802
        %2512 = vmatpush1.bf16.msra.mxu0 %v801
        %2513 = vmatprep.subr.bf16.mxu0 %v805
        %2514 = vmatpush1.bf16.msra.mxu0 %v804
        %2515 = vmatprep.subr.bf16.mxu0 %v808
        %2516 = vmatpush1.bf16.msra.mxu0 %v807
        %2517 = vmatprep.subr.bf16.mxu0 %v811
        %2518 = vmatpush1.bf16.msra.mxu0 %v810
        %2519 = vmatprep.subr.bf16.mxu0 %v814
        %2520 = vmatpush1.bf16.msra.mxu0 %v813
        %2521 = vmatprep.subr.bf16.mxu0 %v817
        %2522 = vmatpush1.bf16.msra.mxu0 %v816
        %2523 = vmatprep.subr.bf16.mxu0 %v820
        %2524 = vmatpush1.bf16.msra.mxu0 %v819
        %2525 = vmatprep.subr.bf16.mxu0 %v823
        %2526 = vmatpush1.bf16.msra.mxu0 %v822
        %2527 = vmatprep.subr.bf16.mxu0 0
        %2528 = vmatpush1.bf16.msra.mxu0 0
        %2529 = vmatprep.subr.bf16.mxu0 0
        %2530 = vmatpush1.bf16.msra.mxu0 0
        %2531 = vmatprep.subr.bf16.mxu0 0
        %2532 = vmatpush1.bf16.msra.mxu0 0
        %2533 = vmatprep.subr.bf16.mxu0 0
        %2534 = vmatpush1.bf16.msra.mxu0 0
        %2535 = vmatprep.subr.bf16.mxu0 0
        %2536 = vmatpush1.bf16.msra.mxu0 0
        %2537 = vmatprep.subr.bf16.mxu0 0
        %2538 = vmatpush1.bf16.msra.mxu0 0
        %2539 = vmatprep.subr.bf16.mxu0 0
        %2540 = vmatpush1.bf16.msra.mxu0 0
        %2541 = vmatprep.subr.bf16.mxu0 0
        %2542 = vmatpush1.bf16.msra.mxu0 0
        %2543 = vmatprep.mubr.bf16.mxu0 0
        %2544 = vmatmul.mubr.bf16.gmra.mrb[0].mxu0 %v2510
        %v2545 = vpop.f32.mrb[0].mxu0
        %v2546 = vadd.f32 0.0, %v2545
        %v2547 = vpop.f32.mrb[0].mxu0
        %v2548 = vadd.f32 0.0, %v2547
        %v2549 = vpop.f32.mrb[0].mxu0
        %v2550 = vpop.f32.mrb[0].mxu0
        %2551 = vdwg.mxu0
        %2552 = vmatprep.subr.bf16.mxu0 0
        %2553 = vmatpush1.bf16.msra.mxu0 %v803
        %2554 = vmatprep.subr.bf16.mxu0 0
        %2555 = vmatpush1.bf16.msra.mxu0 %v806
        %2556 = vmatprep.subr.bf16.mxu0 0
        %2557 = vmatpush1.bf16.msra.mxu0 %v809
        %2558 = vmatprep.subr.bf16.mxu0 0
        %2559 = vmatpush1.bf16.msra.mxu0 %v812
        %2560 = vmatprep.subr.bf16.mxu0 0
        %2561 = vmatpush1.bf16.msra.mxu0 %v815
        %2562 = vmatprep.subr.bf16.mxu0 0
        %2563 = vmatpush1.bf16.msra.mxu0 %v818
        %2564 = vmatprep.subr.bf16.mxu0 0
        %2565 = vmatpush1.bf16.msra.mxu0 %v821
        %2566 = vmatprep.subr.bf16.mxu0 0
        %2567 = vmatpush1.bf16.msra.mxu0 %v824
        %2568 = vmatprep.subr.bf16.mxu0 0
        %2569 = vmatpush1.bf16.msra.mxu0 0
        %2570 = vmatprep.subr.bf16.mxu0 0
        %2571 = vmatpush1.bf16.msra.mxu0 0
        %2572 = vmatprep.subr.bf16.mxu0 0
        %2573 = vmatpush1.bf16.msra.mxu0 0
        %2574 = vmatprep.subr.bf16.mxu0 0
        %2575 = vmatpush1.bf16.msra.mxu0 0
        %2576 = vmatprep.subr.bf16.mxu0 0
        %2577 = vmatpush1.bf16.msra.mxu0 0
        %2578 = vmatprep.subr.bf16.mxu0 0
        %2579 = vmatpush1.bf16.msra.mxu0 0
        %2580 = vmatprep.subr.bf16.mxu0 0
        %2581 = vmatpush1.bf16.msra.mxu0 0
        %2582 = vmatprep.subr.bf16.mxu0 0
        %2583 = vmatpush1.bf16.msra.mxu0 0
        %2584 = vmatprep.mubr.bf16.mxu0 0
        %2585 = vmatmul.mubr.bf16.gmra.mrb[0].mxu0 %v2510
        %v2586 = vpop.f32.mrb[0].mxu0
        %v2587 = vadd.f32 0.0, %v2586
        %v2588 = vpop.f32.mrb[0].mxu0
        %v2589 = vpop.f32.mrb[0].mxu0
        %v2590 = vpop.f32.mrb[0].mxu0
        %2591 = vdwg.mxu0
        %v2593 = vrot.slane %v2546, 4
        %v2594 = vrot.slane %v2546, 5
        %v2595 = vrot.slane %v2546, 6
        %v2596 = vrot.slane %v2546, 7
        %v2597 = vrot.slane %v2546, 1
        %v2598 = vrot.slane %v2546, 2
        %v2599 = vrot.slane %v2546, 3
        %v2608 = vadd.f32 %v577, %v2593
        %v2609 = vadd.f32 %v581, %v2594
        %v2610 = vadd.f32 %v587, %v2595
        %v2611 = vadd.f32 %v591, %v2596
        %v2612 = vadd.f32 %v597, %v2546
        %v2613 = vadd.f32 %v601, %v2597
        %v2614 = vadd.f32 %v607, %v2598
        %v2615 = vadd.f32 %v611, %v2599
        %v2616 = vxor.u32 %v2608, 2147483648
        %v2617 = vxor.u32 %v2609, 2147483648
        %v2618 = vxor.u32 %v2610, 2147483648
        %v2619 = vxor.u32 %v2611, 2147483648
        %v2620 = vxor.u32 %v2612, 2147483648
        %v2621 = vxor.u32 %v2613, 2147483648
        %v2622 = vxor.u32 %v2614, 2147483648
        %v2623 = vxor.u32 %v2615, 2147483648
        %v2624 = vmul.f32 %v2616, 1.442695
        %v2625 = vpow.pop %v2624
        %v2626 = vmul.f32 %v2617, 1.442695
        %v2627 = vpow.pop %v2626
        %v2628 = vmul.f32 %v2618, 1.442695
        %v2629 = vpow.pop %v2628
        %v2630 = vmul.f32 %v2619, 1.442695
        %v2631 = vpow.pop %v2630
        %v2632 = vmul.f32 %v2620, 1.442695
        %v2633 = vpow.pop %v2632
        %v2634 = vmul.f32 %v2621, 1.442695
        %v2635 = vpow.pop %v2634
        %v2636 = vmul.f32 %v2622, 1.442695
        %v2637 = vpow.pop %v2636
        %v2638 = vmul.f32 %v2623, 1.442695
        %v2639 = vpow.pop %v2638
        %v2640 = vadd.f32 %v2625, 1.0
        %v2641 = vadd.f32 %v2627, 1.0
        %v2642 = vadd.f32 %v2629, 1.0
        %v2643 = vadd.f32 %v2631, 1.0
        %v2644 = vadd.f32 %v2633, 1.0
        %v2645 = vadd.f32 %v2635, 1.0
        %v2646 = vadd.f32 %v2637, 1.0
        %v2647 = vadd.f32 %v2639, 1.0
        %v2648 = vrcp.pop %v2640
        %v2649 = vmul.f32 1.0, %v2648
        %v2650 = vrcp.pop %v2641
        %v2651 = vmul.f32 1.0, %v2650
        %v2652 = vrcp.pop %v2642
        %v2653 = vmul.f32 1.0, %v2652
        %v2654 = vrcp.pop %v2643
        %v2655 = vmul.f32 1.0, %v2654
        %v2656 = vrcp.pop %v2644
        %v2657 = vmul.f32 1.0, %v2656
        %v2658 = vrcp.pop %v2645
        %v2659 = vmul.f32 1.0, %v2658
        %v2660 = vrcp.pop %v2646
        %v2661 = vmul.f32 1.0, %v2660
        %v2662 = vrcp.pop %v2647
        %v2663 = vmul.f32 1.0, %v2662
        %v2665 = vrot.slane %v2548, 4
        %v2666 = vrot.slane %v2548, 5
        %v2667 = vrot.slane %v2548, 6
        %v2668 = vrot.slane %v2548, 7
        %v2669 = vrot.slane %v2548, 1
        %v2670 = vrot.slane %v2548, 2
        %v2671 = vrot.slane %v2548, 3
        %v2680 = vadd.f32 %v579, %v2665
        %v2681 = vadd.f32 %v583, %v2666
        %v2682 = vadd.f32 %v589, %v2667
        %v2683 = vadd.f32 %v593, %v2668
        %v2684 = vadd.f32 %v599, %v2548
        %v2685 = vadd.f32 %v603, %v2669
        %v2686 = vadd.f32 %v609, %v2670
        %v2687 = vadd.f32 %v613, %v2671
        %v2688 = vxor.u32 %v2680, 2147483648
        %v2689 = vxor.u32 %v2681, 2147483648
        %v2690 = vxor.u32 %v2682, 2147483648
        %v2691 = vxor.u32 %v2683, 2147483648
        %v2692 = vxor.u32 %v2684, 2147483648
        %v2693 = vxor.u32 %v2685, 2147483648
        %v2694 = vxor.u32 %v2686, 2147483648
        %v2695 = vxor.u32 %v2687, 2147483648
        %v2696 = vmul.f32 %v2688, 1.442695
        %v2697 = vpow.pop %v2696
        %v2698 = vmul.f32 %v2689, 1.442695
        %v2699 = vpow.pop %v2698
        %v2700 = vmul.f32 %v2690, 1.442695
        %v2701 = vpow.pop %v2700
        %v2702 = vmul.f32 %v2691, 1.442695
        %v2703 = vpow.pop %v2702
        %v2704 = vmul.f32 %v2692, 1.442695
        %v2705 = vpow.pop %v2704
        %v2706 = vmul.f32 %v2693, 1.442695
        %v2707 = vpow.pop %v2706
        %v2708 = vmul.f32 %v2694, 1.442695
        %v2709 = vpow.pop %v2708
        %v2710 = vmul.f32 %v2695, 1.442695
        %v2711 = vpow.pop %v2710
        %v2712 = vadd.f32 %v2697, 1.0
        %v2713 = vadd.f32 %v2699, 1.0
        %v2714 = vadd.f32 %v2701, 1.0
        %v2715 = vadd.f32 %v2703, 1.0
        %v2716 = vadd.f32 %v2705, 1.0
        %v2717 = vadd.f32 %v2707, 1.0
        %v2718 = vadd.f32 %v2709, 1.0
        %v2719 = vadd.f32 %v2711, 1.0
        %v2720 = vrcp.pop %v2712
        %v2721 = vmul.f32 1.0, %v2720
        %v2722 = vrcp.pop %v2713
        %v2723 = vmul.f32 1.0, %v2722
        %v2724 = vrcp.pop %v2714
        %v2725 = vmul.f32 1.0, %v2724
        %v2726 = vrcp.pop %v2715
        %v2727 = vmul.f32 1.0, %v2726
        %v2728 = vrcp.pop %v2716
        %v2729 = vmul.f32 1.0, %v2728
        %v2730 = vrcp.pop %v2717
        %v2731 = vmul.f32 1.0, %v2730
        %v2732 = vrcp.pop %v2718
        %v2733 = vmul.f32 1.0, %v2732
        %v2734 = vrcp.pop %v2719
        %v2735 = vmul.f32 1.0, %v2734
        %v2736 = vadd.f32 %v2587, %v717
        %v2738 = vrot.slane %v2736, 4
        %v2739 = vrot.slane %v2736, 5
        %v2740 = vrot.slane %v2736, 6
        %v2741 = vrot.slane %v2736, 7
        %v2742 = vrot.slane %v2736, 1
        %v2743 = vrot.slane %v2736, 2
        %v2744 = vrot.slane %v2736, 3
        %v2753 = vmul.f32 %v2649, %v2738
        %v2754 = vmul.f32 %v2651, %v2739
        %v2755 = vmul.f32 %v2653, %v2740
        %v2756 = vmul.f32 %v2655, %v2741
        %v2757 = vmul.f32 %v2657, %v2736
        %v2758 = vmul.f32 %v2659, %v2742
        %v2759 = vmul.f32 %v2661, %v2743
        %v2760 = vmul.f32 %v2663, %v2744
        %v2761 = vadd.f32 %v650, %v2753
        %v2762 = vadd.f32 %v653, %v2754
        %v2763 = vadd.f32 %v658, %v2755
        %v2764 = vadd.f32 %v661, %v2756
        %v2765 = vadd.f32 %v666, %v2757
        %v2766 = vadd.f32 %v669, %v2758
        %v2767 = vadd.f32 %v674, %v2759
        %v2768 = vadd.f32 %v677, %v2760
        %v2769 = vtanh.pop %v2761
        %v2770 = vtanh.pop %v2762
        %v2771 = vtanh.pop %v2763
        %v2772 = vtanh.pop %v2764
        %v2773 = vtanh.pop %v2765
        %v2774 = vtanh.pop %v2766
        %v2775 = vtanh.pop %v2767
        %v2776 = vtanh.pop %v2768
        %v2777 = vsub.f32 1.0, %v2721
        %v2778 = vsub.f32 1.0, %v2723
        %v2779 = vsub.f32 1.0, %v2725
        %v2780 = vsub.f32 1.0, %v2727
        %v2781 = vsub.f32 1.0, %v2729
        %v2782 = vsub.f32 1.0, %v2731
        %v2783 = vsub.f32 1.0, %v2733
        %v2784 = vsub.f32 1.0, %v2735
        %v2785 = vmul.f32 %v2777, %v2769
        %v2786 = vmul.f32 %v2778, %v2770
        %v2787 = vmul.f32 %v2779, %v2771
        %v2788 = vmul.f32 %v2780, %v2772
        %v2789 = vmul.f32 %v2781, %v2773
        %v2790 = vmul.f32 %v2782, %v2774
        %v2791 = vmul.f32 %v2783, %v2775
        %v2792 = vmul.f32 %v2784, %v2776
        %v2794 = vrot.slane %v2509, 4
        %v2795 = vrot.slane %v2509, 5
        %v2796 = vrot.slane %v2509, 6
        %v2797 = vrot.slane %v2509, 7
        %v2798 = vrot.slane %v2509, 1
        %v2799 = vrot.slane %v2509, 2
        %v2800 = vrot.slane %v2509, 3
        %v2809 = vmul.f32 %v2721, %v2794
        %v2810 = vmul.f32 %v2723, %v2795
        %v2811 = vmul.f32 %v2725, %v2796
        %v2812 = vmul.f32 %v2727, %v2797
        %v2813 = vmul.f32 %v2729, %v2509
        %v2814 = vmul.f32 %v2731, %v2798
        %v2815 = vmul.f32 %v2733, %v2799
        %v2816 = vmul.f32 %v2735, %v2800
        %v2817 = vadd.f32 %v2785, %v2809
        %v2818 = vadd.f32 %v2786, %v2810
        %v2819 = vadd.f32 %v2787, %v2811
        %v2820 = vadd.f32 %v2788, %v2812
        %v2821 = vadd.f32 %v2789, %v2813
        %v2822 = vadd.f32 %v2790, %v2814
        %v2823 = vadd.f32 %v2791, %v2815
        %v2824 = vadd.f32 %v2792, %v2816
        %s2825 = sadd.s32 %s443, 4
        %v2826 = vstv %s2825
        %vm2827 = vcmp.lt.s32.totalorder %v2826, %v442
        %v2828 = vsel %vm2827, 1, 0
        %2829 = vset.pattern.permute.xlu0 0
        %2830 = vperm.xlu0 %2829, %v2828
        %v2831 = vpop.permute.xlu0 %2830
        %vm2832 = vcmp.eq.s32.totalorder %v2831, 1
        %v2841 = vrot.slane %v2817, 4
        %v2842 = vrot.slane %v2818, 3
        %v2843 = vsel %vm1179, %v2842, %v2841
        %v2844 = vrot.slane %v2819, 2
        %v2845 = vsel %vm1182, %v2844, %v2843
        %v2846 = vrot.slane %v2820, 1
        %v2847 = vsel %vm1185, %v2846, %v2845
        %v2848 = vsel %vm1188, %v2821, %v2847
        %v2849 = vrot.slane %v2822, 7
        %v2850 = vsel %vm1191, %v2849, %v2848
        %v2851 = vrot.slane %v2823, 6
        %v2852 = vsel %vm1194, %v2851, %v2850
        %v2853 = vrot.slane %v2824, 5
        %v2854 = vsel %vm1197, %v2853, %v2852
        %v2856 = vsel %vm2832, %v2854, 0.0
        %v2858 = vcombine.high %v2856, %v2856
        %v2860 = vunpack.c.l.s4 1966171168
        %v2861 = vunpack.c.0.s8 %v2860
        %v2862 = vlaneseq
        %v2863 = vshrl.u32 %v2862, 7
        %v2864 = vsub.s32 %v2861, %v2863
        %v2865 = vrot.slane %v2856, %v2864
        %v2867 = vunpack.c.l.s4 1966171168
        %v2868 = vunpack.c.0.s8 %v2867
        %v2869 = vlaneseq
        %v2870 = vshrl.u32 %v2869, 7
        %v2871 = vsub.s32 %v2868, %v2870
        %v2872 = vrot.slane %v2858, %v2871
        %v2873 = vcombine.high %v2865, %v2865
        %v2874 = vcombine.high %v2872, %v2872
        %v2876 = vunpack.c.l.s4 1966171168
        %v2877 = vunpack.c.0.s8 %v2876
        %v2878 = vlaneseq
        %v2879 = vshrl.u32 %v2878, 7
        %v2880 = vsub.s32 %v2877, %v2879
        %v2881 = vrot.slane %v2865, %v2880
        %v2883 = vunpack.c.l.s4 1966171168
        %v2884 = vunpack.c.0.s8 %v2883
        %v2885 = vlaneseq
        %v2886 = vshrl.u32 %v2885, 7
        %v2887 = vsub.s32 %v2884, %v2886
        %v2888 = vrot.slane %v2872, %v2887
        %v2890 = vunpack.c.l.s4 1966171168
        %v2891 = vunpack.c.0.s8 %v2890
        %v2892 = vlaneseq
        %v2893 = vshrl.u32 %v2892, 7
        %v2894 = vsub.s32 %v2891, %v2893
        %v2895 = vrot.slane %v2873, %v2894
        %v2897 = vunpack.c.l.s4 1966171168
        %v2898 = vunpack.c.0.s8 %v2897
        %v2899 = vlaneseq
        %v2900 = vshrl.u32 %v2899, 7
        %v2901 = vsub.s32 %v2898, %v2900
        %v2902 = vrot.slane %v2874, %v2901
        %v2903 = vcombine.high %v2881, %v2881
        %v2904 = vcombine.high %v2888, %v2888
        %v2905 = vcombine.high %v2895, %v2895
        %v2906 = vcombine.high %v2902, %v2902
        %2915 = vst [vmem:[%s427 + $0x4] sm:$0x1] %v2881
        %2916 = vst [vmem:[%s427 + $0xc] sm:$0x1] %v2895
        %2917 = vst [vmem:[%s427 + $0x14] sm:$0x1] %v2903
        %2918 = vst [vmem:[%s427 + $0x1c] sm:$0x1] %v2905
        %2919 = vst [vmem:[%s427 + $0x24] sm:$0x1] %v2888
        %2920 = vst [vmem:[%s427 + $0x2c] sm:$0x1] %v2902
        %2921 = vst [vmem:[%s427 + $0x34] sm:$0x1] %v2904
        %2922 = vst [vmem:[%s427 + $0x3c] sm:$0x1] %v2906
        %v2923 = vsel %vm2832, %v2854, %v2509
        %v2924 = vpack.c.bf16 %v2923, %v2923
        %2925 = vmatprep.subr.bf16.mxu0 %v802
        %2926 = vmatpush1.bf16.msra.mxu0 %v801
        %2927 = vmatprep.subr.bf16.mxu0 %v805
        %2928 = vmatpush1.bf16.msra.mxu0 %v804
        %2929 = vmatprep.subr.bf16.mxu0 %v808
        %2930 = vmatpush1.bf16.msra.mxu0 %v807
        %2931 = vmatprep.subr.bf16.mxu0 %v811
        %2932 = vmatpush1.bf16.msra.mxu0 %v810
        %2933 = vmatprep.subr.bf16.mxu0 %v814
        %2934 = vmatpush1.bf16.msra.mxu0 %v813
        %2935 = vmatprep.subr.bf16.mxu0 %v817
        %2936 = vmatpush1.bf16.msra.mxu0 %v816
        %2937 = vmatprep.subr.bf16.mxu0 %v820
        %2938 = vmatpush1.bf16.msra.mxu0 %v819
        %2939 = vmatprep.subr.bf16.mxu0 %v823
        %2940 = vmatpush1.bf16.msra.mxu0 %v822
        %2941 = vmatprep.subr.bf16.mxu0 0
        %2942 = vmatpush1.bf16.msra.mxu0 0
        %2943 = vmatprep.subr.bf16.mxu0 0
        %2944 = vmatpush1.bf16.msra.mxu0 0
        %2945 = vmatprep.subr.bf16.mxu0 0
        %2946 = vmatpush1.bf16.msra.mxu0 0
        %2947 = vmatprep.subr.bf16.mxu0 0
        %2948 = vmatpush1.bf16.msra.mxu0 0
        %2949 = vmatprep.subr.bf16.mxu0 0
        %2950 = vmatpush1.bf16.msra.mxu0 0
        %2951 = vmatprep.subr.bf16.mxu0 0
        %2952 = vmatpush1.bf16.msra.mxu0 0
        %2953 = vmatprep.subr.bf16.mxu0 0
        %2954 = vmatpush1.bf16.msra.mxu0 0
        %2955 = vmatprep.subr.bf16.mxu0 0
        %2956 = vmatpush1.bf16.msra.mxu0 0
        %2957 = vmatprep.mubr.bf16.mxu0 0
        %2958 = vmatmul.mubr.bf16.gmra.mrb[0].mxu0 %v2924
        %v2959 = vpop.f32.mrb[0].mxu0
        %v2960 = vadd.f32 0.0, %v2959
        %v2961 = vpop.f32.mrb[0].mxu0
        %v2962 = vadd.f32 0.0, %v2961
        %v2963 = vpop.f32.mrb[0].mxu0
        %v2964 = vpop.f32.mrb[0].mxu0
        %2965 = vdwg.mxu0
        %2966 = vmatprep.subr.bf16.mxu0 0
        %2967 = vmatpush1.bf16.msra.mxu0 %v803
        %2968 = vmatprep.subr.bf16.mxu0 0
        %2969 = vmatpush1.bf16.msra.mxu0 %v806
        %2970 = vmatprep.subr.bf16.mxu0 0
        %2971 = vmatpush1.bf16.msra.mxu0 %v809
        %2972 = vmatprep.subr.bf16.mxu0 0
        %2973 = vmatpush1.bf16.msra.mxu0 %v812
        %2974 = vmatprep.subr.bf16.mxu0 0
        %2975 = vmatpush1.bf16.msra.mxu0 %v815
        %2976 = vmatprep.subr.bf16.mxu0 0
        %2977 = vmatpush1.bf16.msra.mxu0 %v818
        %2978 = vmatprep.subr.bf16.mxu0 0
        %2979 = vmatpush1.bf16.msra.mxu0 %v821
        %2980 = vmatprep.subr.bf16.mxu0 0
        %2981 = vmatpush1.bf16.msra.mxu0 %v824
        %2982 = vmatprep.subr.bf16.mxu0 0
        %2983 = vmatpush1.bf16.msra.mxu0 0
        %2984 = vmatprep.subr.bf16.mxu0 0
        %2985 = vmatpush1.bf16.msra.mxu0 0
        %2986 = vmatprep.subr.bf16.mxu0 0
        %2987 = vmatpush1.bf16.msra.mxu0 0
        %2988 = vmatprep.subr.bf16.mxu0 0
        %2989 = vmatpush1.bf16.msra.mxu0 0
        %2990 = vmatprep.subr.bf16.mxu0 0
        %2991 = vmatpush1.bf16.msra.mxu0 0
        %2992 = vmatprep.subr.bf16.mxu0 0
        %2993 = vmatpush1.bf16.msra.mxu0 0
        %2994 = vmatprep.subr.bf16.mxu0 0
        %2995 = vmatpush1.bf16.msra.mxu0 0
        %2996 = vmatprep.subr.bf16.mxu0 0
        %2997 = vmatpush1.bf16.msra.mxu0 0
        %2998 = vmatprep.mubr.bf16.mxu0 0
        %2999 = vmatmul.mubr.bf16.gmra.mrb[0].mxu0 %v2924
        %v3000 = vpop.f32.mrb[0].mxu0
        %v3001 = vadd.f32 0.0, %v3000
        %v3002 = vpop.f32.mrb[0].mxu0
        %v3003 = vpop.f32.mrb[0].mxu0
        %v3004 = vpop.f32.mrb[0].mxu0
        %3005 = vdwg.mxu0
        %v3007 = vrot.slane %v2960, 3
        %v3008 = vrot.slane %v2960, 4
        %v3009 = vrot.slane %v2960, 5
        %v3010 = vrot.slane %v2960, 6
        %v3011 = vrot.slane %v2960, 7
        %v3012 = vrot.slane %v2960, 1
        %v3013 = vrot.slane %v2960, 2
        %v3022 = vadd.f32 %v577, %v3007
        %v3023 = vadd.f32 %v581, %v3008
        %v3024 = vadd.f32 %v587, %v3009
        %v3025 = vadd.f32 %v591, %v3010
        %v3026 = vadd.f32 %v597, %v3011
        %v3027 = vadd.f32 %v601, %v2960
        %v3028 = vadd.f32 %v607, %v3012
        %v3029 = vadd.f32 %v611, %v3013
        %v3030 = vxor.u32 %v3022, 2147483648
        %v3031 = vxor.u32 %v3023, 2147483648
        %v3032 = vxor.u32 %v3024, 2147483648
        %v3033 = vxor.u32 %v3025, 2147483648
        %v3034 = vxor.u32 %v3026, 2147483648
        %v3035 = vxor.u32 %v3027, 2147483648
        %v3036 = vxor.u32 %v3028, 2147483648
        %v3037 = vxor.u32 %v3029, 2147483648
        %v3038 = vmul.f32 %v3030, 1.442695
        %v3039 = vpow.pop %v3038
        %v3040 = vmul.f32 %v3031, 1.442695
        %v3041 = vpow.pop %v3040
        %v3042 = vmul.f32 %v3032, 1.442695
        %v3043 = vpow.pop %v3042
        %v3044 = vmul.f32 %v3033, 1.442695
        %v3045 = vpow.pop %v3044
        %v3046 = vmul.f32 %v3034, 1.442695
        %v3047 = vpow.pop %v3046
        %v3048 = vmul.f32 %v3035, 1.442695
        %v3049 = vpow.pop %v3048
        %v3050 = vmul.f32 %v3036, 1.442695
        %v3051 = vpow.pop %v3050
        %v3052 = vmul.f32 %v3037, 1.442695
        %v3053 = vpow.pop %v3052
        %v3054 = vadd.f32 %v3039, 1.0
        %v3055 = vadd.f32 %v3041, 1.0
        %v3056 = vadd.f32 %v3043, 1.0
        %v3057 = vadd.f32 %v3045, 1.0
        %v3058 = vadd.f32 %v3047, 1.0
        %v3059 = vadd.f32 %v3049, 1.0
        %v3060 = vadd.f32 %v3051, 1.0
        %v3061 = vadd.f32 %v3053, 1.0
        %v3062 = vrcp.pop %v3054
        %v3063 = vmul.f32 1.0, %v3062
        %v3064 = vrcp.pop %v3055
        %v3065 = vmul.f32 1.0, %v3064
        %v3066 = vrcp.pop %v3056
        %v3067 = vmul.f32 1.0, %v3066
        %v3068 = vrcp.pop %v3057
        %v3069 = vmul.f32 1.0, %v3068
        %v3070 = vrcp.pop %v3058
        %v3071 = vmul.f32 1.0, %v3070
        %v3072 = vrcp.pop %v3059
        %v3073 = vmul.f32 1.0, %v3072
        %v3074 = vrcp.pop %v3060
        %v3075 = vmul.f32 1.0, %v3074
        %v3076 = vrcp.pop %v3061
        %v3077 = vmul.f32 1.0, %v3076
        %v3079 = vrot.slane %v2962, 3
        %v3080 = vrot.slane %v2962, 4
        %v3081 = vrot.slane %v2962, 5
        %v3082 = vrot.slane %v2962, 6
        %v3083 = vrot.slane %v2962, 7
        %v3084 = vrot.slane %v2962, 1
        %v3085 = vrot.slane %v2962, 2
        %v3094 = vadd.f32 %v579, %v3079
        %v3095 = vadd.f32 %v583, %v3080
        %v3096 = vadd.f32 %v589, %v3081
        %v3097 = vadd.f32 %v593, %v3082
        %v3098 = vadd.f32 %v599, %v3083
        %v3099 = vadd.f32 %v603, %v2962
        %v3100 = vadd.f32 %v609, %v3084
        %v3101 = vadd.f32 %v613, %v3085
        %v3102 = vxor.u32 %v3094, 2147483648
        %v3103 = vxor.u32 %v3095, 2147483648
        %v3104 = vxor.u32 %v3096, 2147483648
        %v3105 = vxor.u32 %v3097, 2147483648
        %v3106 = vxor.u32 %v3098, 2147483648
        %v3107 = vxor.u32 %v3099, 2147483648
        %v3108 = vxor.u32 %v3100, 2147483648
        %v3109 = vxor.u32 %v3101, 2147483648
        %v3110 = vmul.f32 %v3102, 1.442695
        %v3111 = vpow.pop %v3110
        %v3112 = vmul.f32 %v3103, 1.442695
        %v3113 = vpow.pop %v3112
        %v3114 = vmul.f32 %v3104, 1.442695
        %v3115 = vpow.pop %v3114
        %v3116 = vmul.f32 %v3105, 1.442695
        %v3117 = vpow.pop %v3116
        %v3118 = vmul.f32 %v3106, 1.442695
        %v3119 = vpow.pop %v3118
        %v3120 = vmul.f32 %v3107, 1.442695
        %v3121 = vpow.pop %v3120
        %v3122 = vmul.f32 %v3108, 1.442695
        %v3123 = vpow.pop %v3122
        %v3124 = vmul.f32 %v3109, 1.442695
        %v3125 = vpow.pop %v3124
        %v3126 = vadd.f32 %v3111, 1.0
        %v3127 = vadd.f32 %v3113, 1.0
        %v3128 = vadd.f32 %v3115, 1.0
        %v3129 = vadd.f32 %v3117, 1.0
        %v3130 = vadd.f32 %v3119, 1.0
        %v3131 = vadd.f32 %v3121, 1.0
        %v3132 = vadd.f32 %v3123, 1.0
        %v3133 = vadd.f32 %v3125, 1.0
        %v3134 = vrcp.pop %v3126
        %v3135 = vmul.f32 1.0, %v3134
        %v3136 = vrcp.pop %v3127
        %v3137 = vmul.f32 1.0, %v3136
        %v3138 = vrcp.pop %v3128
        %v3139 = vmul.f32 1.0, %v3138
        %v3140 = vrcp.pop %v3129
        %v3141 = vmul.f32 1.0, %v3140
        %v3142 = vrcp.pop %v3130
        %v3143 = vmul.f32 1.0, %v3142
        %v3144 = vrcp.pop %v3131
        %v3145 = vmul.f32 1.0, %v3144
        %v3146 = vrcp.pop %v3132
        %v3147 = vmul.f32 1.0, %v3146
        %v3148 = vrcp.pop %v3133
        %v3149 = vmul.f32 1.0, %v3148
        %v3150 = vadd.f32 %v3001, %v717
        %v3152 = vrot.slane %v3150, 3
        %v3153 = vrot.slane %v3150, 4
        %v3154 = vrot.slane %v3150, 5
        %v3155 = vrot.slane %v3150, 6
        %v3156 = vrot.slane %v3150, 7
        %v3157 = vrot.slane %v3150, 1
        %v3158 = vrot.slane %v3150, 2
        %v3167 = vmul.f32 %v3063, %v3152
        %v3168 = vmul.f32 %v3065, %v3153
        %v3169 = vmul.f32 %v3067, %v3154
        %v3170 = vmul.f32 %v3069, %v3155
        %v3171 = vmul.f32 %v3071, %v3156
        %v3172 = vmul.f32 %v3073, %v3150
        %v3173 = vmul.f32 %v3075, %v3157
        %v3174 = vmul.f32 %v3077, %v3158
        %v3175 = vadd.f32 %v650, %v3167
        %v3176 = vadd.f32 %v653, %v3168
        %v3177 = vadd.f32 %v658, %v3169
        %v3178 = vadd.f32 %v661, %v3170
        %v3179 = vadd.f32 %v666, %v3171
        %v3180 = vadd.f32 %v669, %v3172
        %v3181 = vadd.f32 %v674, %v3173
        %v3182 = vadd.f32 %v677, %v3174
        %v3183 = vtanh.pop %v3175
        %v3184 = vtanh.pop %v3176
        %v3185 = vtanh.pop %v3177
        %v3186 = vtanh.pop %v3178
        %v3187 = vtanh.pop %v3179
        %v3188 = vtanh.pop %v3180
        %v3189 = vtanh.pop %v3181
        %v3190 = vtanh.pop %v3182
        %v3191 = vsub.f32 1.0, %v3135
        %v3192 = vsub.f32 1.0, %v3137
        %v3193 = vsub.f32 1.0, %v3139
        %v3194 = vsub.f32 1.0, %v3141
        %v3195 = vsub.f32 1.0, %v3143
        %v3196 = vsub.f32 1.0, %v3145
        %v3197 = vsub.f32 1.0, %v3147
        %v3198 = vsub.f32 1.0, %v3149
        %v3199 = vmul.f32 %v3191, %v3183
        %v3200 = vmul.f32 %v3192, %v3184
        %v3201 = vmul.f32 %v3193, %v3185
        %v3202 = vmul.f32 %v3194, %v3186
        %v3203 = vmul.f32 %v3195, %v3187
        %v3204 = vmul.f32 %v3196, %v3188
        %v3205 = vmul.f32 %v3197, %v3189
        %v3206 = vmul.f32 %v3198, %v3190
        %v3208 = vrot.slane %v2923, 3
        %v3209 = vrot.slane %v2923, 4
        %v3210 = vrot.slane %v2923, 5
        %v3211 = vrot.slane %v2923, 6
        %v3212 = vrot.slane %v2923, 7
        %v3213 = vrot.slane %v2923, 1
        %v3214 = vrot.slane %v2923, 2
        %v3223 = vmul.f32 %v3135, %v3208
        %v3224 = vmul.f32 %v3137, %v3209
        %v3225 = vmul.f32 %v3139, %v3210
        %v3226 = vmul.f32 %v3141, %v3211
        %v3227 = vmul.f32 %v3143, %v3212
        %v3228 = vmul.f32 %v3145, %v2923
        %v3229 = vmul.f32 %v3147, %v3213
        %v3230 = vmul.f32 %v3149, %v3214
        %v3231 = vadd.f32 %v3199, %v3223
        %v3232 = vadd.f32 %v3200, %v3224
        %v3233 = vadd.f32 %v3201, %v3225
        %v3234 = vadd.f32 %v3202, %v3226
        %v3235 = vadd.f32 %v3203, %v3227
        %v3236 = vadd.f32 %v3204, %v3228
        %v3237 = vadd.f32 %v3205, %v3229
        %v3238 = vadd.f32 %v3206, %v3230
        %s3239 = sadd.s32 %s443, 5
        %v3240 = vstv %s3239
        %vm3241 = vcmp.lt.s32.totalorder %v3240, %v442
        %v3242 = vsel %vm3241, 1, 0
        %3243 = vset.pattern.permute.xlu0 0
        %3244 = vperm.xlu0 %3243, %v3242
        %v3245 = vpop.permute.xlu0 %3244
        %vm3246 = vcmp.eq.s32.totalorder %v3245, 1
        %v3255 = vrot.slane %v3231, 5
        %v3256 = vrot.slane %v3232, 4
        %v3257 = vsel %vm1179, %v3256, %v3255
        %v3258 = vrot.slane %v3233, 3
        %v3259 = vsel %vm1182, %v3258, %v3257
        %v3260 = vrot.slane %v3234, 2
        %v3261 = vsel %vm1185, %v3260, %v3259
        %v3262 = vrot.slane %v3235, 1
        %v3263 = vsel %vm1188, %v3262, %v3261
        %v3264 = vsel %vm1191, %v3236, %v3263
        %v3265 = vrot.slane %v3237, 7
        %v3266 = vsel %vm1194, %v3265, %v3264
        %v3267 = vrot.slane %v3238, 6
        %v3268 = vsel %vm1197, %v3267, %v3266
        %v3270 = vsel %vm3246, %v3268, 0.0
        %v3272 = vcombine.high %v3270, %v3270
        %v3274 = vunpack.c.l.s4 1966171168
        %v3275 = vunpack.c.0.s8 %v3274
        %v3276 = vlaneseq
        %v3277 = vshrl.u32 %v3276, 7
        %v3278 = vsub.s32 %v3275, %v3277
        %v3279 = vrot.slane %v3270, %v3278
        %v3281 = vunpack.c.l.s4 1966171168
        %v3282 = vunpack.c.0.s8 %v3281
        %v3283 = vlaneseq
        %v3284 = vshrl.u32 %v3283, 7
        %v3285 = vsub.s32 %v3282, %v3284
        %v3286 = vrot.slane %v3272, %v3285
        %v3287 = vcombine.high %v3279, %v3279
        %v3288 = vcombine.high %v3286, %v3286
        %v3290 = vunpack.c.l.s4 1966171168
        %v3291 = vunpack.c.0.s8 %v3290
        %v3292 = vlaneseq
        %v3293 = vshrl.u32 %v3292, 7
        %v3294 = vsub.s32 %v3291, %v3293
        %v3295 = vrot.slane %v3279, %v3294
        %v3297 = vunpack.c.l.s4 1966171168
        %v3298 = vunpack.c.0.s8 %v3297
        %v3299 = vlaneseq
        %v3300 = vshrl.u32 %v3299, 7
        %v3301 = vsub.s32 %v3298, %v3300
        %v3302 = vrot.slane %v3286, %v3301
        %v3304 = vunpack.c.l.s4 1966171168
        %v3305 = vunpack.c.0.s8 %v3304
        %v3306 = vlaneseq
        %v3307 = vshrl.u32 %v3306, 7
        %v3308 = vsub.s32 %v3305, %v3307
        %v3309 = vrot.slane %v3287, %v3308
        %v3311 = vunpack.c.l.s4 1966171168
        %v3312 = vunpack.c.0.s8 %v3311
        %v3313 = vlaneseq
        %v3314 = vshrl.u32 %v3313, 7
        %v3315 = vsub.s32 %v3312, %v3314
        %v3316 = vrot.slane %v3288, %v3315
        %v3317 = vcombine.high %v3295, %v3295
        %v3318 = vcombine.high %v3302, %v3302
        %v3319 = vcombine.high %v3309, %v3309
        %v3320 = vcombine.high %v3316, %v3316
        %3329 = vst [vmem:[%s427 + $0x5] sm:$0x1] %v3295
        %3330 = vst [vmem:[%s427 + $0xd] sm:$0x1] %v3309
        %3331 = vst [vmem:[%s427 + $0x15] sm:$0x1] %v3317
        %3332 = vst [vmem:[%s427 + $0x1d] sm:$0x1] %v3319
        %3333 = vst [vmem:[%s427 + $0x25] sm:$0x1] %v3302
        %3334 = vst [vmem:[%s427 + $0x2d] sm:$0x1] %v3316
        %3335 = vst [vmem:[%s427 + $0x35] sm:$0x1] %v3318
        %3336 = vst [vmem:[%s427 + $0x3d] sm:$0x1] %v3320
        %v3337 = vsel %vm3246, %v3268, %v2923
        %v3338 = vpack.c.bf16 %v3337, %v3337
        %3339 = vmatprep.subr.bf16.mxu0 %v802
        %3340 = vmatpush1.bf16.msra.mxu0 %v801
        %3341 = vmatprep.subr.bf16.mxu0 %v805
        %3342 = vmatpush1.bf16.msra.mxu0 %v804
        %3343 = vmatprep.subr.bf16.mxu0 %v808
        %3344 = vmatpush1.bf16.msra.mxu0 %v807
        %3345 = vmatprep.subr.bf16.mxu0 %v811
        %3346 = vmatpush1.bf16.msra.mxu0 %v810
        %3347 = vmatprep.subr.bf16.mxu0 %v814
        %3348 = vmatpush1.bf16.msra.mxu0 %v813
        %3349 = vmatprep.subr.bf16.mxu0 %v817
        %3350 = vmatpush1.bf16.msra.mxu0 %v816
        %3351 = vmatprep.subr.bf16.mxu0 %v820
        %3352 = vmatpush1.bf16.msra.mxu0 %v819
        %3353 = vmatprep.subr.bf16.mxu0 %v823
        %3354 = vmatpush1.bf16.msra.mxu0 %v822
        %3355 = vmatprep.subr.bf16.mxu0 0
        %3356 = vmatpush1.bf16.msra.mxu0 0
        %3357 = vmatprep.subr.bf16.mxu0 0
        %3358 = vmatpush1.bf16.msra.mxu0 0
        %3359 = vmatprep.subr.bf16.mxu0 0
        %3360 = vmatpush1.bf16.msra.mxu0 0
        %3361 = vmatprep.subr.bf16.mxu0 0
        %3362 = vmatpush1.bf16.msra.mxu0 0
        %3363 = vmatprep.subr.bf16.mxu0 0
        %3364 = vmatpush1.bf16.msra.mxu0 0
        %3365 = vmatprep.subr.bf16.mxu0 0
        %3366 = vmatpush1.bf16.msra.mxu0 0
        %3367 = vmatprep.subr.bf16.mxu0 0
        %3368 = vmatpush1.bf16.msra.mxu0 0
        %3369 = vmatprep.subr.bf16.mxu0 0
        %3370 = vmatpush1.bf16.msra.mxu0 0
        %3371 = vmatprep.mubr.bf16.mxu0 0
        %3372 = vmatmul.mubr.bf16.gmra.mrb[0].mxu0 %v3338
        %v3373 = vpop.f32.mrb[0].mxu0
        %v3374 = vadd.f32 0.0, %v3373
        %v3375 = vpop.f32.mrb[0].mxu0
        %v3376 = vadd.f32 0.0, %v3375
        %v3377 = vpop.f32.mrb[0].mxu0
        %v3378 = vpop.f32.mrb[0].mxu0
        %3379 = vdwg.mxu0
        %3380 = vmatprep.subr.bf16.mxu0 0
        %3381 = vmatpush1.bf16.msra.mxu0 %v803
        %3382 = vmatprep.subr.bf16.mxu0 0
        %3383 = vmatpush1.bf16.msra.mxu0 %v806
        %3384 = vmatprep.subr.bf16.mxu0 0
        %3385 = vmatpush1.bf16.msra.mxu0 %v809
        %3386 = vmatprep.subr.bf16.mxu0 0
        %3387 = vmatpush1.bf16.msra.mxu0 %v812
        %3388 = vmatprep.subr.bf16.mxu0 0
        %3389 = vmatpush1.bf16.msra.mxu0 %v815
        %3390 = vmatprep.subr.bf16.mxu0 0
        %3391 = vmatpush1.bf16.msra.mxu0 %v818
        %3392 = vmatprep.subr.bf16.mxu0 0
        %3393 = vmatpush1.bf16.msra.mxu0 %v821
        %3394 = vmatprep.subr.bf16.mxu0 0
        %3395 = vmatpush1.bf16.msra.mxu0 %v824
        %3396 = vmatprep.subr.bf16.mxu0 0
        %3397 = vmatpush1.bf16.msra.mxu0 0
        %3398 = vmatprep.subr.bf16.mxu0 0
        %3399 = vmatpush1.bf16.msra.mxu0 0
        %3400 = vmatprep.subr.bf16.mxu0 0
        %3401 = vmatpush1.bf16.msra.mxu0 0
        %3402 = vmatprep.subr.bf16.mxu0 0
        %3403 = vmatpush1.bf16.msra.mxu0 0
        %3404 = vmatprep.subr.bf16.mxu0 0
        %3405 = vmatpush1.bf16.msra.mxu0 0
        %3406 = vmatprep.subr.bf16.mxu0 0
        %3407 = vmatpush1.bf16.msra.mxu0 0
        %3408 = vmatprep.subr.bf16.mxu0 0
        %3409 = vmatpush1.bf16.msra.mxu0 0
        %3410 = vmatprep.subr.bf16.mxu0 0
        %3411 = vmatpush1.bf16.msra.mxu0 0
        %3412 = vmatprep.mubr.bf16.mxu0 0
        %3413 = vmatmul.mubr.bf16.gmra.mrb[0].mxu0 %v3338
        %v3414 = vpop.f32.mrb[0].mxu0
        %v3415 = vadd.f32 0.0, %v3414
        %v3416 = vpop.f32.mrb[0].mxu0
        %v3417 = vpop.f32.mrb[0].mxu0
        %v3418 = vpop.f32.mrb[0].mxu0
        %3419 = vdwg.mxu0
        %v3421 = vrot.slane %v3374, 2
        %v3422 = vrot.slane %v3374, 3
        %v3423 = vrot.slane %v3374, 4
        %v3424 = vrot.slane %v3374, 5
        %v3425 = vrot.slane %v3374, 6
        %v3426 = vrot.slane %v3374, 7
        %v3427 = vrot.slane %v3374, 1
        %v3436 = vadd.f32 %v577, %v3421
        %v3437 = vadd.f32 %v581, %v3422
        %v3438 = vadd.f32 %v587, %v3423
        %v3439 = vadd.f32 %v591, %v3424
        %v3440 = vadd.f32 %v597, %v3425
        %v3441 = vadd.f32 %v601, %v3426
        %v3442 = vadd.f32 %v607, %v3374
        %v3443 = vadd.f32 %v611, %v3427
        %v3444 = vxor.u32 %v3436, 2147483648
        %v3445 = vxor.u32 %v3437, 2147483648
        %v3446 = vxor.u32 %v3438, 2147483648
        %v3447 = vxor.u32 %v3439, 2147483648
        %v3448 = vxor.u32 %v3440, 2147483648
        %v3449 = vxor.u32 %v3441, 2147483648
        %v3450 = vxor.u32 %v3442, 2147483648
        %v3451 = vxor.u32 %v3443, 2147483648
        %v3452 = vmul.f32 %v3444, 1.442695
        %v3453 = vpow.pop %v3452
        %v3454 = vmul.f32 %v3445, 1.442695
        %v3455 = vpow.pop %v3454
        %v3456 = vmul.f32 %v3446, 1.442695
        %v3457 = vpow.pop %v3456
        %v3458 = vmul.f32 %v3447, 1.442695
        %v3459 = vpow.pop %v3458
        %v3460 = vmul.f32 %v3448, 1.442695
        %v3461 = vpow.pop %v3460
        %v3462 = vmul.f32 %v3449, 1.442695
        %v3463 = vpow.pop %v3462
        %v3464 = vmul.f32 %v3450, 1.442695
        %v3465 = vpow.pop %v3464
        %v3466 = vmul.f32 %v3451, 1.442695
        %v3467 = vpow.pop %v3466
        %v3468 = vadd.f32 %v3453, 1.0
        %v3469 = vadd.f32 %v3455, 1.0
        %v3470 = vadd.f32 %v3457, 1.0
        %v3471 = vadd.f32 %v3459, 1.0
        %v3472 = vadd.f32 %v3461, 1.0
        %v3473 = vadd.f32 %v3463, 1.0
        %v3474 = vadd.f32 %v3465, 1.0
        %v3475 = vadd.f32 %v3467, 1.0
        %v3476 = vrcp.pop %v3468
        %v3477 = vmul.f32 1.0, %v3476
        %v3478 = vrcp.pop %v3469
        %v3479 = vmul.f32 1.0, %v3478
        %v3480 = vrcp.pop %v3470
        %v3481 = vmul.f32 1.0, %v3480
        %v3482 = vrcp.pop %v3471
        %v3483 = vmul.f32 1.0, %v3482
        %v3484 = vrcp.pop %v3472
        %v3485 = vmul.f32 1.0, %v3484
        %v3486 = vrcp.pop %v3473
        %v3487 = vmul.f32 1.0, %v3486
        %v3488 = vrcp.pop %v3474
        %v3489 = vmul.f32 1.0, %v3488
        %v3490 = vrcp.pop %v3475
        %v3491 = vmul.f32 1.0, %v3490
        %v3493 = vrot.slane %v3376, 2
        %v3494 = vrot.slane %v3376, 3
        %v3495 = vrot.slane %v3376, 4
        %v3496 = vrot.slane %v3376, 5
        %v3497 = vrot.slane %v3376, 6
        %v3498 = vrot.slane %v3376, 7
        %v3499 = vrot.slane %v3376, 1
        %v3508 = vadd.f32 %v579, %v3493
        %v3509 = vadd.f32 %v583, %v3494
        %v3510 = vadd.f32 %v589, %v3495
        %v3511 = vadd.f32 %v593, %v3496
        %v3512 = vadd.f32 %v599, %v3497
        %v3513 = vadd.f32 %v603, %v3498
        %v3514 = vadd.f32 %v609, %v3376
        %v3515 = vadd.f32 %v613, %v3499
        %v3516 = vxor.u32 %v3508, 2147483648
        %v3517 = vxor.u32 %v3509, 2147483648
        %v3518 = vxor.u32 %v3510, 2147483648
        %v3519 = vxor.u32 %v3511, 2147483648
        %v3520 = vxor.u32 %v3512, 2147483648
        %v3521 = vxor.u32 %v3513, 2147483648
        %v3522 = vxor.u32 %v3514, 2147483648
        %v3523 = vxor.u32 %v3515, 2147483648
        %v3524 = vmul.f32 %v3516, 1.442695
        %v3525 = vpow.pop %v3524
        %v3526 = vmul.f32 %v3517, 1.442695
        %v3527 = vpow.pop %v3526
        %v3528 = vmul.f32 %v3518, 1.442695
        %v3529 = vpow.pop %v3528
        %v3530 = vmul.f32 %v3519, 1.442695
        %v3531 = vpow.pop %v3530
        %v3532 = vmul.f32 %v3520, 1.442695
        %v3533 = vpow.pop %v3532
        %v3534 = vmul.f32 %v3521, 1.442695
        %v3535 = vpow.pop %v3534
        %v3536 = vmul.f32 %v3522, 1.442695
        %v3537 = vpow.pop %v3536
        %v3538 = vmul.f32 %v3523, 1.442695
        %v3539 = vpow.pop %v3538
        %v3540 = vadd.f32 %v3525, 1.0
        %v3541 = vadd.f32 %v3527, 1.0
        %v3542 = vadd.f32 %v3529, 1.0
        %v3543 = vadd.f32 %v3531, 1.0
        %v3544 = vadd.f32 %v3533, 1.0
        %v3545 = vadd.f32 %v3535, 1.0
        %v3546 = vadd.f32 %v3537, 1.0
        %v3547 = vadd.f32 %v3539, 1.0
        %v3548 = vrcp.pop %v3540
        %v3549 = vmul.f32 1.0, %v3548
        %v3550 = vrcp.pop %v3541
        %v3551 = vmul.f32 1.0, %v3550
        %v3552 = vrcp.pop %v3542
        %v3553 = vmul.f32 1.0, %v3552
        %v3554 = vrcp.pop %v3543
        %v3555 = vmul.f32 1.0, %v3554
        %v3556 = vrcp.pop %v3544
        %v3557 = vmul.f32 1.0, %v3556
        %v3558 = vrcp.pop %v3545
        %v3559 = vmul.f32 1.0, %v3558
        %v3560 = vrcp.pop %v3546
        %v3561 = vmul.f32 1.0, %v3560
        %v3562 = vrcp.pop %v3547
        %v3563 = vmul.f32 1.0, %v3562
        %v3564 = vadd.f32 %v3415, %v717
        %v3566 = vrot.slane %v3564, 2
        %v3567 = vrot.slane %v3564, 3
        %v3568 = vrot.slane %v3564, 4
        %v3569 = vrot.slane %v3564, 5
        %v3570 = vrot.slane %v3564, 6
        %v3571 = vrot.slane %v3564, 7
        %v3572 = vrot.slane %v3564, 1
        %v3581 = vmul.f32 %v3477, %v3566
        %v3582 = vmul.f32 %v3479, %v3567
        %v3583 = vmul.f32 %v3481, %v3568
        %v3584 = vmul.f32 %v3483, %v3569
        %v3585 = vmul.f32 %v3485, %v3570
        %v3586 = vmul.f32 %v3487, %v3571
        %v3587 = vmul.f32 %v3489, %v3564
        %v3588 = vmul.f32 %v3491, %v3572
        %v3589 = vadd.f32 %v650, %v3581
        %v3590 = vadd.f32 %v653, %v3582
        %v3591 = vadd.f32 %v658, %v3583
        %v3592 = vadd.f32 %v661, %v3584
        %v3593 = vadd.f32 %v666, %v3585
        %v3594 = vadd.f32 %v669, %v3586
        %v3595 = vadd.f32 %v674, %v3587
        %v3596 = vadd.f32 %v677, %v3588
        %v3597 = vtanh.pop %v3589
        %v3598 = vtanh.pop %v3590
        %v3599 = vtanh.pop %v3591
        %v3600 = vtanh.pop %v3592
        %v3601 = vtanh.pop %v3593
        %v3602 = vtanh.pop %v3594
        %v3603 = vtanh.pop %v3595
        %v3604 = vtanh.pop %v3596
        %v3605 = vsub.f32 1.0, %v3549
        %v3606 = vsub.f32 1.0, %v3551
        %v3607 = vsub.f32 1.0, %v3553
        %v3608 = vsub.f32 1.0, %v3555
        %v3609 = vsub.f32 1.0, %v3557
        %v3610 = vsub.f32 1.0, %v3559
        %v3611 = vsub.f32 1.0, %v3561
        %v3612 = vsub.f32 1.0, %v3563
        %v3613 = vmul.f32 %v3605, %v3597
        %v3614 = vmul.f32 %v3606, %v3598
        %v3615 = vmul.f32 %v3607, %v3599
        %v3616 = vmul.f32 %v3608, %v3600
        %v3617 = vmul.f32 %v3609, %v3601
        %v3618 = vmul.f32 %v3610, %v3602
        %v3619 = vmul.f32 %v3611, %v3603
        %v3620 = vmul.f32 %v3612, %v3604
        %v3622 = vrot.slane %v3337, 2
        %v3623 = vrot.slane %v3337, 3
        %v3624 = vrot.slane %v3337, 4
        %v3625 = vrot.slane %v3337, 5
        %v3626 = vrot.slane %v3337, 6
        %v3627 = vrot.slane %v3337, 7
        %v3628 = vrot.slane %v3337, 1
        %v3637 = vmul.f32 %v3549, %v3622
        %v3638 = vmul.f32 %v3551, %v3623
        %v3639 = vmul.f32 %v3553, %v3624
        %v3640 = vmul.f32 %v3555, %v3625
        %v3641 = vmul.f32 %v3557, %v3626
        %v3642 = vmul.f32 %v3559, %v3627
        %v3643 = vmul.f32 %v3561, %v3337
        %v3644 = vmul.f32 %v3563, %v3628
        %v3645 = vadd.f32 %v3613, %v3637
        %v3646 = vadd.f32 %v3614, %v3638
        %v3647 = vadd.f32 %v3615, %v3639
        %v3648 = vadd.f32 %v3616, %v3640
        %v3649 = vadd.f32 %v3617, %v3641
        %v3650 = vadd.f32 %v3618, %v3642
        %v3651 = vadd.f32 %v3619, %v3643
        %v3652 = vadd.f32 %v3620, %v3644
        %s3653 = sadd.s32 %s443, 6
        %v3654 = vstv %s3653
        %vm3655 = vcmp.lt.s32.totalorder %v3654, %v442
        %v3656 = vsel %vm3655, 1, 0
        %3657 = vset.pattern.permute.xlu0 0
        %3658 = vperm.xlu0 %3657, %v3656
        %v3659 = vpop.permute.xlu0 %3658
        %vm3660 = vcmp.eq.s32.totalorder %v3659, 1
        %v3669 = vrot.slane %v3645, 6
        %v3670 = vrot.slane %v3646, 5
        %v3671 = vsel %vm1179, %v3670, %v3669
        %v3672 = vrot.slane %v3647, 4
        %v3673 = vsel %vm1182, %v3672, %v3671
        %v3674 = vrot.slane %v3648, 3
        %v3675 = vsel %vm1185, %v3674, %v3673
        %v3676 = vrot.slane %v3649, 2
        %v3677 = vsel %vm1188, %v3676, %v3675
        %v3678 = vrot.slane %v3650, 1
        %v3679 = vsel %vm1191, %v3678, %v3677
        %v3680 = vsel %vm1194, %v3651, %v3679
        %v3681 = vrot.slane %v3652, 7
        %v3682 = vsel %vm1197, %v3681, %v3680
        %v3684 = vsel %vm3660, %v3682, 0.0
        %v3686 = vcombine.high %v3684, %v3684
        %v3688 = vunpack.c.l.s4 1966171168
        %v3689 = vunpack.c.0.s8 %v3688
        %v3690 = vlaneseq
        %v3691 = vshrl.u32 %v3690, 7
        %v3692 = vsub.s32 %v3689, %v3691
        %v3693 = vrot.slane %v3684, %v3692
        %v3695 = vunpack.c.l.s4 1966171168
        %v3696 = vunpack.c.0.s8 %v3695
        %v3697 = vlaneseq
        %v3698 = vshrl.u32 %v3697, 7
        %v3699 = vsub.s32 %v3696, %v3698
        %v3700 = vrot.slane %v3686, %v3699
        %v3701 = vcombine.high %v3693, %v3693
        %v3702 = vcombine.high %v3700, %v3700
        %v3704 = vunpack.c.l.s4 1966171168
        %v3705 = vunpack.c.0.s8 %v3704
        %v3706 = vlaneseq
        %v3707 = vshrl.u32 %v3706, 7
        %v3708 = vsub.s32 %v3705, %v3707
        %v3709 = vrot.slane %v3693, %v3708
        %v3711 = vunpack.c.l.s4 1966171168
        %v3712 = vunpack.c.0.s8 %v3711
        %v3713 = vlaneseq
        %v3714 = vshrl.u32 %v3713, 7
        %v3715 = vsub.s32 %v3712, %v3714
        %v3716 = vrot.slane %v3700, %v3715
        %v3718 = vunpack.c.l.s4 1966171168
        %v3719 = vunpack.c.0.s8 %v3718
        %v3720 = vlaneseq
        %v3721 = vshrl.u32 %v3720, 7
        %v3722 = vsub.s32 %v3719, %v3721
        %v3723 = vrot.slane %v3701, %v3722
        %v3725 = vunpack.c.l.s4 1966171168
        %v3726 = vunpack.c.0.s8 %v3725
        %v3727 = vlaneseq
        %v3728 = vshrl.u32 %v3727, 7
        %v3729 = vsub.s32 %v3726, %v3728
        %v3730 = vrot.slane %v3702, %v3729
        %v3731 = vcombine.high %v3709, %v3709
        %v3732 = vcombine.high %v3716, %v3716
        %v3733 = vcombine.high %v3723, %v3723
        %v3734 = vcombine.high %v3730, %v3730
        %3743 = vst [vmem:[%s427 + $0x6] sm:$0x1] %v3709
        %3744 = vst [vmem:[%s427 + $0xe] sm:$0x1] %v3723
        %3745 = vst [vmem:[%s427 + $0x16] sm:$0x1] %v3731
        %3746 = vst [vmem:[%s427 + $0x1e] sm:$0x1] %v3733
        %3747 = vst [vmem:[%s427 + $0x26] sm:$0x1] %v3716
        %3748 = vst [vmem:[%s427 + $0x2e] sm:$0x1] %v3730
        %3749 = vst [vmem:[%s427 + $0x36] sm:$0x1] %v3732
        %3750 = vst [vmem:[%s427 + $0x3e] sm:$0x1] %v3734
        %v3751 = vsel %vm3660, %v3682, %v3337
        %v3752 = vpack.c.bf16 %v3751, %v3751
        %3753 = vmatprep.subr.bf16.mxu0 %v802
        %3754 = vmatpush1.bf16.msra.mxu0 %v801
        %3755 = vmatprep.subr.bf16.mxu0 %v805
        %3756 = vmatpush1.bf16.msra.mxu0 %v804
        %3757 = vmatprep.subr.bf16.mxu0 %v808
        %3758 = vmatpush1.bf16.msra.mxu0 %v807
        %3759 = vmatprep.subr.bf16.mxu0 %v811
        %3760 = vmatpush1.bf16.msra.mxu0 %v810
        %3761 = vmatprep.subr.bf16.mxu0 %v814
        %3762 = vmatpush1.bf16.msra.mxu0 %v813
        %3763 = vmatprep.subr.bf16.mxu0 %v817
        %3764 = vmatpush1.bf16.msra.mxu0 %v816
        %3765 = vmatprep.subr.bf16.mxu0 %v820
        %3766 = vmatpush1.bf16.msra.mxu0 %v819
        %3767 = vmatprep.subr.bf16.mxu0 %v823
        %3768 = vmatpush1.bf16.msra.mxu0 %v822
        %3769 = vmatprep.subr.bf16.mxu0 0
        %3770 = vmatpush1.bf16.msra.mxu0 0
        %3771 = vmatprep.subr.bf16.mxu0 0
        %3772 = vmatpush1.bf16.msra.mxu0 0
        %3773 = vmatprep.subr.bf16.mxu0 0
        %3774 = vmatpush1.bf16.msra.mxu0 0
        %3775 = vmatprep.subr.bf16.mxu0 0
        %3776 = vmatpush1.bf16.msra.mxu0 0
        %3777 = vmatprep.subr.bf16.mxu0 0
        %3778 = vmatpush1.bf16.msra.mxu0 0
        %3779 = vmatprep.subr.bf16.mxu0 0
        %3780 = vmatpush1.bf16.msra.mxu0 0
        %3781 = vmatprep.subr.bf16.mxu0 0
        %3782 = vmatpush1.bf16.msra.mxu0 0
        %3783 = vmatprep.subr.bf16.mxu0 0
        %3784 = vmatpush1.bf16.msra.mxu0 0
        %3785 = vmatprep.mubr.bf16.mxu0 0
        %3786 = vmatmul.mubr.bf16.gmra.mrb[0].mxu0 %v3752
        %v3787 = vpop.f32.mrb[0].mxu0
        %v3788 = vadd.f32 0.0, %v3787
        %v3789 = vpop.f32.mrb[0].mxu0
        %v3790 = vadd.f32 0.0, %v3789
        %v3791 = vpop.f32.mrb[0].mxu0
        %v3792 = vpop.f32.mrb[0].mxu0
        %3793 = vdwg.mxu0
        %3794 = vmatprep.subr.bf16.mxu0 0
        %3795 = vmatpush1.bf16.msra.mxu0 %v803
        %3796 = vmatprep.subr.bf16.mxu0 0
        %3797 = vmatpush1.bf16.msra.mxu0 %v806
        %3798 = vmatprep.subr.bf16.mxu0 0
        %3799 = vmatpush1.bf16.msra.mxu0 %v809
        %3800 = vmatprep.subr.bf16.mxu0 0
        %3801 = vmatpush1.bf16.msra.mxu0 %v812
        %3802 = vmatprep.subr.bf16.mxu0 0
        %3803 = vmatpush1.bf16.msra.mxu0 %v815
        %3804 = vmatprep.subr.bf16.mxu0 0
        %3805 = vmatpush1.bf16.msra.mxu0 %v818
        %3806 = vmatprep.subr.bf16.mxu0 0
        %3807 = vmatpush1.bf16.msra.mxu0 %v821
        %3808 = vmatprep.subr.bf16.mxu0 0
        %3809 = vmatpush1.bf16.msra.mxu0 %v824
        %3810 = vmatprep.subr.bf16.mxu0 0
        %3811 = vmatpush1.bf16.msra.mxu0 0
        %3812 = vmatprep.subr.bf16.mxu0 0
        %3813 = vmatpush1.bf16.msra.mxu0 0
        %3814 = vmatprep.subr.bf16.mxu0 0
        %3815 = vmatpush1.bf16.msra.mxu0 0
        %3816 = vmatprep.subr.bf16.mxu0 0
        %3817 = vmatpush1.bf16.msra.mxu0 0
        %3818 = vmatprep.subr.bf16.mxu0 0
        %3819 = vmatpush1.bf16.msra.mxu0 0
        %3820 = vmatprep.subr.bf16.mxu0 0
        %3821 = vmatpush1.bf16.msra.mxu0 0
        %3822 = vmatprep.subr.bf16.mxu0 0
        %3823 = vmatpush1.bf16.msra.mxu0 0
        %3824 = vmatprep.subr.bf16.mxu0 0
        %3825 = vmatpush1.bf16.msra.mxu0 0
        %3826 = vmatprep.mubr.bf16.mxu0 0
        %3827 = vmatmul.mubr.bf16.gmra.mrb[0].mxu0 %v3752
        %v3828 = vpop.f32.mrb[0].mxu0
        %v3829 = vadd.f32 0.0, %v3828
        %v3830 = vpop.f32.mrb[0].mxu0
        %v3831 = vpop.f32.mrb[0].mxu0
        %v3832 = vpop.f32.mrb[0].mxu0
        %3833 = vdwg.mxu0
        %v3835 = vrot.slane %v3788, 1
        %v3836 = vrot.slane %v3788, 2
        %v3837 = vrot.slane %v3788, 3
        %v3838 = vrot.slane %v3788, 4
        %v3839 = vrot.slane %v3788, 5
        %v3840 = vrot.slane %v3788, 6
        %v3841 = vrot.slane %v3788, 7
        %v3850 = vadd.f32 %v577, %v3835
        %v3851 = vadd.f32 %v581, %v3836
        %v3852 = vadd.f32 %v587, %v3837
        %v3853 = vadd.f32 %v591, %v3838
        %v3854 = vadd.f32 %v597, %v3839
        %v3855 = vadd.f32 %v601, %v3840
        %v3856 = vadd.f32 %v607, %v3841
        %v3857 = vadd.f32 %v611, %v3788
        %v3858 = vxor.u32 %v3850, 2147483648
        %v3859 = vxor.u32 %v3851, 2147483648
        %v3860 = vxor.u32 %v3852, 2147483648
        %v3861 = vxor.u32 %v3853, 2147483648
        %v3862 = vxor.u32 %v3854, 2147483648
        %v3863 = vxor.u32 %v3855, 2147483648
        %v3864 = vxor.u32 %v3856, 2147483648
        %v3865 = vxor.u32 %v3857, 2147483648
        %v3866 = vmul.f32 %v3858, 1.442695
        %v3867 = vpow.pop %v3866
        %v3868 = vmul.f32 %v3859, 1.442695
        %v3869 = vpow.pop %v3868
        %v3870 = vmul.f32 %v3860, 1.442695
        %v3871 = vpow.pop %v3870
        %v3872 = vmul.f32 %v3861, 1.442695
        %v3873 = vpow.pop %v3872
        %v3874 = vmul.f32 %v3862, 1.442695
        %v3875 = vpow.pop %v3874
        %v3876 = vmul.f32 %v3863, 1.442695
        %v3877 = vpow.pop %v3876
        %v3878 = vmul.f32 %v3864, 1.442695
        %v3879 = vpow.pop %v3878
        %v3880 = vmul.f32 %v3865, 1.442695
        %v3881 = vpow.pop %v3880
        %v3882 = vadd.f32 %v3867, 1.0
        %v3883 = vadd.f32 %v3869, 1.0
        %v3884 = vadd.f32 %v3871, 1.0
        %v3885 = vadd.f32 %v3873, 1.0
        %v3886 = vadd.f32 %v3875, 1.0
        %v3887 = vadd.f32 %v3877, 1.0
        %v3888 = vadd.f32 %v3879, 1.0
        %v3889 = vadd.f32 %v3881, 1.0
        %v3890 = vrcp.pop %v3882
        %v3891 = vmul.f32 1.0, %v3890
        %v3892 = vrcp.pop %v3883
        %v3893 = vmul.f32 1.0, %v3892
        %v3894 = vrcp.pop %v3884
        %v3895 = vmul.f32 1.0, %v3894
        %v3896 = vrcp.pop %v3885
        %v3897 = vmul.f32 1.0, %v3896
        %v3898 = vrcp.pop %v3886
        %v3899 = vmul.f32 1.0, %v3898
        %v3900 = vrcp.pop %v3887
        %v3901 = vmul.f32 1.0, %v3900
        %v3902 = vrcp.pop %v3888
        %v3903 = vmul.f32 1.0, %v3902
        %v3904 = vrcp.pop %v3889
        %v3905 = vmul.f32 1.0, %v3904
        %v3907 = vrot.slane %v3790, 1
        %v3908 = vrot.slane %v3790, 2
        %v3909 = vrot.slane %v3790, 3
        %v3910 = vrot.slane %v3790, 4
        %v3911 = vrot.slane %v3790, 5
        %v3912 = vrot.slane %v3790, 6
        %v3913 = vrot.slane %v3790, 7
        %v3922 = vadd.f32 %v579, %v3907
        %v3923 = vadd.f32 %v583, %v3908
        %v3924 = vadd.f32 %v589, %v3909
        %v3925 = vadd.f32 %v593, %v3910
        %v3926 = vadd.f32 %v599, %v3911
        %v3927 = vadd.f32 %v603, %v3912
        %v3928 = vadd.f32 %v609, %v3913
        %v3929 = vadd.f32 %v613, %v3790
        %v3930 = vxor.u32 %v3922, 2147483648
        %v3931 = vxor.u32 %v3923, 2147483648
        %v3932 = vxor.u32 %v3924, 2147483648
        %v3933 = vxor.u32 %v3925, 2147483648
        %v3934 = vxor.u32 %v3926, 2147483648
        %v3935 = vxor.u32 %v3927, 2147483648
        %v3936 = vxor.u32 %v3928, 2147483648
        %v3937 = vxor.u32 %v3929, 2147483648
        %v3938 = vmul.f32 %v3930, 1.442695
        %v3939 = vpow.pop %v3938
        %v3940 = vmul.f32 %v3931, 1.442695
        %v3941 = vpow.pop %v3940
        %v3942 = vmul.f32 %v3932, 1.442695
        %v3943 = vpow.pop %v3942
        %v3944 = vmul.f32 %v3933, 1.442695
        %v3945 = vpow.pop %v3944
        %v3946 = vmul.f32 %v3934, 1.442695
        %v3947 = vpow.pop %v3946
        %v3948 = vmul.f32 %v3935, 1.442695
        %v3949 = vpow.pop %v3948
        %v3950 = vmul.f32 %v3936, 1.442695
        %v3951 = vpow.pop %v3950
        %v3952 = vmul.f32 %v3937, 1.442695
        %v3953 = vpow.pop %v3952
        %v3954 = vadd.f32 %v3939, 1.0
        %v3955 = vadd.f32 %v3941, 1.0
        %v3956 = vadd.f32 %v3943, 1.0
        %v3957 = vadd.f32 %v3945, 1.0
        %v3958 = vadd.f32 %v3947, 1.0
        %v3959 = vadd.f32 %v3949, 1.0
        %v3960 = vadd.f32 %v3951, 1.0
        %v3961 = vadd.f32 %v3953, 1.0
        %v3962 = vrcp.pop %v3954
        %v3963 = vmul.f32 1.0, %v3962
        %v3964 = vrcp.pop %v3955
        %v3965 = vmul.f32 1.0, %v3964
        %v3966 = vrcp.pop %v3956
        %v3967 = vmul.f32 1.0, %v3966
        %v3968 = vrcp.pop %v3957
        %v3969 = vmul.f32 1.0, %v3968
        %v3970 = vrcp.pop %v3958
        %v3971 = vmul.f32 1.0, %v3970
        %v3972 = vrcp.pop %v3959
        %v3973 = vmul.f32 1.0, %v3972
        %v3974 = vrcp.pop %v3960
        %v3975 = vmul.f32 1.0, %v3974
        %v3976 = vrcp.pop %v3961
        %v3977 = vmul.f32 1.0, %v3976
        %v3978 = vadd.f32 %v3829, %v717
        %v3980 = vrot.slane %v3978, 1
        %v3981 = vrot.slane %v3978, 2
        %v3982 = vrot.slane %v3978, 3
        %v3983 = vrot.slane %v3978, 4
        %v3984 = vrot.slane %v3978, 5
        %v3985 = vrot.slane %v3978, 6
        %v3986 = vrot.slane %v3978, 7
        %v3995 = vmul.f32 %v3891, %v3980
        %v3996 = vmul.f32 %v3893, %v3981
        %v3997 = vmul.f32 %v3895, %v3982
        %v3998 = vmul.f32 %v3897, %v3983
        %v3999 = vmul.f32 %v3899, %v3984
        %v4000 = vmul.f32 %v3901, %v3985
        %v4001 = vmul.f32 %v3903, %v3986
        %v4002 = vmul.f32 %v3905, %v3978
        %v4003 = vadd.f32 %v650, %v3995
        %v4004 = vadd.f32 %v653, %v3996
        %v4005 = vadd.f32 %v658, %v3997
        %v4006 = vadd.f32 %v661, %v3998
        %v4007 = vadd.f32 %v666, %v3999
        %v4008 = vadd.f32 %v669, %v4000
        %v4009 = vadd.f32 %v674, %v4001
        %v4010 = vadd.f32 %v677, %v4002
        %v4011 = vtanh.pop %v4003
        %v4012 = vtanh.pop %v4004
        %v4013 = vtanh.pop %v4005
        %v4014 = vtanh.pop %v4006
        %v4015 = vtanh.pop %v4007
        %v4016 = vtanh.pop %v4008
        %v4017 = vtanh.pop %v4009
        %v4018 = vtanh.pop %v4010
        %v4019 = vsub.f32 1.0, %v3963
        %v4020 = vsub.f32 1.0, %v3965
        %v4021 = vsub.f32 1.0, %v3967
        %v4022 = vsub.f32 1.0, %v3969
        %v4023 = vsub.f32 1.0, %v3971
        %v4024 = vsub.f32 1.0, %v3973
        %v4025 = vsub.f32 1.0, %v3975
        %v4026 = vsub.f32 1.0, %v3977
        %v4027 = vmul.f32 %v4019, %v4011
        %v4028 = vmul.f32 %v4020, %v4012
        %v4029 = vmul.f32 %v4021, %v4013
        %v4030 = vmul.f32 %v4022, %v4014
        %v4031 = vmul.f32 %v4023, %v4015
        %v4032 = vmul.f32 %v4024, %v4016
        %v4033 = vmul.f32 %v4025, %v4017
        %v4034 = vmul.f32 %v4026, %v4018
        %v4036 = vrot.slane %v3751, 1
        %v4037 = vrot.slane %v3751, 2
        %v4038 = vrot.slane %v3751, 3
        %v4039 = vrot.slane %v3751, 4
        %v4040 = vrot.slane %v3751, 5
        %v4041 = vrot.slane %v3751, 6
        %v4042 = vrot.slane %v3751, 7
        %v4051 = vmul.f32 %v3963, %v4036
        %v4052 = vmul.f32 %v3965, %v4037
        %v4053 = vmul.f32 %v3967, %v4038
        %v4054 = vmul.f32 %v3969, %v4039
        %v4055 = vmul.f32 %v3971, %v4040
        %v4056 = vmul.f32 %v3973, %v4041
        %v4057 = vmul.f32 %v3975, %v4042
        %v4058 = vmul.f32 %v3977, %v3751
        %v4059 = vadd.f32 %v4027, %v4051
        %v4060 = vadd.f32 %v4028, %v4052
        %v4061 = vadd.f32 %v4029, %v4053
        %v4062 = vadd.f32 %v4030, %v4054
        %v4063 = vadd.f32 %v4031, %v4055
        %v4064 = vadd.f32 %v4032, %v4056
        %v4065 = vadd.f32 %v4033, %v4057
        %v4066 = vadd.f32 %v4034, %v4058
        %s4067 = sadd.s32 %s443, 7
        %v4068 = vstv %s4067
        %vm4069 = vcmp.lt.s32.totalorder %v4068, %v442
        %v4070 = vsel %vm4069, 1, 0
        %4071 = vset.pattern.permute.xlu0 0
        %4072 = vperm.xlu0 %4071, %v4070
        %v4073 = vpop.permute.xlu0 %4072
        %vm4074 = vcmp.eq.s32.totalorder %v4073, 1
        %v4083 = vrot.slane %v4059, 7
        %v4084 = vrot.slane %v4060, 6
        %v4085 = vsel %vm1179, %v4084, %v4083
        %v4086 = vrot.slane %v4061, 5
        %v4087 = vsel %vm1182, %v4086, %v4085
        %v4088 = vrot.slane %v4062, 4
        %v4089 = vsel %vm1185, %v4088, %v4087
        %v4090 = vrot.slane %v4063, 3
        %v4091 = vsel %vm1188, %v4090, %v4089
        %v4092 = vrot.slane %v4064, 2
        %v4093 = vsel %vm1191, %v4092, %v4091
        %v4094 = vrot.slane %v4065, 1
        %v4095 = vsel %vm1194, %v4094, %v4093
        %v4096 = vsel %vm1197, %v4066, %v4095
        %v4098 = vsel %vm4074, %v4096, 0.0
        %v4100 = vcombine.high %v4098, %v4098
        %v4102 = vunpack.c.l.s4 1966171168
        %v4103 = vunpack.c.0.s8 %v4102
        %v4104 = vlaneseq
        %v4105 = vshrl.u32 %v4104, 7
        %v4106 = vsub.s32 %v4103, %v4105
        %v4107 = vrot.slane %v4098, %v4106
        %v4109 = vunpack.c.l.s4 1966171168
        %v4110 = vunpack.c.0.s8 %v4109
        %v4111 = vlaneseq
        %v4112 = vshrl.u32 %v4111, 7
        %v4113 = vsub.s32 %v4110, %v4112
        %v4114 = vrot.slane %v4100, %v4113
        %v4115 = vcombine.high %v4107, %v4107
        %v4116 = vcombine.high %v4114, %v4114
        %v4118 = vunpack.c.l.s4 1966171168
        %v4119 = vunpack.c.0.s8 %v4118
        %v4120 = vlaneseq
        %v4121 = vshrl.u32 %v4120, 7
        %v4122 = vsub.s32 %v4119, %v4121
        %v4123 = vrot.slane %v4107, %v4122
        %v4125 = vunpack.c.l.s4 1966171168
        %v4126 = vunpack.c.0.s8 %v4125
        %v4127 = vlaneseq
        %v4128 = vshrl.u32 %v4127, 7
        %v4129 = vsub.s32 %v4126, %v4128
        %v4130 = vrot.slane %v4114, %v4129
        %v4132 = vunpack.c.l.s4 1966171168
        %v4133 = vunpack.c.0.s8 %v4132
        %v4134 = vlaneseq
        %v4135 = vshrl.u32 %v4134, 7
        %v4136 = vsub.s32 %v4133, %v4135
        %v4137 = vrot.slane %v4115, %v4136
        %v4139 = vunpack.c.l.s4 1966171168
        %v4140 = vunpack.c.0.s8 %v4139
        %v4141 = vlaneseq
        %v4142 = vshrl.u32 %v4141, 7
        %v4143 = vsub.s32 %v4140, %v4142
        %v4144 = vrot.slane %v4116, %v4143
        %v4145 = vcombine.high %v4123, %v4123
        %v4146 = vcombine.high %v4130, %v4130
        %v4147 = vcombine.high %v4137, %v4137
        %v4148 = vcombine.high %v4144, %v4144
        %4157 = vst [vmem:[%s427 + $0x7] sm:$0x1] %v4123
        %4158 = vst [vmem:[%s427 + $0xf] sm:$0x1] %v4137
        %4159 = vst [vmem:[%s427 + $0x17] sm:$0x1] %v4145
        %4160 = vst [vmem:[%s427 + $0x1f] sm:$0x1] %v4147
        %4161 = vst [vmem:[%s427 + $0x27] sm:$0x1] %v4130
        %4162 = vst [vmem:[%s427 + $0x2f] sm:$0x1] %v4144
        %4163 = vst [vmem:[%s427 + $0x37] sm:$0x1] %v4146
        %4164 = vst [vmem:[%s427 + $0x3f] sm:$0x1] %v4148
        %v4165 = vsel %vm4074, %v4096, %v3751
        %4166 = vst [vmem:[#allocation2] sm:$0xff] %v4165
        %p4167 = scmp.eq.s32.totalorder %s35, 1
        // Predicated region
        $region73: #{tpu_custom_call.1} parent=51 // pred_check
          %p4168 = pneg %p4167
        $region74: #{tpu_custom_call.1} parent=51 // pred_check_branch
          %4170 = sbr.rel (%p4168) target = $region76
        $region75: #{tpu_custom_call.1} parent=51 // pred_region
          %v4171 = vld [vmem:[#allocation9] sm:$0xff]
          %v4172 = vld [vmem:[#allocation9 + $0x8] sm:$0xff]
          %v4173 = vld [vmem:[#allocation9 + $0x10] sm:$0xff]
          %v4174 = vld [vmem:[#allocation9 + $0x18] sm:$0xff]
          %v4175 = vld [vmem:[#allocation9 + $0x20] sm:$0xff]
          %v4176 = vld [vmem:[#allocation9 + $0x28] sm:$0xff]
          %v4177 = vld [vmem:[#allocation9 + $0x30] sm:$0xff]
          %v4178 = vld [vmem:[#allocation9 + $0x38] sm:$0xff]
          %v4179 = vld [vmem:[#allocation9 + $0x40] sm:$0xff]
          %v4180 = vld [vmem:[#allocation9 + $0x48] sm:$0xff]
          %v4181 = vld [vmem:[#allocation9 + $0x50] sm:$0xff]
          %v4182 = vld [vmem:[#allocation9 + $0x58] sm:$0xff]
          %v4183 = vld [vmem:[#allocation9 + $0x60] sm:$0xff]
          %v4184 = vld [vmem:[#allocation9 + $0x68] sm:$0xff]
          %v4185 = vld [vmem:[#allocation9 + $0x70] sm:$0xff]
          %v4186 = vld [vmem:[#allocation9 + $0x78] sm:$0xff]
          %v4187 = vld [vmem:[%s7] sm:$0x1]
          %v4189 = vlaneseq
          %v4190 = vshrl.u32 %v4189, 7
          %v4191 = vsub.s32 0, %v4190
          %v4192 = vrot.slane %v4187, %v4191
          %4194 = vmatprep.subr.mxu0 0.0
          %4195 = vmatpush1.msra.mxu0 %v4171
          %4196 = vmatprep.subr.mxu0 0.0
          %4197 = vmatpush1.msra.mxu0 %v4172
          %4198 = vmatprep.subr.mxu0 0.0
          %4199 = vmatpush1.msra.mxu0 %v4173
          %4200 = vmatprep.subr.mxu0 0.0
          %4201 = vmatpush1.msra.mxu0 %v4174
          %4202 = vmatprep.subr.mxu0 0.0
          %4203 = vmatpush1.msra.mxu0 %v4175
          %4204 = vmatprep.subr.mxu0 0.0
          %4205 = vmatpush1.msra.mxu0 %v4176
          %4206 = vmatprep.subr.mxu0 0.0
          %4207 = vmatpush1.msra.mxu0 %v4177
          %4208 = vmatprep.subr.mxu0 0.0
          %4209 = vmatpush1.msra.mxu0 %v4178
          %4210 = vmatprep.subr.mxu0 0.0
          %4211 = vmatpush1.msra.mxu0 %v4179
          %4212 = vmatprep.subr.mxu0 0.0
          %4213 = vmatpush1.msra.mxu0 %v4180
          %4214 = vmatprep.subr.mxu0 0.0
          %4215 = vmatpush1.msra.mxu0 %v4181
          %4216 = vmatprep.subr.mxu0 0.0
          %4217 = vmatpush1.msra.mxu0 %v4182
          %4218 = vmatprep.subr.mxu0 0.0
          %4219 = vmatpush1.msra.mxu0 %v4183
          %4220 = vmatprep.subr.mxu0 0.0
          %4221 = vmatpush1.msra.mxu0 %v4184
          %4222 = vmatprep.subr.mxu0 0.0
          %4223 = vmatpush1.msra.mxu0 %v4185
          %4224 = vmatprep.subr.mxu0 0.0
          %4225 = vmatpush1.msra.mxu0 %v4186
          %4226 = vmatprep.subr.mxu0 0.0
          %4227 = vmatpush1.msra.mxu0 0.0
          %4228 = vmatprep.subr.mxu0 0.0
          %4229 = vmatpush1.msra.mxu0 0.0
          %4230 = vmatprep.subr.mxu0 0.0
          %4231 = vmatpush1.msra.mxu0 0.0
          %4232 = vmatprep.subr.mxu0 0.0
          %4233 = vmatpush1.msra.mxu0 0.0
          %4234 = vmatprep.subr.mxu0 0.0
          %4235 = vmatpush1.msra.mxu0 0.0
          %4236 = vmatprep.subr.mxu0 0.0
          %4237 = vmatpush1.msra.mxu0 0.0
          %4238 = vmatprep.subr.mxu0 0.0
          %4239 = vmatpush1.msra.mxu0 0.0
          %4240 = vmatprep.subr.mxu0 0.0
          %4241 = vmatpush1.msra.mxu0 0.0
          %4242 = vmatprep.subr.mxu0 0.0
          %4243 = vmatpush1.msra.mxu0 0.0
          %4244 = vmatprep.subr.mxu0 0.0
          %4245 = vmatpush1.msra.mxu0 0.0
          %4246 = vmatprep.subr.mxu0 0.0
          %4247 = vmatpush1.msra.mxu0 0.0
          %4248 = vmatprep.subr.mxu0 0.0
          %4249 = vmatpush1.msra.mxu0 0.0
          %4250 = vmatprep.subr.mxu0 0.0
          %4251 = vmatpush1.msra.mxu0 0.0
          %4252 = vmatprep.subr.mxu0 0.0
          %4253 = vmatpush1.msra.mxu0 0.0
          %4254 = vmatprep.subr.mxu0 0.0
          %4255 = vmatpush1.msra.mxu0 0.0
          %4256 = vmatprep.subr.mxu0 0.0
          %4257 = vmatpush1.msra.mxu0 0.0
          %4258 = vmatprep.mubr.f32.mxu0 0.0
          %4259 = vmatmul.mubr.f32.gmra.mrb[0].mxu0 %v4165
          %v4260 = vpop.f32.mrb[0].mxu0
          %v4261 = vadd.f32 %v4192, %v4260
          %v4262 = vpop.f32.mrb[0].mxu0
          %4263 = vdwg.mxu0
          %4264 = vst [vmem:[#allocation12] sm:$0xff] %v4261
        $region76: #{tpu_custom_call.1} parent=51 // pred_fallthru
          _
        %s4265 = sand.u32 %s232, 1
        %s4266 = scalar_lea.sflag [#allocation5], %s4265
        %s4267 = sand.u32 %s232, 1
        %s4268 = smul.addr %s4267, 64
        %s4269 = scalar_lea.vmem [#allocation11], %s4268
        // Predicated region
        $region77: #{tpu_custom_call.1} parent=51 // pred_check
          %p4270 = pneg %p242
        $region78: #{tpu_custom_call.1} parent=51 // pred_check_branch
          %4272 = sbr.rel (%p4270) target = $region80
        $region79: #{tpu_custom_call.1} parent=51 // pred_region
          %s4273 = smul.u32 8, %s34
          %s4275 = ssub.s32 1024, 1024
          %4276 = vsyncadd %s4266, %s4275
          %s4277 = smul.addr %s4273, 2
          %s4278 = sadd.s32 %s35, %s4277
          %s4279 = smul.addr %s4278, 128
          %s4280 = scalar_lea.hbm %s8, %s4279
          %s4281 = sshll.u32 %s4269, 4
          %s4282 = int_to_ptr.vmem [resolvable:$true] %s4281
          %4287 = dma.vmem_to_hbm [thread:$0]  %s4282, 1024, %s4280, %s4266, 128, 256, 8
        $region80: #{tpu_custom_call.1} parent=51 // pred_fallthru
          _
        // Predicated region
        $region81: #{tpu_custom_call.1} parent=51 // pred_check
          %p4288 = pneg %p268
        $region82: #{tpu_custom_call.1} parent=51 // pred_check_branch
          %4290 = sbr.rel (%p4288) target = $region84
        $region83: #{tpu_custom_call.1} parent=51 // pred_region
          %s4292 = ssub.s32 128, 128
          %4293 = vsyncadd [#allocation13], %s4292
          %s4294 = smul.addr %s34, 128
          %s4295 = scalar_lea.hbm %s9, %s4294
          %s4297 = sshll.u32 [#allocation12], 4
          %s4298 = int_to_ptr.vmem [resolvable:$true] %s4297
          %4300 = dma.vmem_to_hbm [thread:$0]  %s4298, 128, %s4295, [#allocation13]
        $region84: #{tpu_custom_call.1} parent=51 // pred_fallthru
          _
        // Predicated region
        $region85: #{tpu_custom_call.1} parent=51 // pred_check
          %p4301 = pneg %p268
        $region86: #{tpu_custom_call.1} parent=51 // pred_check_branch
          %4303 = sbr.rel (%p4301) target = $region88
        $region87: #{tpu_custom_call.1} parent=51 // pred_region
          %4304 = dma.done [#allocation13], 128
        $region88: #{tpu_custom_call.1} parent=51 // pred_fallthru
          _
      $region52: #{tpu_custom_call.1} parent=5 // pred_fallthru
        _
      %p4305 = scmp.le.s32.totalorder 2, %s25
      // Predicated region
      $region89: #{tpu_custom_call.1} parent=5 // pred_check
        %p4306 = pneg %p4305
      $region90: #{tpu_custom_call.1} parent=5 // pred_check_branch
        %4308 = sbr.rel (%p4306) target = $region92
      $region91: #{tpu_custom_call.1} parent=5 // pred_region
        %s4309 = ssub.s32 %s25, 2
        // Predicated region
        $region93: #{tpu_custom_call.1} parent=91 // pred_check
          %p4310 = pneg %p248
        $region94: #{tpu_custom_call.1} parent=91 // pred_check_branch
          %4312 = sbr.rel (%p4310) target = $region96
        $region95: #{tpu_custom_call.1} parent=91 // pred_region
          %s4313 = sand.u32 %s233, 1
          %s4314 = scalar_lea.sflag [#allocation5], %s4313
          %s4315 = sand.u32 %s233, 1
          %s4316 = smul.addr %s4315, 64
          %s4317 = scalar_lea.vmem [#allocation11], %s4316
          %4318 = dma.done %s4314, 1024
        $region96: #{tpu_custom_call.1} parent=91 // pred_fallthru
          _
      $region92: #{tpu_custom_call.1} parent=5 // pred_fallthru
        _
    $region6: #{tpu_custom_call.1} parent=1 // loop_footer
      %s29 = sadd.s32 1, %s25
    $region7: #{tpu_custom_call.1} parent=1 // loop_footer_branch
      %24 = sbr.rel target = $region3
    $region8: #{tpu_custom_call.1} parent=1 // loop_exit
      _
    %4319 = vsyncpa [#allocation4], 1
    %s4320 = scalar_lea.sflag [#allocation4], 1
    %4321 = vsyncpa %s4320, 1
    %4322 = vsyncpa [#allocation7], 1
    %4323 = vsyncpa [#allocation10], 1
    %4324 = vsyncpa [#allocation5], 1
    %s4325 = scalar_lea.sflag [#allocation5], 1
    %4326 = vsyncpa %s4325, 1
    %4327 = vsyncpa [#allocation13], 1

</llo_original>
